<compile_context>
chip_gen: v7x
topology: tpu7x:2x2x1
jax: 0.10.0
libtpu: 0.0.40
codegen_flags: <defaults>
</compile_context>

<pallas_src>
import math
import functools

import jax
import jax.numpy as jnp
from jax import lax
from jax.experimental import pallas as pl
from jax.experimental.pallas import tpu as pltpu


# ----------------------------------------------------------------------------
# tiling / hardware helpers
# ----------------------------------------------------------------------------

def _tile(dim, target, align):
    """Largest multiple of `align` <= target that evenly divides `dim`,
    falling back to the full dimension (always a legal block size)."""
    if dim <= target or dim % align != 0:
        return dim
    t = min((target // align) * align, dim)
    while t > align and dim % t != 0:
        t -= align
    return t if (t >= align and dim % t == 0) else dim


def _m_tile(m, target=256):
    # aim for >=2 M-tiles when possible so both v7x TensorCores get work
    return _tile(m, min(target, max(8, m // 2)), 8)


def _tpu_vmem_capacity():
    try:
        info = pltpu.get_tpu_info()
        for name in ("vmem_capacity_bytes", "vmem_bytes", "vmem_size_bytes"):
            v = getattr(info, name, None)
            if v:
                return int(v)
    except Exception:
        pass
    return 64 * 1024 * 1024          # conservative default (v7x: 64 MiB / TC)


_VMEM_CAP = _tpu_vmem_capacity()
_SMALL_VMEM = _VMEM_CAP <= 64 * 1024 * 1024
# v7x (64 MiB VMEM, 2 TCs): smaller row tiles + tighter scoped-VMEM cap.
# v5e/v6e (128 MiB VMEM): larger tiles / longer K runs, higher scoped limit.
_VMEM_LIMIT = min(_VMEM_CAP * 3 // 4, 96 * 1024 * 1024)
_ROW_TM = 128 if _SMALL_VMEM else 256
_FF_TF = 512 if _SMALL_VMEM else 1024
_MM_TM, _MM_TN, _MM_TK = (256, 256, 512) if _SMALL_VMEM else (256, 512, 1024)

# TODO(synk): on v7x the constant-index weight blocks could additionally use
# pipeline_mode=pl.Buffered(1) to halve their VMEM residency.


# ----------------------------------------------------------------------------
# Pallas kernels
# ----------------------------------------------------------------------------

def fused_attention(xq, xkv, key_pad, wq, bq, wkv, bkv, n_heads, causal):
    """Scaled dot-product attention with the Q and K/V projections fused
    in-kernel (no projected-activation HBM round-trips).

    xq:(B,Tq,D) bf16, xkv:(B,Tk,D) bf16, key_pad:(B,1,Tk) int32 (1 = pad),
    wq:(D,D) bf16, wkv:(D,2D) bf16, bq:(D,)/bkv:(2D,) f32.
    Returns concat-of-heads context (B,Tq,D) bf16.

    Grid (B, Tk-tiles): batch "parallel", kv axis "arbitrary" with an
    online-softmax running state (m/l/acc) in VMEM scratch; the additive mask
    (pad keys + causal) is built in-kernel with broadcasted_iota."""
    B, Tq, D = xq.shape
    Tk = xkv.shape[1]
    H = n_heads
    Dh = D // H
    scale = 1.0 / math.sqrt(Dh)
    tk = _tile(Tk, 256, 128)
    nkv = Tk // tk

    def kernel(pad_ref, xq_ref, xkv_ref, wq_ref, bq_ref, wkv_ref, bkv_ref,
               o_ref, q_sc, m_sc, l_sc, acc_sc):
        kv = pl.program_id(1)

        # ---- per-batch init: project Q once, reset online-softmax state ----
        @pl.when(kv == 0)
        def _():
            q = jnp.dot(xq_ref[0].astype(jnp.bfloat16),
                        wq_ref[...].astype(jnp.bfloat16),
                        preferred_element_type=jnp.float32) + bq_ref[...]
            q_sc[...] = q.astype(jnp.bfloat16)
            m_sc[...] = jnp.full_like(m_sc, -1e30)
            l_sc[...] = jnp.zeros_like(l_sc)
            acc_sc[...] = jnp.zeros_like(acc_sc)

        # ---- fused K/V projection for this key tile ----
        kvp = jnp.dot(xkv_ref[0].astype(jnp.bfloat16),
                      wkv_ref[...].astype(jnp.bfloat16),
                      preferred_element_type=jnp.float32) + bkv_ref[...]
        k = kvp[:, :D].astype(jnp.bfloat16)            # (tk, D)
        v = kvp[:, D:].astype(jnp.bfloat16)            # (tk, D)

        # ---- additive mask for this tile (pad keys + causal) ----
        masked = jnp.broadcast_to(pad_ref[0] != 0, (Tq, tk))
        if causal:
            row = lax.broadcasted_iota(jnp.int32, (Tq, tk), 0)
            col = lax.broadcasted_iota(jnp.int32, (Tq, tk), 1) + kv * tk
            masked = masked | (col > row)
        mask_add = jnp.where(masked, jnp.float32(-1e9), jnp.float32(0.0))

        # ---- per-head online softmax; state kept lane-dense as (Tq, D) ----
        for h in range(H):                              # static unroll
            lo, hi = h * Dh, (h + 1) * Dh
            s = lax.dot_general(q_sc[:, lo:hi], k[:, lo:hi],
                                (((1,), (1,)), ((), ())),
                                preferred_element_type=jnp.float32) * scale
            s = s + mask_add
            m_prev = m_sc[h]                            # (Tq, 1)
            m_new = jnp.maximum(m_prev, jnp.max(s, axis=-1, keepdims=True))
            alpha = jnp.exp(m_prev - m_new)
            pmat = jnp.exp(s - m_new)
            l_sc[h] = alpha * l_sc[h] + jnp.sum(pmat, axis=-1, keepdims=True)
            acc_sc[:, lo:hi] = alpha * acc_sc[:, lo:hi] + jnp.dot(
                pmat.astype(jnp.bfloat16), v[:, lo:hi],
                preferred_element_type=jnp.float32)
            m_sc[h] = m_new

        # ---- finalize: normalize, ONE lane-dense (Tq, D) store ----
        @pl.when(kv == nkv - 1)
        def _():
            for h in range(H):
                lo, hi = h * Dh, (h + 1) * Dh
                acc_sc[:, lo:hi] = acc_sc[:, lo:hi] * pl.reciprocal(
                    l_sc[h], approx=True)
            o_ref[0] = acc_sc[...].astype(o_ref.dtype)

    return pl.pallas_call(
        kernel,
        out_shape=jax.ShapeDtypeStruct((B, Tq, D), jnp.bfloat16),
        grid=(B, nkv),
        in_specs=[
            pl.BlockSpec((1, 1, tk), lambda b, k: (b, 0, k)),
            pl.BlockSpec((1, Tq, D), lambda b, k: (b, 0, 0)),
            pl.BlockSpec((1, tk, D), lambda b, k: (b, k, 0)),
            pl.BlockSpec((D, D), lambda b, k: (0, 0)),
            pl.BlockSpec((1, D), lambda b, k: (0, 0)),
            pl.BlockSpec((D, 2 * D), lambda b, k: (0, 0)),
            pl.BlockSpec((1, 2 * D), lambda b, k: (0, 0)),
        ],
        out_specs=pl.BlockSpec((1, Tq, D), lambda b, k: (b, 0, 0)),
        scratch_shapes=[
            pltpu.VMEM((Tq, D), jnp.bfloat16),      # projected Q
            pltpu.VMEM((H, Tq, 1), jnp.float32),    # running max
            pltpu.VMEM((H, Tq, 1), jnp.float32),    # running denom
            pltpu.VMEM((Tq, D), jnp.float32),       # running numerator (lane-dense)
        ],
        compiler_params=pltpu.CompilerParams(
            dimension_semantics=("parallel", "arbitrary"),
            vmem_limit_bytes=_VMEM_LIMIT),
    )(key_pad, xq, xkv, wq, bq.reshape(1, -1), wkv, bkv.reshape(1, -1))


def proj_residual_ln(attn, resid, wo, bo, gamma, beta, eps=1e-5):
    """LN(resid + attn @ wo + bo) — fused attention output-projection tail.
    bf16 in/out; accumulation and LN statistics in f32."""
    M, D = attn.shape
    tm = _m_tile(M, _ROW_TM)

    def kernel(a_ref, x_ref, w_ref, b_ref, g_ref, be_ref, o_ref):
        proj = jnp.dot(a_ref[...].astype(jnp.bfloat16),
                       w_ref[...].astype(jnp.bfloat16),
                       preferred_element_type=jnp.float32) + b_ref[...]
        y = x_ref[...].astype(jnp.float32) + proj
        mu = jnp.mean(y, axis=-1, keepdims=True)
        var = jnp.mean((y - mu) * (y - mu), axis=-1, keepdims=True)
        yn = (y - mu) * lax.rsqrt(var + eps)
        o_ref[...] = (yn * g_ref[...] + be_ref[...]).astype(o_ref.dtype)

    return pl.pallas_call(
        kernel,
        out_shape=jax.ShapeDtypeStruct((M, D), jnp.bfloat16),
        grid=(M // tm,),
        in_specs=[
            pl.BlockSpec((tm, D), lambda i: (i, 0)),
            pl.BlockSpec((tm, D), lambda i: (i, 0)),
            pl.BlockSpec((D, D), lambda i: (0, 0)),
            pl.BlockSpec((1, D), lambda i: (0, 0)),
            pl.BlockSpec((1, D), lambda i: (0, 0)),
            pl.BlockSpec((1, D), lambda i: (0, 0)),
        ],
        out_specs=pl.BlockSpec((tm, D), lambda i: (i, 0)),
        compiler_params=pltpu.CompilerParams(
            dimension_semantics=("parallel",),
            vmem_limit_bytes=_VMEM_LIMIT),
    )(attn, resid, wo, bo.reshape(1, D), gamma.reshape(1, D), beta.reshape(1, D))


def ffn_residual_ln(x, w1, b1, w2, b2, gamma, beta, eps=1e-5):
    """LN(x + relu(x@w1+b1)@w2 + b2) with d_ff tiled as a grid reduction axis:
    only (D,tf)/(tf,D) weight slices and a (tm,tf) activation chunk are ever
    resident; the second matmul accumulates into a (tm, D) f32 VMEM scratch."""
    M, D = x.shape
    F = w1.shape[1]
    tm = _m_tile(M, _ROW_TM)
    tf = _tile(F, _FF_TF, 128)
    nf = F // tf

    def kernel(x_ref, w1_ref, b1_ref, w2_ref, b2_ref, g_ref, be_ref,
               o_ref, acc_ref):
        @pl.when(pl.program_id(1) == 0)
        def _():
            acc_ref[...] = jnp.zeros_like(acc_ref)

        h = jnp.dot(x_ref[...].astype(jnp.bfloat16),
                    w1_ref[...].astype(jnp.bfloat16),
                    preferred_element_type=jnp.float32) + b1_ref[...]
        h = jnp.maximum(h, 0.0)
        acc_ref[...] += jnp.dot(h.astype(jnp.bfloat16),
                                w2_ref[...].astype(jnp.bfloat16),
                                preferred_element_type=jnp.float32)

        @pl.when(pl.program_id(1) == nf - 1)
        def _():
            y = x_ref[...].astype(jnp.float32) + acc_ref[...] + b2_ref[...]
            mu = jnp.mean(y, axis=-1, keepdims=True)
            var = jnp.mean((y - mu) * (y - mu), axis=-1, keepdims=True)
            yn = (y - mu) * lax.rsqrt(var + eps)
            o_ref[...] = (yn * g_ref[...] + be_ref[...]).astype(o_ref.dtype)

    return pl.pallas_call(
        kernel,
        out_shape=jax.ShapeDtypeStruct((M, D), jnp.bfloat16),
        grid=(M // tm, nf),
        in_specs=[
            pl.BlockSpec((tm, D), lambda i, f: (i, 0)),
            pl.BlockSpec((D, tf), lambda i, f: (0, f)),
            pl.BlockSpec((1, tf), lambda i, f: (0, f)),
            pl.BlockSpec((tf, D), lambda i, f: (f, 0)),
            pl.BlockSpec((1, D), lambda i, f: (0, 0)),
            pl.BlockSpec((1, D), lambda i, f: (0, 0)),
            pl.BlockSpec((1, D), lambda i, f: (0, 0)),
        ],
        out_specs=pl.BlockSpec((tm, D), lambda i, f: (i, 0)),
        scratch_shapes=[pltpu.VMEM((tm, D), jnp.float32)],
        compiler_params=pltpu.CompilerParams(
            dimension_semantics=("parallel", "arbitrary"),
            vmem_limit_bytes=_VMEM_LIMIT),
    )(x, w1, b1.reshape(1, F), w2, b2.reshape(1, D),
      gamma.reshape(1, D), beta.reshape(1, D))


def linear_nt(x, w_nk, b):
    """logits = x @ w_nk.T + b, using the (V, D) embedding table directly
    (tied output projection) via dot_general over dim 1 — no transpose.
    x:(M,K) bf16, w_nk:(N,K) bf16, b:(N,) f32 -> f32 logits."""
    M, K = x.shape
    N, K2 = w_nk.shape
    assert K == K2
    tm = _m_tile(M, _MM_TM)
    tn = _tile(N, _MM_TN, 128)
    tk = _tile(K, _MM_TK, 128)

    def kernel(x_ref, w_ref, b_ref, o_ref, acc_ref):
        @pl.when(pl.program_id(2) == 0)
        def _():
            acc_ref[...] = jnp.zeros_like(acc_ref)

        acc_ref[...] += lax.dot_general(
            x_ref[...].astype(jnp.bfloat16),
            w_ref[...].astype(jnp.bfloat16),
            (((1,), (1,)), ((), ())),
            preferred_element_type=jnp.float32)

        @pl.when(pl.program_id(2) == pl.num_programs(2) - 1)
        def _():
            o_ref[...] = (acc_ref[...] + b_ref[...]).astype(o_ref.dtype)

    return pl.pallas_call(
        kernel,
        out_shape=jax.ShapeDtypeStruct((M, N), jnp.float32),
        grid=(M // tm, N // tn, K // tk),
        in_specs=[
            pl.BlockSpec((tm, tk), lambda i, j, k: (i, k)),
            pl.BlockSpec((tn, tk), lambda i, j, k: (j, k)),
            pl.BlockSpec((1, tn), lambda i, j, k: (0, j)),
        ],
        out_specs=pl.BlockSpec((tm, tn), lambda i, j, k: (i, j)),
        scratch_shapes=[pltpu.VMEM((tm, tn), jnp.float32)],
        compiler_params=pltpu.CompilerParams(
            dimension_semantics=("parallel", "parallel", "arbitrary"),
            vmem_limit_bytes=_VMEM_LIMIT),
    )(x, w_nk, b.reshape(1, N))


# ----------------------------------------------------------------------------
# model glue (plain JAX)
# ----------------------------------------------------------------------------

def sinusoidal_pe(max_len, d_model):
    pos = jnp.arange(max_len, dtype=jnp.float32)[:, None]
    div = jnp.exp(jnp.arange(0, d_model, 2, dtype=jnp.float32)
                  * (-math.log(10000.0) / d_model))
    pe = jnp.zeros((max_len, d_model), jnp.float32)
    pe = pe.at[:, 0::2].set(jnp.sin(pos * div))
    pe = pe.at[:, 1::2].set(jnp.cos(pos * div))
    return pe


def attn_block(xq, xkv, key_pad, causal, p, pre, ln_g, ln_b, n_heads):
    B, Tq, D = xq.shape
    ctx = fused_attention(xq, xkv, key_pad,
                          p[pre + "q_w"], p[pre + "q_b"],
                          p[pre + "kv_w"], p[pre + "kv_b"],
                          n_heads, causal)
    y = proj_residual_ln(ctx.reshape(B * Tq, D), xq.reshape(B * Tq, D),
                         p[pre + "o_w"], p[pre + "o_b"], p[ln_g], p[ln_b])
    return y.reshape(B, Tq, D)


def ffn_block(x, p, pre, ln_g, ln_b):
    B, T, D = x.shape
    y = ffn_residual_ln(x.reshape(B * T, D),
                        p[pre + "ff1_w"], p[pre + "ff1_b"],
                        p[pre + "ff2_w"], p[pre + "ff2_b"],
                        p[ln_g], p[ln_b])
    return y.reshape(B, T, D)


def forward(p, src, tgt, pe, cfg):
    d_model, H, L = cfg["d_model"], cfg["n_heads"], cfg["n_layers"]
    pad_id = cfg["pad_token_id"]
    B, S = src.shape
    T = tgt.shape[1]

    src_pad = (src == pad_id).astype(jnp.int32).reshape(B, 1, S)
    tgt_pad = (tgt == pad_id).astype(jnp.int32).reshape(B, 1, T)

    # embedding gather stays in XLA; emb_src already carries sqrt(d_model).
    x = (jnp.take(p["emb_src"], src, axis=0) + pe[:S]).astype(jnp.bfloat16)
    for l in range(L):
        pre = f"enc{l}_"
        x = attn_block(x, x, src_pad, False, p, pre + "sa_",
                       pre + "ln1_g", pre + "ln1_b", H)
        x = ffn_block(x, p, pre, pre + "ln2_g", pre + "ln2_b")
    enc_out = x

    # tgt table is tied to the output projection, so scale stays explicit here.
    y = (jnp.take(p["emb_tgt"], tgt, axis=0) * math.sqrt(d_model)
         + pe[:T]).astype(jnp.bfloat16)
    for l in range(L):
        pre = f"dec{l}_"
        y = attn_block(y, y, tgt_pad, True, p, pre + "sa_",
                       pre + "ln1_g", pre + "ln1_b", H)
        y = attn_block(y, enc_out, src_pad, False, p, pre + "ca_",
                       pre + "ln2_g", pre + "ln2_b", H)
        y = ffn_block(y, p, pre, pre + "ln3_g", pre + "ln3_b")

    logits = linear_nt(y.reshape(B * T, d_model), p["out_w"], p["out_b"])
    return logits.reshape(B, T, cfg["vocab_size"])


# ----------------------------------------------------------------------------
# parameter init (mirrors the PyTorch module; matmul weights pre-cast to bf16)
# ----------------------------------------------------------------------------

def init_params(key, cfg):
    D, F, V = cfg["d_model"], cfg["d_ff"], cfg["vocab_size"]
    keys = iter(jax.random.split(key, 4096))

    def xavier(shape):
        fan_in, fan_out = shape
        lim = math.sqrt(6.0 / (fan_in + fan_out))
        return jax.random.uniform(next(keys), shape, jnp.float32, -lim, lim)

    wcast = lambda w: w.astype(jnp.bfloat16)    # MXU operand dtype (cast once)

    p = {}
    emb_src = xavier((V, D)).at[cfg["pad_token_id"]].set(0.0)
    emb_tgt = xavier((V, D)).at[cfg["pad_token_id"]].set(0.0)
    p["emb_src"] = emb_src * math.sqrt(D)       # fold sqrt(d_model) into src table
    p["emb_tgt"] = emb_tgt                      # f32 for the gather
    if cfg["tie_weights"]:
        p["out_w"] = wcast(emb_tgt)             # (V, D) — used without transpose
    else:
        p["out_w"] = wcast(jax.random.normal(next(keys), (V, D)) * 0.1)
    p["out_b"] = jnp.zeros((V,), jnp.float32)

    def attn(pre):
        p[pre + "q_w"] = wcast(xavier((D, D)))
        p[pre + "q_b"] = jnp.zeros((D,), jnp.float32)
        p[pre + "kv_w"] = wcast(jnp.concatenate([xavier((D, D)),
                                                 xavier((D, D))], axis=1))
        p[pre + "kv_b"] = jnp.zeros((2 * D,), jnp.float32)
        p[pre + "o_w"] = wcast(xavier((D, D)))
        p[pre + "o_b"] = jnp.zeros((D,), jnp.float32)

    def ffn_ln(pre, n_ln):
        p[pre + "ff1_w"] = wcast(xavier((D, F)))
        p[pre + "ff1_b"] = jnp.zeros((F,), jnp.float32)
        p[pre + "ff2_w"] = wcast(xavier((F, D)))
        p[pre + "ff2_b"] = jnp.zeros((D,), jnp.float32)
        for i in range(1, n_ln + 1):
            p[pre + f"ln{i}_g"] = jnp.ones((D,), jnp.float32)
            p[pre + f"ln{i}_b"] = jnp.zeros((D,), jnp.float32)

    for l in range(cfg["n_layers"]):
        attn(f"enc{l}_sa_")
        ffn_ln(f"enc{l}_", 2)
        attn(f"dec{l}_sa_")
        attn(f"dec{l}_ca_")
        ffn_ln(f"dec{l}_", 3)
    return p


# ----------------------------------------------------------------------------
# main
# ----------------------------------------------------------------------------

if __name__ == "__main__":
    cfg = dict(
        vocab_size=64, d_model=32, n_heads=4, d_ff=64, n_layers=2,
        max_seq_len=16, dropout=0.0, tie_weights=True, pad_token_id=0,
    )

    key = jax.random.PRNGKey(0)
    pkey, skey, tkey = jax.random.split(key, 3)
    params = init_params(pkey, cfg)
    pe = sinusoidal_pe(cfg["max_seq_len"], cfg["d_model"])   # hoisted out of forward

    B, S = 2, 8
    src = jax.random.randint(skey, (B, S), 1, cfg["vocab_size"]).astype(jnp.int32)
    tgt = jax.random.randint(tkey, (B, S), 1, cfg["vocab_size"]).astype(jnp.int32)
    # add padding tokens so the padding masks are actually exercised
    src = src.at[:, -2:].set(cfg["pad_token_id"])
    tgt = tgt.at[:, -1].set(cfg["pad_token_id"])

    fwd = jax.jit(functools.partial(forward, cfg=cfg))
    logits = fwd(params, src, tgt, pe)
    jax.block_until_ready(logits)

    assert logits.shape == (B, S, cfg["vocab_size"])
    assert bool(jnp.all(jnp.isfinite(logits)))
    print("KERNEL_OK")
</pallas_src>

<mosaic_0001>
module attributes {stable_mosaic.version = 11 : i64} {
  func.func @kernel(%arg0: i32, %arg1: memref<8x32xbf16, #tpu.memory_space<vmem>>, %arg2: memref<8x32xbf16, #tpu.memory_space<vmem>>, %arg3: memref<32x32xbf16, #tpu.memory_space<vmem>>, %arg4: memref<1x32xf32, #tpu.memory_space<vmem>>, %arg5: memref<1x32xf32, #tpu.memory_space<vmem>>, %arg6: memref<1x32xf32, #tpu.memory_space<vmem>>, %arg7: memref<8x32xbf16, #tpu.memory_space<vmem>>) attributes {dimension_semantics = [#tpu.dimension_semantics<parallel>], iteration_bounds = array<i64: 2>, scalar_prefetch = 0 : i64, scratch_operands = 0 : i64, tpu.core_type = #tpu.core_type<tc>, window_params = [{transform_indices = @transform_0, window_bounds = array<i64: 8, 32>}, {transform_indices = @transform_1, window_bounds = array<i64: 8, 32>}, {pipeline_mode = #tpu.pipeline_mode<synchronous>, transform_indices = @transform_2, window_bounds = array<i64: 32, 32>}, {pipeline_mode = #tpu.pipeline_mode<synchronous>, transform_indices = @transform_3, window_bounds = array<i64: 1, 32>}, {pipeline_mode = #tpu.pipeline_mode<synchronous>, transform_indices = @transform_4, window_bounds = array<i64: 1, 32>}, {pipeline_mode = #tpu.pipeline_mode<synchronous>, transform_indices = @transform_5, window_bounds = array<i64: 1, 32>}, {transform_indices = @transform_6, window_bounds = array<i64: 8, 32>}]} {
    %c0 = arith.constant 0 : index
    %c0_0 = arith.constant 0 : index
    %0 = vector.load %arg1[%c0, %c0_0] : memref<8x32xbf16, #tpu.memory_space<vmem>>, vector<8x32xbf16>
    %c0_1 = arith.constant 0 : index
    %c0_2 = arith.constant 0 : index
    %1 = vector.load %arg3[%c0_1, %c0_2] : memref<32x32xbf16, #tpu.memory_space<vmem>>, vector<32x32xbf16>
    %cst = arith.constant dense<0.000000e+00> : vector<8x32xf32>
    %2 = tpu.matmul %0, %1, %cst {dimension_numbers = #tpu.dot_dimension_numbers<[1], [0], [0], [1], [0, 0, 1, 1], [], []>} : vector<8x32xbf16>, vector<32x32xbf16>, vector<8x32xf32> -> vector<8x32xf32>
    %c0_3 = arith.constant 0 : index
    %c0_4 = arith.constant 0 : index
    %3 = vector.load %arg4[%c0_3, %c0_4] : memref<1x32xf32, #tpu.memory_space<vmem>>, vector<1x32xf32>
    %4 = vector.broadcast %3 : vector<1x32xf32> to vector<8x32xf32>
    %5 = arith.addf %2, %4 : vector<8x32xf32>
    %c0_5 = arith.constant 0 : index
    %c0_6 = arith.constant 0 : index
    %6 = vector.load %arg2[%c0_5, %c0_6] : memref<8x32xbf16, #tpu.memory_space<vmem>>, vector<8x32xbf16>
    %7 = arith.extf %6 : vector<8x32xbf16> to vector<8x32xf32>
    %8 = arith.addf %7, %5 : vector<8x32xf32>
    %cst_7 = arith.constant dense<0.000000e+00> : vector<8xf32>
    %9 = vector.multi_reduction <add>, %8, %cst_7 [1] : vector<8x32xf32> to vector<8xf32>
    %10 = vector.shape_cast %9 : vector<8xf32> to vector<8x1xf32>
    %cst_8 = arith.constant 3.200000e+01 : f32
    %11 = vector.broadcast %cst_8 : f32 to vector<8x1xf32>
    %12 = arith.divf %10, %11 : vector<8x1xf32>
    %13 = vector.broadcast %12 : vector<8x1xf32> to vector<8x32xf32>
    %14 = arith.subf %8, %13 : vector<8x32xf32>
    %15 = vector.broadcast %12 : vector<8x1xf32> to vector<8x32xf32>
    %16 = arith.subf %8, %15 : vector<8x32xf32>
    %17 = arith.mulf %14, %16 : vector<8x32xf32>
    %cst_9 = arith.constant dense<0.000000e+00> : vector<8xf32>
    %18 = vector.multi_reduction <add>, %17, %cst_9 [1] : vector<8x32xf32> to vector<8xf32>
    %19 = vector.shape_cast %18 : vector<8xf32> to vector<8x1xf32>
    %cst_10 = arith.constant 3.200000e+01 : f32
    %20 = vector.broadcast %cst_10 : f32 to vector<8x1xf32>
    %21 = arith.divf %19, %20 : vector<8x1xf32>
    %22 = vector.broadcast %12 : vector<8x1xf32> to vector<8x32xf32>
    %23 = arith.subf %8, %22 : vector<8x32xf32>
    %cst_11 = arith.constant 9.99999974E-6 : f32
    %24 = vector.broadcast %cst_11 : f32 to vector<8x1xf32>
    %25 = arith.addf %21, %24 : vector<8x1xf32>
    %26 = math.rsqrt %25 : vector<8x1xf32>
    %27 = vector.broadcast %26 : vector<8x1xf32> to vector<8x32xf32>
    %28 = arith.mulf %23, %27 : vector<8x32xf32>
    %c0_12 = arith.constant 0 : index
    %c0_13 = arith.constant 0 : index
    %29 = vector.load %arg5[%c0_12, %c0_13] : memref<1x32xf32, #tpu.memory_space<vmem>>, vector<1x32xf32>
    %30 = vector.broadcast %29 : vector<1x32xf32> to vector<8x32xf32>
    %31 = arith.mulf %28, %30 : vector<8x32xf32>
    %c0_14 = arith.constant 0 : index
    %c0_15 = arith.constant 0 : index
    %32 = vector.load %arg6[%c0_14, %c0_15] : memref<1x32xf32, #tpu.memory_space<vmem>>, vector<1x32xf32>
    %33 = vector.broadcast %32 : vector<1x32xf32> to vector<8x32xf32>
    %34 = arith.addf %31, %33 : vector<8x32xf32>
    %35 = arith.truncf %34 : vector<8x32xf32> to vector<8x32xbf16>
    %c0_16 = arith.constant 0 : index
    %c0_17 = arith.constant 0 : index
    %36 = vector.load %arg7[%c0_16, %c0_17] : memref<8x32xbf16, #tpu.memory_space<vmem>>, vector<8x32xbf16>
    tpu.vector_store %arg7[%c0_16, %c0_17], %35 {strides = array<i32>} : memref<8x32xbf16, #tpu.memory_space<vmem>>, vector<8x32xbf16>,
    return
  }
  func.func @transform_0(%arg0: i32) -> (i32, i32) {
    %c0_i32 = arith.constant 0 : i32
    %c0_i32_0 = arith.constant 0 : i32
    return %arg0, %c0_i32 : i32, i32
  }
  func.func @transform_1(%arg0: i32) -> (i32, i32) {
    %c0_i32 = arith.constant 0 : i32
    %c0_i32_0 = arith.constant 0 : i32
    return %arg0, %c0_i32 : i32, i32
  }
  func.func @transform_2(%arg0: i32) -> (i32, i32) {
    %c0_i32 = arith.constant 0 : i32
    %c0_i32_0 = arith.constant 0 : i32
    %c0_i32_1 = arith.constant 0 : i32
    return %c0_i32, %c0_i32_0 : i32, i32
  }
  func.func @transform_3(%arg0: i32) -> (i32, i32) {
    %c0_i32 = arith.constant 0 : i32
    %c0_i32_0 = arith.constant 0 : i32
    %c0_i32_1 = arith.constant 0 : i32
    return %c0_i32, %c0_i32_0 : i32, i32
  }
  func.func @transform_4(%arg0: i32) -> (i32, i32) {
    %c0_i32 = arith.constant 0 : i32
    %c0_i32_0 = arith.constant 0 : i32
    %c0_i32_1 = arith.constant 0 : i32
    return %c0_i32, %c0_i32_0 : i32, i32
  }
  func.func @transform_5(%arg0: i32) -> (i32, i32) {
    %c0_i32 = arith.constant 0 : i32
    %c0_i32_0 = arith.constant 0 : i32
    %c0_i32_1 = arith.constant 0 : i32
    return %c0_i32, %c0_i32_0 : i32, i32
  }
  func.func @transform_6(%arg0: i32) -> (i32, i32) {
    %c0_i32 = arith.constant 0 : i32
    %c0_i32_0 = arith.constant 0 : i32
    return %arg0, %c0_i32 : i32, i32
  }
}

module attributes {stable_mosaic.version = 11 : i64} {
  func.func @kernel(%arg0: i32, %arg1: i32, %arg2: memref<1x1x8xi32, #tpu.memory_space<vmem>>, %arg3: memref<1x8x32xbf16, #tpu.memory_space<vmem>>, %arg4: memref<1x8x32xbf16, #tpu.memory_space<vmem>>, %arg5: memref<32x32xbf16, #tpu.memory_space<vmem>>, %arg6: memref<1x32xf32, #tpu.memory_space<vmem>>, %arg7: memref<32x64xbf16, #tpu.memory_space<vmem>>, %arg8: memref<1x64xf32, #tpu.memory_space<vmem>>, %arg9: memref<1x8x32xbf16, #tpu.memory_space<vmem>>, %arg10: memref<8x32xbf16, #tpu.memory_space<vmem>>, %arg11: memref<4x8x1xf32, #tpu.memory_space<vmem>>, %arg12: memref<4x8x1xf32, #tpu.memory_space<vmem>>, %arg13: memref<8x32xf32, #tpu.memory_space<vmem>>) attributes {dimension_semantics = [#tpu.dimension_semantics<parallel>, #tpu.dimension_semantics<arbitrary>], iteration_bounds = array<i64: 2, 1>, scalar_prefetch = 0 : i64, scratch_operands = 4 : i64, tpu.core_type = #tpu.core_type<tc>, window_params = [{transform_indices = @transform_0, window_bounds = array<i64: 1, 1, 8>}, {transform_indices = @transform_1, window_bounds = array<i64: 1, 8, 32>}, {transform_indices = @transform_2, window_bounds = array<i64: 1, 8, 32>}, {pipeline_mode = #tpu.pipeline_mode<synchronous>, transform_indices = @transform_3, window_bounds = array<i64: 32, 32>}, {pipeline_mode = #tpu.pipeline_mode<synchronous>, transform_indices = @transform_4, window_bounds = array<i64: 1, 32>}, {pipeline_mode = #tpu.pipeline_mode<synchronous>, transform_indices = @transform_5, window_bounds = array<i64: 32, 64>}, {pipeline_mode = #tpu.pipeline_mode<synchronous>, transform_indices = @transform_6, window_bounds = array<i64: 1, 64>}, {transform_indices = @transform_7, window_bounds = array<i64: 1, 8, 32>}]} {
    %c0_i32 = arith.constant 0 : i32
    %0 = arith.cmpi eq, %arg1, %c0_i32 : i32
    %1 = arith.extui %0 : i1 to i32
    %c0_i32_0 = arith.constant 0 : i32
    %2 = arith.cmpi ne, %1, %c0_i32_0 : i32
    scf.if %2 {
      %c0_101 = arith.constant 0 : index
      %c0_102 = arith.constant 0 : index
      %c0_103 = arith.constant 0 : index
      %170 = vector.load %arg3[%c0_101, %c0_102, %c0_103] : memref<1x8x32xbf16, #tpu.memory_space<vmem>>, vector<1x8x32xbf16>
      %171 = vector.shape_cast %170 : vector<1x8x32xbf16> to vector<8x32xbf16>
      %c0_104 = arith.constant 0 : index
      %c0_105 = arith.constant 0 : index
      %172 = vector.load %arg5[%c0_104, %c0_105] : memref<32x32xbf16, #tpu.memory_space<vmem>>, vector<32x32xbf16>
      %cst_106 = arith.constant dense<0.000000e+00> : vector<8x32xf32>
      %173 = tpu.matmul %171, %172, %cst_106 {dimension_numbers = #tpu.dot_dimension_numbers<[1], [0], [0], [1], [0, 0, 1, 1], [], []>} : vector<8x32xbf16>, vector<32x32xbf16>, vector<8x32xf32> -> vector<8x32xf32>
      %c0_107 = arith.constant 0 : index
      %c0_108 = arith.constant 0 : index
      %174 = vector.load %arg6[%c0_107, %c0_108] : memref<1x32xf32, #tpu.memory_space<vmem>>, vector<1x32xf32>
      %175 = vector.broadcast %174 : vector<1x32xf32> to vector<8x32xf32>
      %176 = arith.addf %173, %175 : vector<8x32xf32>
      %177 = arith.truncf %176 : vector<8x32xf32> to vector<8x32xbf16>
      %c0_109 = arith.constant 0 : index
      %c0_110 = arith.constant 0 : index
      %178 = vector.load %arg10[%c0_109, %c0_110] : memref<8x32xbf16, #tpu.memory_space<vmem>>, vector<8x32xbf16>
      tpu.vector_store %arg10[%c0_109, %c0_110], %177 {strides = array<i32>} : memref<8x32xbf16, #tpu.memory_space<vmem>>, vector<8x32xbf16>,
      %cst_111 = arith.constant -1.000000e+30 : f32
      %179 = vector.broadcast %cst_111 : f32 to vector<4x8x1xf32>
      %c0_112 = arith.constant 0 : index
      %c0_113 = arith.constant 0 : index
      %c0_114 = arith.constant 0 : index
      %180 = vector.load %arg11[%c0_112, %c0_113, %c0_114] : memref<4x8x1xf32, #tpu.memory_space<vmem>>, vector<4x8x1xf32>
      tpu.vector_store %arg11[%c0_112, %c0_113, %c0_114], %179 {strides = array<i32>} : memref<4x8x1xf32, #tpu.memory_space<vmem>>, vector<4x8x1xf32>,
      %cst_115 = arith.constant 0.000000e+00 : f32
      %181 = vector.broadcast %cst_115 : f32 to vector<4x8x1xf32>
      %c0_116 = arith.constant 0 : index
      %c0_117 = arith.constant 0 : index
      %c0_118 = arith.constant 0 : index
      %182 = vector.load %arg12[%c0_116, %c0_117, %c0_118] : memref<4x8x1xf32, #tpu.memory_space<vmem>>, vector<4x8x1xf32>
      tpu.vector_store %arg12[%c0_116, %c0_117, %c0_118], %181 {strides = array<i32>} : memref<4x8x1xf32, #tpu.memory_space<vmem>>, vector<4x8x1xf32>,
      %cst_119 = arith.constant 0.000000e+00 : f32
      %183 = vector.broadcast %cst_119 : f32 to vector<8x32xf32>
      %c0_120 = arith.constant 0 : index
      %c0_121 = arith.constant 0 : index
      %184 = vector.load %arg13[%c0_120, %c0_121] : memref<8x32xf32, #tpu.memory_space<vmem>>, vector<8x32xf32>
      tpu.vector_store %arg13[%c0_120, %c0_121], %183 {strides = array<i32>} : memref<8x32xf32, #tpu.memory_space<vmem>>, vector<8x32xf32>,
    } else {
    }
    %c0 = arith.constant 0 : index
    %c0_1 = arith.constant 0 : index
    %c0_2 = arith.constant 0 : index
    %3 = vector.load %arg4[%c0, %c0_1, %c0_2] : memref<1x8x32xbf16, #tpu.memory_space<vmem>>, vector<1x8x32xbf16>
    %4 = vector.shape_cast %3 : vector<1x8x32xbf16> to vector<8x32xbf16>
    %c0_3 = arith.constant 0 : index
    %c0_4 = arith.constant 0 : index
    %5 = vector.load %arg7[%c0_3, %c0_4] : memref<32x64xbf16, #tpu.memory_space<vmem>>, vector<32x64xbf16>
    %cst = arith.constant dense<0.000000e+00> : vector<8x64xf32>
    %6 = tpu.matmul %4, %5, %cst {dimension_numbers = #tpu.dot_dimension_numbers<[1], [0], [0], [1], [0, 0, 1, 1], [], []>} : vector<8x32xbf16>, vector<32x64xbf16>, vector<8x64xf32> -> vector<8x64xf32>
    %c0_5 = arith.constant 0 : index
    %c0_6 = arith.constant 0 : index
    %7 = vector.load %arg8[%c0_5, %c0_6] : memref<1x64xf32, #tpu.memory_space<vmem>>, vector<1x64xf32>
    %8 = vector.broadcast %7 : vector<1x64xf32> to vector<8x64xf32>
    %9 = arith.addf %6, %8 : vector<8x64xf32>
    %10 = vector.extract_strided_slice %9 {offsets = [0, 0], sizes = [8, 32], strides = [1, 1]} : vector<8x64xf32> to vector<8x32xf32>
    %11 = arith.truncf %10 : vector<8x32xf32> to vector<8x32xbf16>
    %12 = vector.extract_strided_slice %9 {offsets = [0, 32], sizes = [8, 32], strides = [1, 1]} : vector<8x64xf32> to vector<8x32xf32>
    %13 = arith.truncf %12 : vector<8x32xf32> to vector<8x32xbf16>
    %c0_7 = arith.constant 0 : index
    %c0_8 = arith.constant 0 : index
    %c0_9 = arith.constant 0 : index
    %14 = vector.load %arg2[%c0_7, %c0_8, %c0_9] : memref<1x1x8xi32, #tpu.memory_space<vmem>>, vector<1x1x8xi32>
    %15 = vector.shape_cast %14 : vector<1x1x8xi32> to vector<1x8xi32>
    %c0_i32_10 = arith.constant 0 : i32
    %16 = vector.broadcast %c0_i32_10 : i32 to vector<1x8xi32>
    %17 = arith.cmpi ne, %15, %16 : vector<1x8xi32>
    %18 = vector.shape_cast %17 : vector<1x8xi1> to vector<1x8xi1>
    %19 = vector.broadcast %18 : vector<1x8xi1> to vector<8x8xi1>
    %cst_11 = arith.constant -1.000000e+09 : f32
    %cst_12 = arith.constant 0.000000e+00 : f32
    %20 = vector.broadcast %cst_11 : f32 to vector<8x8xf32>
    %21 = vector.broadcast %cst_12 : f32 to vector<8x8xf32>
    %22 = arith.select %19, %20, %21 : vector<8x8xi1>, vector<8x8xf32>
    %c0_13 = arith.constant 0 : index
    %c0_14 = arith.constant 0 : index
    %23 = vector.load %arg10[%c0_13, %c0_14] : memref<8x32xbf16, #tpu.memory_space<vmem>>, vector<8x8xbf16>
    %24 = vector.extract_strided_slice %11 {offsets = [0, 0], sizes = [8, 8], strides = [1, 1]} : vector<8x32xbf16> to vector<8x8xbf16>
    %cst_15 = arith.constant dense<0.000000e+00> : vector<8x8xf32>
    %25 = tpu.matmul %23, %24, %cst_15 {dimension_numbers = #tpu.dot_dimension_numbers<[1], [1], [0], [0], [0, 0, 1, 0], [], []>} : vector<8x8xbf16>, vector<8x8xbf16>, vector<8x8xf32> -> vector<8x8xf32>
    %cst_16 = arith.constant 0.353553385 : f32
    %26 = vector.broadcast %cst_16 : f32 to vector<8x8xf32>
    %27 = arith.mulf %25, %26 : vector<8x8xf32>
    %28 = arith.addf %27, %22 : vector<8x8xf32>
    %c0_17 = arith.constant 0 : index
    %c0_18 = arith.constant 0 : index
    %c0_19 = arith.constant 0 : index
    %29 = vector.load %arg11[%c0_17, %c0_18, %c0_19] : memref<4x8x1xf32, #tpu.memory_space<vmem>>, vector<1x8x1xf32>
    %30 = vector.shape_cast %29 : vector<1x8x1xf32> to vector<8x1xf32>
    %cst_20 = arith.constant dense<0xFF800000> : vector<8xf32>
    %31 = vector.multi_reduction <maximumf>, %28, %cst_20 [1] : vector<8x8xf32> to vector<8xf32>
    %32 = vector.shape_cast %31 : vector<8xf32> to vector<8x1xf32>
    %33 = arith.maximumf %30, %32 : vector<8x1xf32>
    %34 = arith.subf %30, %33 : vector<8x1xf32>
    %35 = math.exp %34 : vector<8x1xf32>
    %36 = vector.broadcast %33 : vector<8x1xf32> to vector<8x8xf32>
    %37 = arith.subf %28, %36 : vector<8x8xf32>
    %38 = math.exp %37 : vector<8x8xf32>
    %c0_21 = arith.constant 0 : index
    %c0_22 = arith.constant 0 : index
    %c0_23 = arith.constant 0 : index
    %39 = vector.load %arg12[%c0_21, %c0_22, %c0_23] : memref<4x8x1xf32, #tpu.memory_space<vmem>>, vector<1x8x1xf32>
    %40 = vector.shape_cast %39 : vector<1x8x1xf32> to vector<8x1xf32>
    %41 = arith.mulf %35, %40 : vector<8x1xf32>
    %cst_24 = arith.constant dense<0.000000e+00> : vector<8xf32>
    %42 = vector.multi_reduction <add>, %38, %cst_24 [1] : vector<8x8xf32> to vector<8xf32>
    %43 = vector.shape_cast %42 : vector<8xf32> to vector<8x1xf32>
    %44 = arith.addf %41, %43 : vector<8x1xf32>
    %c0_25 = arith.constant 0 : index
    %c0_26 = arith.constant 0 : index
    %c0_27 = arith.constant 0 : index
    %45 = vector.load %arg12[%c0_25, %c0_26, %c0_27] : memref<4x8x1xf32, #tpu.memory_space<vmem>>, vector<1x8x1xf32>
    %46 = vector.shape_cast %45 : vector<1x8x1xf32> to vector<8x1xf32>
    %47 = vector.shape_cast %44 : vector<8x1xf32> to vector<1x8x1xf32>
    tpu.vector_store %arg12[%c0_25, %c0_26, %c0_27], %47 {strides = array<i32>} : memref<4x8x1xf32, #tpu.memory_space<vmem>>, vector<1x8x1xf32>,
    %c0_28 = arith.constant 0 : index
    %c0_29 = arith.constant 0 : index
    %48 = vector.load %arg13[%c0_28, %c0_29] : memref<8x32xf32, #tpu.memory_space<vmem>>, vector<8x8xf32>
    %49 = vector.broadcast %35 : vector<8x1xf32> to vector<8x8xf32>
    %50 = arith.mulf %49, %48 : vector<8x8xf32>
    %51 = arith.truncf %38 : vector<8x8xf32> to vector<8x8xbf16>
    %52 = vector.extract_strided_slice %13 {offsets = [0, 0], sizes = [8, 8], strides = [1, 1]} : vector<8x32xbf16> to vector<8x8xbf16>
    %cst_30 = arith.constant dense<0.000000e+00> : vector<8x8xf32>
    %53 = tpu.matmul %51, %52, %cst_30 {dimension_numbers = #tpu.dot_dimension_numbers<[1], [0], [0], [1], [0, 0, 1, 1], [], []>} : vector<8x8xbf16>, vector<8x8xbf16>, vector<8x8xf32> -> vector<8x8xf32>
    %54 = arith.addf %50, %53 : vector<8x8xf32>
    %c0_31 = arith.constant 0 : index
    %c0_32 = arith.constant 0 : index
    %55 = vector.load %arg13[%c0_31, %c0_32] : memref<8x32xf32, #tpu.memory_space<vmem>>, vector<8x8xf32>
    tpu.vector_store %arg13[%c0_31, %c0_32], %54 {strides = array<i32>} : memref<8x32xf32, #tpu.memory_space<vmem>>, vector<8x8xf32>,
    %c0_33 = arith.constant 0 : index
    %c0_34 = arith.constant 0 : index
    %c0_35 = arith.constant 0 : index
    %56 = vector.load %arg11[%c0_33, %c0_34, %c0_35] : memref<4x8x1xf32, #tpu.memory_space<vmem>>, vector<1x8x1xf32>
    %57 = vector.shape_cast %56 : vector<1x8x1xf32> to vector<8x1xf32>
    %58 = vector.shape_cast %33 : vector<8x1xf32> to vector<1x8x1xf32>
    tpu.vector_store %arg11[%c0_33, %c0_34, %c0_35], %58 {strides = array<i32>} : memref<4x8x1xf32, #tpu.memory_space<vmem>>, vector<1x8x1xf32>,
    %c0_36 = arith.constant 0 : index
    %c8 = arith.constant 8 : index
    %59 = vector.load %arg10[%c0_36, %c8] : memref<8x32xbf16, #tpu.memory_space<vmem>>, vector<8x8xbf16>
    %60 = vector.extract_strided_slice %11 {offsets = [0, 8], sizes = [8, 8], strides = [1, 1]} : vector<8x32xbf16> to vector<8x8xbf16>
    %cst_37 = arith.constant dense<0.000000e+00> : vector<8x8xf32>
    %61 = tpu.matmul %59, %60, %cst_37 {dimension_numbers = #tpu.dot_dimension_numbers<[1], [1], [0], [0], [0, 0, 1, 0], [], []>} : vector<8x8xbf16>, vector<8x8xbf16>, vector<8x8xf32> -> vector<8x8xf32>
    %cst_38 = arith.constant 0.353553385 : f32
    %62 = vector.broadcast %cst_38 : f32 to vector<8x8xf32>
    %63 = arith.mulf %61, %62 : vector<8x8xf32>
    %64 = arith.addf %63, %22 : vector<8x8xf32>
    %c1 = arith.constant 1 : index
    %c0_39 = arith.constant 0 : index
    %c0_40 = arith.constant 0 : index
    %65 = vector.load %arg11[%c1, %c0_39, %c0_40] : memref<4x8x1xf32, #tpu.memory_space<vmem>>, vector<1x8x1xf32>
    %66 = vector.shape_cast %65 : vector<1x8x1xf32> to vector<8x1xf32>
    %cst_41 = arith.constant dense<0xFF800000> : vector<8xf32>
    %67 = vector.multi_reduction <maximumf>, %64, %cst_41 [1] : vector<8x8xf32> to vector<8xf32>
    %68 = vector.shape_cast %67 : vector<8xf32> to vector<8x1xf32>
    %69 = arith.maximumf %66, %68 : vector<8x1xf32>
    %70 = arith.subf %66, %69 : vector<8x1xf32>
    %71 = math.exp %70 : vector<8x1xf32>
    %72 = vector.broadcast %69 : vector<8x1xf32> to vector<8x8xf32>
    %73 = arith.subf %64, %72 : vector<8x8xf32>
    %74 = math.exp %73 : vector<8x8xf32>
    %c1_42 = arith.constant 1 : index
    %c0_43 = arith.constant 0 : index
    %c0_44 = arith.constant 0 : index
    %75 = vector.load %arg12[%c1_42, %c0_43, %c0_44] : memref<4x8x1xf32, #tpu.memory_space<vmem>>, vector<1x8x1xf32>
    %76 = vector.shape_cast %75 : vector<1x8x1xf32> to vector<8x1xf32>
    %77 = arith.mulf %71, %76 : vector<8x1xf32>
    %cst_45 = arith.constant dense<0.000000e+00> : vector<8xf32>
    %78 = vector.multi_reduction <add>, %74, %cst_45 [1] : vector<8x8xf32> to vector<8xf32>
    %79 = vector.shape_cast %78 : vector<8xf32> to vector<8x1xf32>
    %80 = arith.addf %77, %79 : vector<8x1xf32>
    %c1_46 = arith.constant 1 : index
    %c0_47 = arith.constant 0 : index
    %c0_48 = arith.constant 0 : index
    %81 = vector.load %arg12[%c1_46, %c0_47, %c0_48] : memref<4x8x1xf32, #tpu.memory_space<vmem>>, vector<1x8x1xf32>
    %82 = vector.shape_cast %81 : vector<1x8x1xf32> to vector<8x1xf32>
    %83 = vector.shape_cast %80 : vector<8x1xf32> to vector<1x8x1xf32>
    tpu.vector_store %arg12[%c1_46, %c0_47, %c0_48], %83 {strides = array<i32>} : memref<4x8x1xf32, #tpu.memory_space<vmem>>, vector<1x8x1xf32>,
    %c0_49 = arith.constant 0 : index
    %c8_50 = arith.constant 8 : index
    %84 = vector.load %arg13[%c0_49, %c8_50] : memref<8x32xf32, #tpu.memory_space<vmem>>, vector<8x8xf32>
    %85 = vector.broadcast %71 : vector<8x1xf32> to vector<8x8xf32>
    %86 = arith.mulf %85, %84 : vector<8x8xf32>
    %87 = arith.truncf %74 : vector<8x8xf32> to vector<8x8xbf16>
    %88 = vector.extract_strided_slice %13 {offsets = [0, 8], sizes = [8, 8], strides = [1, 1]} : vector<8x32xbf16> to vector<8x8xbf16>
    %cst_51 = arith.constant dense<0.000000e+00> : vector<8x8xf32>
    %89 = tpu.matmul %87, %88, %cst_51 {dimension_numbers = #tpu.dot_dimension_numbers<[1], [0], [0], [1], [0, 0, 1, 1], [], []>} : vector<8x8xbf16>, vector<8x8xbf16>, vector<8x8xf32> -> vector<8x8xf32>
    %90 = arith.addf %86, %89 : vector<8x8xf32>
    %c0_52 = arith.constant 0 : index
    %c8_53 = arith.constant 8 : index
    %91 = vector.load %arg13[%c0_52, %c8_53] : memref<8x32xf32, #tpu.memory_space<vmem>>, vector<8x8xf32>
    tpu.vector_store %arg13[%c0_52, %c8_53], %90 {strides = array<i32>} : memref<8x32xf32, #tpu.memory_space<vmem>>, vector<8x8xf32>,
    %c1_54 = arith.constant 1 : index
    %c0_55 = arith.constant 0 : index
    %c0_56 = arith.constant 0 : index
    %92 = vector.load %arg11[%c1_54, %c0_55, %c0_56] : memref<4x8x1xf32, #tpu.memory_space<vmem>>, vector<1x8x1xf32>
    %93 = vector.shape_cast %92 : vector<1x8x1xf32> to vector<8x1xf32>
    %94 = vector.shape_cast %69 : vector<8x1xf32> to vector<1x8x1xf32>
    tpu.vector_store %arg11[%c1_54, %c0_55, %c0_56], %94 {strides = array<i32>} : memref<4x8x1xf32, #tpu.memory_space<vmem>>, vector<1x8x1xf32>,
    %c0_57 = arith.constant 0 : index
    %c16 = arith.constant 16 : index
    %95 = vector.load %arg10[%c0_57, %c16] : memref<8x32xbf16, #tpu.memory_space<vmem>>, vector<8x8xbf16>
    %96 = vector.extract_strided_slice %11 {offsets = [0, 16], sizes = [8, 8], strides = [1, 1]} : vector<8x32xbf16> to vector<8x8xbf16>
    %cst_58 = arith.constant dense<0.000000e+00> : vector<8x8xf32>
    %97 = tpu.matmul %95, %96, %cst_58 {dimension_numbers = #tpu.dot_dimension_numbers<[1], [1], [0], [0], [0, 0, 1, 0], [], []>} : vector<8x8xbf16>, vector<8x8xbf16>, vector<8x8xf32> -> vector<8x8xf32>
    %cst_59 = arith.constant 0.353553385 : f32
    %98 = vector.broadcast %cst_59 : f32 to vector<8x8xf32>
    %99 = arith.mulf %97, %98 : vector<8x8xf32>
    %100 = arith.addf %99, %22 : vector<8x8xf32>
    %c2 = arith.constant 2 : index
    %c0_60 = arith.constant 0 : index
    %c0_61 = arith.constant 0 : index
    %101 = vector.load %arg11[%c2, %c0_60, %c0_61] : memref<4x8x1xf32, #tpu.memory_space<vmem>>, vector<1x8x1xf32>
    %102 = vector.shape_cast %101 : vector<1x8x1xf32> to vector<8x1xf32>
    %cst_62 = arith.constant dense<0xFF800000> : vector<8xf32>
    %103 = vector.multi_reduction <maximumf>, %100, %cst_62 [1] : vector<8x8xf32> to vector<8xf32>
    %104 = vector.shape_cast %103 : vector<8xf32> to vector<8x1xf32>
    %105 = arith.maximumf %102, %104 : vector<8x1xf32>
    %106 = arith.subf %102, %105 : vector<8x1xf32>
    %107 = math.exp %106 : vector<8x1xf32>
    %108 = vector.broadcast %105 : vector<8x1xf32> to vector<8x8xf32>
    %109 = arith.subf %100, %108 : vector<8x8xf32>
    %110 = math.exp %109 : vector<8x8xf32>
    %c2_63 = arith.constant 2 : index
    %c0_64 = arith.constant 0 : index
    %c0_65 = arith.constant 0 : index
    %111 = vector.load %arg12[%c2_63, %c0_64, %c0_65] : memref<4x8x1xf32, #tpu.memory_space<vmem>>, vector<1x8x1xf32>
    %112 = vector.shape_cast %111 : vector<1x8x1xf32> to vector<8x1xf32>
    %113 = arith.mulf %107, %112 : vector<8x1xf32>
    %cst_66 = arith.constant dense<0.000000e+00> : vector<8xf32>
    %114 = vector.multi_reduction <add>, %110, %cst_66 [1] : vector<8x8xf32> to vector<8xf32>
    %115 = vector.shape_cast %114 : vector<8xf32> to vector<8x1xf32>
    %116 = arith.addf %113, %115 : vector<8x1xf32>
    %c2_67 = arith.constant 2 : index
    %c0_68 = arith.constant 0 : index
    %c0_69 = arith.constant 0 : index
    %117 = vector.load %arg12[%c2_67, %c0_68, %c0_69] : memref<4x8x1xf32, #tpu.memory_space<vmem>>, vector<1x8x1xf32>
    %118 = vector.shape_cast %117 : vector<1x8x1xf32> to vector<8x1xf32>
    %119 = vector.shape_cast %116 : vector<8x1xf32> to vector<1x8x1xf32>
    tpu.vector_store %arg12[%c2_67, %c0_68, %c0_69], %119 {strides = array<i32>} : memref<4x8x1xf32, #tpu.memory_space<vmem>>, vector<1x8x1xf32>,
    %c0_70 = arith.constant 0 : index
    %c16_71 = arith.constant 16 : index
    %120 = vector.load %arg13[%c0_70, %c16_71] : memref<8x32xf32, #tpu.memory_space<vmem>>, vector<8x8xf32>
    %121 = vector.broadcast %107 : vector<8x1xf32> to vector<8x8xf32>
    %122 = arith.mulf %121, %120 : vector<8x8xf32>
    %123 = arith.truncf %110 : vector<8x8xf32> to vector<8x8xbf16>
    %124 = vector.extract_strided_slice %13 {offsets = [0, 16], sizes = [8, 8], strides = [1, 1]} : vector<8x32xbf16> to vector<8x8xbf16>
    %cst_72 = arith.constant dense<0.000000e+00> : vector<8x8xf32>
    %125 = tpu.matmul %123, %124, %cst_72 {dimension_numbers = #tpu.dot_dimension_numbers<[1], [0], [0], [1], [0, 0, 1, 1], [], []>} : vector<8x8xbf16>, vector<8x8xbf16>, vector<8x8xf32> -> vector<8x8xf32>
    %126 = arith.addf %122, %125 : vector<8x8xf32>
    %c0_73 = arith.constant 0 : index
    %c16_74 = arith.constant 16 : index
    %127 = vector.load %arg13[%c0_73, %c16_74] : memref<8x32xf32, #tpu.memory_space<vmem>>, vector<8x8xf32>
    tpu.vector_store %arg13[%c0_73, %c16_74], %126 {strides = array<i32>} : memref<8x32xf32, #tpu.memory_space<vmem>>, vector<8x8xf32>,
    %c2_75 = arith.constant 2 : index
    %c0_76 = arith.constant 0 : index
    %c0_77 = arith.constant 0 : index
    %128 = vector.load %arg11[%c2_75, %c0_76, %c0_77] : memref<4x8x1xf32, #tpu.memory_space<vmem>>, vector<1x8x1xf32>
    %129 = vector.shape_cast %128 : vector<1x8x1xf32> to vector<8x1xf32>
    %130 = vector.shape_cast %105 : vector<8x1xf32> to vector<1x8x1xf32>
    tpu.vector_store %arg11[%c2_75, %c0_76, %c0_77], %130 {strides = array<i32>} : memref<4x8x1xf32, #tpu.memory_space<vmem>>, vector<1x8x1xf32>,
    %c0_78 = arith.constant 0 : index
    %c24 = arith.constant 24 : index
    %131 = vector.load %arg10[%c0_78, %c24] : memref<8x32xbf16, #tpu.memory_space<vmem>>, vector<8x8xbf16>
    %132 = vector.extract_strided_slice %11 {offsets = [0, 24], sizes = [8, 8], strides = [1, 1]} : vector<8x32xbf16> to vector<8x8xbf16>
    %cst_79 = arith.constant dense<0.000000e+00> : vector<8x8xf32>
    %133 = tpu.matmul %131, %132, %cst_79 {dimension_numbers = #tpu.dot_dimension_numbers<[1], [1], [0], [0], [0, 0, 1, 0], [], []>} : vector<8x8xbf16>, vector<8x8xbf16>, vector<8x8xf32> -> vector<8x8xf32>
    %cst_80 = arith.constant 0.353553385 : f32
    %134 = vector.broadcast %cst_80 : f32 to vector<8x8xf32>
    %135 = arith.mulf %133, %134 : vector<8x8xf32>
    %136 = arith.addf %135, %22 : vector<8x8xf32>
    %c3 = arith.constant 3 : index
    %c0_81 = arith.constant 0 : index
    %c0_82 = arith.constant 0 : index
    %137 = vector.load %arg11[%c3, %c0_81, %c0_82] : memref<4x8x1xf32, #tpu.memory_space<vmem>>, vector<1x8x1xf32>
    %138 = vector.shape_cast %137 : vector<1x8x1xf32> to vector<8x1xf32>
    %cst_83 = arith.constant dense<0xFF800000> : vector<8xf32>
    %139 = vector.multi_reduction <maximumf>, %136, %cst_83 [1] : vector<8x8xf32> to vector<8xf32>
    %140 = vector.shape_cast %139 : vector<8xf32> to vector<8x1xf32>
    %141 = arith.maximumf %138, %140 : vector<8x1xf32>
    %142 = arith.subf %138, %141 : vector<8x1xf32>
    %143 = math.exp %142 : vector<8x1xf32>
    %144 = vector.broadcast %141 : vector<8x1xf32> to vector<8x8xf32>
    %145 = arith.subf %136, %144 : vector<8x8xf32>
    %146 = math.exp %145 : vector<8x8xf32>
    %c3_84 = arith.constant 3 : index
    %c0_85 = arith.constant 0 : index
    %c0_86 = arith.constant 0 : index
    %147 = vector.load %arg12[%c3_84, %c0_85, %c0_86] : memref<4x8x1xf32, #tpu.memory_space<vmem>>, vector<1x8x1xf32>
    %148 = vector.shape_cast %147 : vector<1x8x1xf32> to vector<8x1xf32>
    %149 = arith.mulf %143, %148 : vector<8x1xf32>
    %cst_87 = arith.constant dense<0.000000e+00> : vector<8xf32>
    %150 = vector.multi_reduction <add>, %146, %cst_87 [1] : vector<8x8xf32> to vector<8xf32>
    %151 = vector.shape_cast %150 : vector<8xf32> to vector<8x1xf32>
    %152 = arith.addf %149, %151 : vector<8x1xf32>
    %c3_88 = arith.constant 3 : index
    %c0_89 = arith.constant 0 : index
    %c0_90 = arith.constant 0 : index
    %153 = vector.load %arg12[%c3_88, %c0_89, %c0_90] : memref<4x8x1xf32, #tpu.memory_space<vmem>>, vector<1x8x1xf32>
    %154 = vector.shape_cast %153 : vector<1x8x1xf32> to vector<8x1xf32>
    %155 = vector.shape_cast %152 : vector<8x1xf32> to vector<1x8x1xf32>
    tpu.vector_store %arg12[%c3_88, %c0_89, %c0_90], %155 {strides = array<i32>} : memref<4x8x1xf32, #tpu.memory_space<vmem>>, vector<1x8x1xf32>,
    %c0_91 = arith.constant 0 : index
    %c24_92 = arith.constant 24 : index
    %156 = vector.load %arg13[%c0_91, %c24_92] : memref<8x32xf32, #tpu.memory_space<vmem>>, vector<8x8xf32>
    %157 = vector.broadcast %143 : vector<8x1xf32> to vector<8x8xf32>
    %158 = arith.mulf %157, %156 : vector<8x8xf32>
    %159 = arith.truncf %146 : vector<8x8xf32> to vector<8x8xbf16>
    %160 = vector.extract_strided_slice %13 {offsets = [0, 24], sizes = [8, 8], strides = [1, 1]} : vector<8x32xbf16> to vector<8x8xbf16>
    %cst_93 = arith.constant dense<0.000000e+00> : vector<8x8xf32>
    %161 = tpu.matmul %159, %160, %cst_93 {dimension_numbers = #tpu.dot_dimension_numbers<[1], [0], [0], [1], [0, 0, 1, 1], [], []>} : vector<8x8xbf16>, vector<8x8xbf16>, vector<8x8xf32> -> vector<8x8xf32>
    %162 = arith.addf %158, %161 : vector<8x8xf32>
    %c0_94 = arith.constant 0 : index
    %c24_95 = arith.constant 24 : index
    %163 = vector.load %arg13[%c0_94, %c24_95] : memref<8x32xf32, #tpu.memory_space<vmem>>, vector<8x8xf32>
    tpu.vector_store %arg13[%c0_94, %c24_95], %162 {strides = array<i32>} : memref<8x32xf32, #tpu.memory_space<vmem>>, vector<8x8xf32>,
    %c3_96 = arith.constant 3 : index
    %c0_97 = arith.constant 0 : index
    %c0_98 = arith.constant 0 : index
    %164 = vector.load %arg11[%c3_96, %c0_97, %c0_98] : memref<4x8x1xf32, #tpu.memory_space<vmem>>, vector<1x8x1xf32>
    %165 = vector.shape_cast %164 : vector<1x8x1xf32> to vector<8x1xf32>
    %166 = vector.shape_cast %141 : vector<8x1xf32> to vector<1x8x1xf32>
    tpu.vector_store %arg11[%c3_96, %c0_97, %c0_98], %166 {strides = array<i32>} : memref<4x8x1xf32, #tpu.memory_space<vmem>>, vector<1x8x1xf32>,
    %c0_i32_99 = arith.constant 0 : i32
    %167 = arith.cmpi eq, %arg1, %c0_i32_99 : i32
    %168 = arith.extui %167 : i1 to i32
    %c0_i32_100 = arith.constant 0 : i32
    %169 = arith.cmpi ne, %168, %c0_i32_100 : i32
    scf.if %169 {
      %c0_101 = arith.constant 0 : index
      %c0_102 = arith.constant 0 : index
      %170 = vector.load %arg13[%c0_101, %c0_102] : memref<8x32xf32, #tpu.memory_space<vmem>>, vector<8x8xf32>
      %c0_103 = arith.constant 0 : index
      %c0_104 = arith.constant 0 : index
      %c0_105 = arith.constant 0 : index
      %171 = vector.load %arg12[%c0_103, %c0_104, %c0_105] : memref<4x8x1xf32, #tpu.memory_space<vmem>>, vector<1x8x1xf32>
      %172 = vector.shape_cast %171 : vector<1x8x1xf32> to vector<8x1xf32>
      %173 = tpu.reciprocal %172 {approx = true} : vector<8x1xf32> -> vector<8x1xf32>
      %174 = vector.broadcast %173 : vector<8x1xf32> to vector<8x8xf32>
      %175 = arith.mulf %170, %174 : vector<8x8xf32>
      %c0_106 = arith.constant 0 : index
      %c0_107 = arith.constant 0 : index
      %176 = vector.load %arg13[%c0_106, %c0_107] : memref<8x32xf32, #tpu.memory_space<vmem>>, vector<8x8xf32>
      tpu.vector_store %arg13[%c0_106, %c0_107], %175 {strides = array<i32>} : memref<8x32xf32, #tpu.memory_space<vmem>>, vector<8x8xf32>,
      %c0_108 = arith.constant 0 : index
      %c8_109 = arith.constant 8 : index
      %177 = vector.load %arg13[%c0_108, %c8_109] : memref<8x32xf32, #tpu.memory_space<vmem>>, vector<8x8xf32>
      %c1_110 = arith.constant 1 : index
      %c0_111 = arith.constant 0 : index
      %c0_112 = arith.constant 0 : index
      %178 = vector.load %arg12[%c1_110, %c0_111, %c0_112] : memref<4x8x1xf32, #tpu.memory_space<vmem>>, vector<1x8x1xf32>
      %179 = vector.shape_cast %178 : vector<1x8x1xf32> to vector<8x1xf32>
      %180 = tpu.reciprocal %179 {approx = true} : vector<8x1xf32> -> vector<8x1xf32>
      %181 = vector.broadcast %180 : vector<8x1xf32> to vector<8x8xf32>
      %182 = arith.mulf %177, %181 : vector<8x8xf32>
      %c0_113 = arith.constant 0 : index
      %c8_114 = arith.constant 8 : index
      %183 = vector.load %arg13[%c0_113, %c8_114] : memref<8x32xf32, #tpu.memory_space<vmem>>, vector<8x8xf32>
      tpu.vector_store %arg13[%c0_113, %c8_114], %182 {strides = array<i32>} : memref<8x32xf32, #tpu.memory_space<vmem>>, vector<8x8xf32>,
      %c0_115 = arith.constant 0 : index
      %c16_116 = arith.constant 16 : index
      %184 = vector.load %arg13[%c0_115, %c16_116] : memref<8x32xf32, #tpu.memory_space<vmem>>, vector<8x8xf32>
      %c2_117 = arith.constant 2 : index
      %c0_118 = arith.constant 0 : index
      %c0_119 = arith.constant 0 : index
      %185 = vector.load %arg12[%c2_117, %c0_118, %c0_119] : memref<4x8x1xf32, #tpu.memory_space<vmem>>, vector<1x8x1xf32>
      %186 = vector.shape_cast %185 : vector<1x8x1xf32> to vector<8x1xf32>
      %187 = tpu.reciprocal %186 {approx = true} : vector<8x1xf32> -> vector<8x1xf32>
      %188 = vector.broadcast %187 : vector<8x1xf32> to vector<8x8xf32>
      %189 = arith.mulf %184, %188 : vector<8x8xf32>
      %c0_120 = arith.constant 0 : index
      %c16_121 = arith.constant 16 : index
      %190 = vector.load %arg13[%c0_120, %c16_121] : memref<8x32xf32, #tpu.memory_space<vmem>>, vector<8x8xf32>
      tpu.vector_store %arg13[%c0_120, %c16_121], %189 {strides = array<i32>} : memref<8x32xf32, #tpu.memory_space<vmem>>, vector<8x8xf32>,
      %c0_122 = arith.constant 0 : index
      %c24_123 = arith.constant 24 : index
      %191 = vector.load %arg13[%c0_122, %c24_123] : memref<8x32xf32, #tpu.memory_space<vmem>>, vector<8x8xf32>
      %c3_124 = arith.constant 3 : index
      %c0_125 = arith.constant 0 : index
      %c0_126 = arith.constant 0 : index
      %192 = vector.load %arg12[%c3_124, %c0_125, %c0_126] : memref<4x8x1xf32, #tpu.memory_space<vmem>>, vector<1x8x1xf32>
      %193 = vector.shape_cast %192 : vector<1x8x1xf32> to vector<8x1xf32>
      %194 = tpu.reciprocal %193 {approx = true} : vector<8x1xf32> -> vector<8x1xf32>
      %195 = vector.broadcast %194 : vector<8x1xf32> to vector<8x8xf32>
      %196 = arith.mulf %191, %195 : vector<8x8xf32>
      %c0_127 = arith.constant 0 : index
      %c24_128 = arith.constant 24 : index
      %197 = vector.load %arg13[%c0_127, %c24_128] : memref<8x32xf32, #tpu.memory_space<vmem>>, vector<8x8xf32>
      tpu.vector_store %arg13[%c0_127, %c24_128], %196 {strides = array<i32>} : memref<8x32xf32, #tpu.memory_space<vmem>>, vector<8x8xf32>,
      %c0_129 = arith.constant 0 : index
      %c0_130 = arith.constant 0 : index
      %198 = vector.load %arg13[%c0_129, %c0_130] : memref<8x32xf32, #tpu.memory_space<vmem>>, vector<8x32xf32>
      %199 = arith.truncf %198 : vector<8x32xf32> to vector<8x32xbf16>
      %c0_131 = arith.constant 0 : index
      %c0_132 = arith.constant 0 : index
      %c0_133 = arith.constant 0 : index
      %200 = vector.load %arg9[%c0_131, %c0_132, %c0_133] : memref<1x8x32xbf16, #tpu.memory_space<vmem>>, vector<1x8x32xbf16>
      %201 = vector.shape_cast %200 : vector<1x8x32xbf16> to vector<8x32xbf16>
      %202 = vector.shape_cast %199 : vector<8x32xbf16> to vector<1x8x32xbf16>
      tpu.vector_store %arg9[%c0_131, %c0_132, %c0_133], %202 {strides = array<i32>} : memref<1x8x32xbf16, #tpu.memory_space<vmem>>, vector<1x8x32xbf16>,
    } else {
    }
    return
  }
  func.func @transform_0(%arg0: i32, %arg1: i32) -> (i32, i32, i32) {
    %c0_i32 = arith.constant 0 : i32
    %c0_i32_0 = arith.constant 0 : i32
    return %arg0, %c0_i32, %arg1 : i32, i32, i32
  }
  func.func @transform_1(%arg0: i32, %arg1: i32) -> (i32, i32, i32) {
    %c0_i32 = arith.constant 0 : i32
    %c0_i32_0 = arith.constant 0 : i32
    %c0_i32_1 = arith.constant 0 : i32
    return %arg0, %c0_i32, %c0_i32_0 : i32, i32, i32
  }
  func.func @transform_2(%arg0: i32, %arg1: i32) -> (i32, i32, i32) {
    %c0_i32 = arith.constant 0 : i32
    %c0_i32_0 = arith.constant 0 : i32
    return %arg0, %arg1, %c0_i32 : i32, i32, i32
  }
  func.func @transform_3(%arg0: i32, %arg1: i32) -> (i32, i32) {
    %c0_i32 = arith.constant 0 : i32
    %c0_i32_0 = arith.constant 0 : i32
    %c0_i32_1 = arith.constant 0 : i32
    return %c0_i32, %c0_i32_0 : i32, i32
  }
  func.func @transform_4(%arg0: i32, %arg1: i32) -> (i32, i32) {
    %c0_i32 = arith.constant 0 : i32
    %c0_i32_0 = arith.constant 0 : i32
    %c0_i32_1 = arith.constant 0 : i32
    return %c0_i32, %c0_i32_0 : i32, i32
  }
  func.func @transform_5(%arg0: i32, %arg1: i32) -> (i32, i32) {
    %c0_i32 = arith.constant 0 : i32
    %c0_i32_0 = arith.constant 0 : i32
    %c0_i32_1 = arith.constant 0 : i32
    return %c0_i32, %c0_i32_0 : i32, i32
  }
  func.func @transform_6(%arg0: i32, %arg1: i32) -> (i32, i32) {
    %c0_i32 = arith.constant 0 : i32
    %c0_i32_0 = arith.constant 0 : i32
    %c0_i32_1 = arith.constant 0 : i32
    return %c0_i32, %c0_i32_0 : i32, i32
  }
  func.func @transform_7(%arg0: i32, %arg1: i32) -> (i32, i32, i32) {
    %c0_i32 = arith.constant 0 : i32
    %c0_i32_0 = arith.constant 0 : i32
    %c0_i32_1 = arith.constant 0 : i32
    return %arg0, %c0_i32, %c0_i32_0 : i32, i32, i32
  }
}

module attributes {stable_mosaic.version = 11 : i64} {
  func.func @kernel(%arg0: i32, %arg1: i32, %arg2: memref<8x32xbf16, #tpu.memory_space<vmem>>, %arg3: memref<32x64xbf16, #tpu.memory_space<vmem>>, %arg4: memref<1x64xf32, #tpu.memory_space<vmem>>, %arg5: memref<64x32xbf16, #tpu.memory_space<vmem>>, %arg6: memref<1x32xf32, #tpu.memory_space<vmem>>, %arg7: memref<1x32xf32, #tpu.memory_space<vmem>>, %arg8: memref<1x32xf32, #tpu.memory_space<vmem>>, %arg9: memref<8x32xbf16, #tpu.memory_space<vmem>>, %arg10: memref<8x32xf32, #tpu.memory_space<vmem>>) attributes {dimension_semantics = [#tpu.dimension_semantics<parallel>, #tpu.dimension_semantics<arbitrary>], iteration_bounds = array<i64: 2, 1>, scalar_prefetch = 0 : i64, scratch_operands = 1 : i64, tpu.core_type = #tpu.core_type<tc>, window_params = [{transform_indices = @transform_0, window_bounds = array<i64: 8, 32>}, {transform_indices = @transform_1, window_bounds = array<i64: 32, 64>}, {transform_indices = @transform_2, window_bounds = array<i64: 1, 64>}, {transform_indices = @transform_3, window_bounds = array<i64: 64, 32>}, {pipeline_mode = #tpu.pipeline_mode<synchronous>, transform_indices = @transform_4, window_bounds = array<i64: 1, 32>}, {pipeline_mode = #tpu.pipeline_mode<synchronous>, transform_indices = @transform_5, window_bounds = array<i64: 1, 32>}, {pipeline_mode = #tpu.pipeline_mode<synchronous>, transform_indices = @transform_6, window_bounds = array<i64: 1, 32>}, {transform_indices = @transform_7, window_bounds = array<i64: 8, 32>}]} {
    %c0_i32 = arith.constant 0 : i32
    %0 = arith.cmpi eq, %arg1, %c0_i32 : i32
    %1 = arith.extui %0 : i1 to i32
    %c0_i32_0 = arith.constant 0 : i32
    %2 = arith.cmpi ne, %1, %c0_i32_0 : i32
    scf.if %2 {
      %cst_16 = arith.constant 0.000000e+00 : f32
      %20 = vector.broadcast %cst_16 : f32 to vector<8x32xf32>
      %c0_17 = arith.constant 0 : index
      %c0_18 = arith.constant 0 : index
      %21 = vector.load %arg10[%c0_17, %c0_18] : memref<8x32xf32, #tpu.memory_space<vmem>>, vector<8x32xf32>
      tpu.vector_store %arg10[%c0_17, %c0_18], %20 {strides = array<i32>} : memref<8x32xf32, #tpu.memory_space<vmem>>, vector<8x32xf32>,
    } else {
    }
    %c0 = arith.constant 0 : index
    %c0_1 = arith.constant 0 : index
    %3 = vector.load %arg2[%c0, %c0_1] : memref<8x32xbf16, #tpu.memory_space<vmem>>, vector<8x32xbf16>
    %c0_2 = arith.constant 0 : index
    %c0_3 = arith.constant 0 : index
    %4 = vector.load %arg3[%c0_2, %c0_3] : memref<32x64xbf16, #tpu.memory_space<vmem>>, vector<32x64xbf16>
    %cst = arith.constant dense<0.000000e+00> : vector<8x64xf32>
    %5 = tpu.matmul %3, %4, %cst {dimension_numbers = #tpu.dot_dimension_numbers<[1], [0], [0], [1], [0, 0, 1, 1], [], []>} : vector<8x32xbf16>, vector<32x64xbf16>, vector<8x64xf32> -> vector<8x64xf32>
    %c0_4 = arith.constant 0 : index
    %c0_5 = arith.constant 0 : index
    %6 = vector.load %arg4[%c0_4, %c0_5] : memref<1x64xf32, #tpu.memory_space<vmem>>, vector<1x64xf32>
    %7 = vector.broadcast %6 : vector<1x64xf32> to vector<8x64xf32>
    %8 = arith.addf %5, %7 : vector<8x64xf32>
    %cst_6 = arith.constant 0.000000e+00 : f32
    %9 = vector.broadcast %cst_6 : f32 to vector<8x64xf32>
    %10 = arith.maximumf %8, %9 : vector<8x64xf32>
    %c0_7 = arith.constant 0 : index
    %c0_8 = arith.constant 0 : index
    %11 = vector.load %arg10[%c0_7, %c0_8] : memref<8x32xf32, #tpu.memory_space<vmem>>, vector<8x32xf32>
    %12 = arith.truncf %10 : vector<8x64xf32> to vector<8x64xbf16>
    %c0_9 = arith.constant 0 : index
    %c0_10 = arith.constant 0 : index
    %13 = vector.load %arg5[%c0_9, %c0_10] : memref<64x32xbf16, #tpu.memory_space<vmem>>, vector<64x32xbf16>
    %cst_11 = arith.constant dense<0.000000e+00> : vector<8x32xf32>
    %14 = tpu.matmul %12, %13, %cst_11 {dimension_numbers = #tpu.dot_dimension_numbers<[1], [0], [0], [1], [0, 0, 1, 1], [], []>} : vector<8x64xbf16>, vector<64x32xbf16>, vector<8x32xf32> -> vector<8x32xf32>
    %15 = arith.addf %11, %14 : vector<8x32xf32>
    %c0_12 = arith.constant 0 : index
    %c0_13 = arith.constant 0 : index
    %16 = vector.load %arg10[%c0_12, %c0_13] : memref<8x32xf32, #tpu.memory_space<vmem>>, vector<8x32xf32>
    tpu.vector_store %arg10[%c0_12, %c0_13], %15 {strides = array<i32>} : memref<8x32xf32, #tpu.memory_space<vmem>>, vector<8x32xf32>,
    %c0_i32_14 = arith.constant 0 : i32
    %17 = arith.cmpi eq, %arg1, %c0_i32_14 : i32
    %18 = arith.extui %17 : i1 to i32
    %c0_i32_15 = arith.constant 0 : i32
    %19 = arith.cmpi ne, %18, %c0_i32_15 : i32
    scf.if %19 {
      %c0_16 = arith.constant 0 : index
      %c0_17 = arith.constant 0 : index
      %20 = vector.load %arg2[%c0_16, %c0_17] : memref<8x32xbf16, #tpu.memory_space<vmem>>, vector<8x32xbf16>
      %21 = arith.extf %20 : vector<8x32xbf16> to vector<8x32xf32>
      %c0_18 = arith.constant 0 : index
      %c0_19 = arith.constant 0 : index
      %22 = vector.load %arg10[%c0_18, %c0_19] : memref<8x32xf32, #tpu.memory_space<vmem>>, vector<8x32xf32>
      %23 = arith.addf %21, %22 : vector<8x32xf32>
      %c0_20 = arith.constant 0 : index
      %c0_21 = arith.constant 0 : index
      %24 = vector.load %arg6[%c0_20, %c0_21] : memref<1x32xf32, #tpu.memory_space<vmem>>, vector<1x32xf32>
      %25 = vector.broadcast %24 : vector<1x32xf32> to vector<8x32xf32>
      %26 = arith.addf %23, %25 : vector<8x32xf32>
      %cst_22 = arith.constant dense<0.000000e+00> : vector<8xf32>
      %27 = vector.multi_reduction <add>, %26, %cst_22 [1] : vector<8x32xf32> to vector<8xf32>
      %28 = vector.shape_cast %27 : vector<8xf32> to vector<8x1xf32>
      %cst_23 = arith.constant 3.200000e+01 : f32
      %29 = vector.broadcast %cst_23 : f32 to vector<8x1xf32>
      %30 = arith.divf %28, %29 : vector<8x1xf32>
      %31 = vector.broadcast %30 : vector<8x1xf32> to vector<8x32xf32>
      %32 = arith.subf %26, %31 : vector<8x32xf32>
      %33 = vector.broadcast %30 : vector<8x1xf32> to vector<8x32xf32>
      %34 = arith.subf %26, %33 : vector<8x32xf32>
      %35 = arith.mulf %32, %34 : vector<8x32xf32>
      %cst_24 = arith.constant dense<0.000000e+00> : vector<8xf32>
      %36 = vector.multi_reduction <add>, %35, %cst_24 [1] : vector<8x32xf32> to vector<8xf32>
      %37 = vector.shape_cast %36 : vector<8xf32> to vector<8x1xf32>
      %cst_25 = arith.constant 3.200000e+01 : f32
      %38 = vector.broadcast %cst_25 : f32 to vector<8x1xf32>
      %39 = arith.divf %37, %38 : vector<8x1xf32>
      %40 = vector.broadcast %30 : vector<8x1xf32> to vector<8x32xf32>
      %41 = arith.subf %26, %40 : vector<8x32xf32>
      %cst_26 = arith.constant 9.99999974E-6 : f32
      %42 = vector.broadcast %cst_26 : f32 to vector<8x1xf32>
      %43 = arith.addf %39, %42 : vector<8x1xf32>
      %44 = math.rsqrt %43 : vector<8x1xf32>
      %45 = vector.broadcast %44 : vector<8x1xf32> to vector<8x32xf32>
      %46 = arith.mulf %41, %45 : vector<8x32xf32>
      %c0_27 = arith.constant 0 : index
      %c0_28 = arith.constant 0 : index
      %47 = vector.load %arg7[%c0_27, %c0_28] : memref<1x32xf32, #tpu.memory_space<vmem>>, vector<1x32xf32>
      %48 = vector.broadcast %47 : vector<1x32xf32> to vector<8x32xf32>
      %49 = arith.mulf %46, %48 : vector<8x32xf32>
      %c0_29 = arith.constant 0 : index
      %c0_30 = arith.constant 0 : index
      %50 = vector.load %arg8[%c0_29, %c0_30] : memref<1x32xf32, #tpu.memory_space<vmem>>, vector<1x32xf32>
      %51 = vector.broadcast %50 : vector<1x32xf32> to vector<8x32xf32>
      %52 = arith.addf %49, %51 : vector<8x32xf32>
      %53 = arith.truncf %52 : vector<8x32xf32> to vector<8x32xbf16>
      %c0_31 = arith.constant 0 : index
      %c0_32 = arith.constant 0 : index
      %54 = vector.load %arg9[%c0_31, %c0_32] : memref<8x32xbf16, #tpu.memory_space<vmem>>, vector<8x32xbf16>
      tpu.vector_store %arg9[%c0_31, %c0_32], %53 {strides = array<i32>} : memref<8x32xbf16, #tpu.memory_space<vmem>>, vector<8x32xbf16>,
    } else {
    }
    return
  }
  func.func @transform_0(%arg0: i32, %arg1: i32) -> (i32, i32) {
    %c0_i32 = arith.constant 0 : i32
    %c0_i32_0 = arith.constant 0 : i32
    return %arg0, %c0_i32 : i32, i32
  }
  func.func @transform_1(%arg0: i32, %arg1: i32) -> (i32, i32) {
    %c0_i32 = arith.constant 0 : i32
    %c0_i32_0 = arith.constant 0 : i32
    return %c0_i32, %arg1 : i32, i32
  }
  func.func @transform_2(%arg0: i32, %arg1: i32) -> (i32, i32) {
    %c0_i32 = arith.constant 0 : i32
    %c0_i32_0 = arith.constant 0 : i32
    return %c0_i32, %arg1 : i32, i32
  }
  func.func @transform_3(%arg0: i32, %arg1: i32) -> (i32, i32) {
    %c0_i32 = arith.constant 0 : i32
    %c0_i32_0 = arith.constant 0 : i32
    return %arg1, %c0_i32 : i32, i32
  }
  func.func @transform_4(%arg0: i32, %arg1: i32) -> (i32, i32) {
    %c0_i32 = arith.constant 0 : i32
    %c0_i32_0 = arith.constant 0 : i32
    %c0_i32_1 = arith.constant 0 : i32
    return %c0_i32, %c0_i32_0 : i32, i32
  }
  func.func @transform_5(%arg0: i32, %arg1: i32) -> (i32, i32) {
    %c0_i32 = arith.constant 0 : i32
    %c0_i32_0 = arith.constant 0 : i32
    %c0_i32_1 = arith.constant 0 : i32
    return %c0_i32, %c0_i32_0 : i32, i32
  }
  func.func @transform_6(%arg0: i32, %arg1: i32) -> (i32, i32) {
    %c0_i32 = arith.constant 0 : i32
    %c0_i32_0 = arith.constant 0 : i32
    %c0_i32_1 = arith.constant 0 : i32
    return %c0_i32, %c0_i32_0 : i32, i32
  }
  func.func @transform_7(%arg0: i32, %arg1: i32) -> (i32, i32) {
    %c0_i32 = arith.constant 0 : i32
    %c0_i32_0 = arith.constant 0 : i32
    return %arg0, %c0_i32 : i32, i32
  }
}

module attributes {stable_mosaic.version = 11 : i64} {
  func.func @kernel(%arg0: i32, %arg1: i32, %arg2: memref<1x1x8xi32, #tpu.memory_space<vmem>>, %arg3: memref<1x8x32xbf16, #tpu.memory_space<vmem>>, %arg4: memref<1x8x32xbf16, #tpu.memory_space<vmem>>, %arg5: memref<32x32xbf16, #tpu.memory_space<vmem>>, %arg6: memref<1x32xf32, #tpu.memory_space<vmem>>, %arg7: memref<32x64xbf16, #tpu.memory_space<vmem>>, %arg8: memref<1x64xf32, #tpu.memory_space<vmem>>, %arg9: memref<1x8x32xbf16, #tpu.memory_space<vmem>>, %arg10: memref<8x32xbf16, #tpu.memory_space<vmem>>, %arg11: memref<4x8x1xf32, #tpu.memory_space<vmem>>, %arg12: memref<4x8x1xf32, #tpu.memory_space<vmem>>, %arg13: memref<8x32xf32, #tpu.memory_space<vmem>>) attributes {dimension_semantics = [#tpu.dimension_semantics<parallel>, #tpu.dimension_semantics<arbitrary>], iteration_bounds = array<i64: 2, 1>, scalar_prefetch = 0 : i64, scratch_operands = 4 : i64, tpu.core_type = #tpu.core_type<tc>, window_params = [{transform_indices = @transform_0, window_bounds = array<i64: 1, 1, 8>}, {transform_indices = @transform_1, window_bounds = array<i64: 1, 8, 32>}, {transform_indices = @transform_2, window_bounds = array<i64: 1, 8, 32>}, {pipeline_mode = #tpu.pipeline_mode<synchronous>, transform_indices = @transform_3, window_bounds = array<i64: 32, 32>}, {pipeline_mode = #tpu.pipeline_mode<synchronous>, transform_indices = @transform_4, window_bounds = array<i64: 1, 32>}, {pipeline_mode = #tpu.pipeline_mode<synchronous>, transform_indices = @transform_5, window_bounds = array<i64: 32, 64>}, {pipeline_mode = #tpu.pipeline_mode<synchronous>, transform_indices = @transform_6, window_bounds = array<i64: 1, 64>}, {transform_indices = @transform_7, window_bounds = array<i64: 1, 8, 32>}]} {
    %c0_i32 = arith.constant 0 : i32
    %0 = arith.cmpi eq, %arg1, %c0_i32 : i32
    %1 = arith.extui %0 : i1 to i32
    %c0_i32_0 = arith.constant 0 : i32
    %2 = arith.cmpi ne, %1, %c0_i32_0 : i32
    scf.if %2 {
      %c0_101 = arith.constant 0 : index
      %c0_102 = arith.constant 0 : index
      %c0_103 = arith.constant 0 : index
      %177 = vector.load %arg3[%c0_101, %c0_102, %c0_103] : memref<1x8x32xbf16, #tpu.memory_space<vmem>>, vector<1x8x32xbf16>
      %178 = vector.shape_cast %177 : vector<1x8x32xbf16> to vector<8x32xbf16>
      %c0_104 = arith.constant 0 : index
      %c0_105 = arith.constant 0 : index
      %179 = vector.load %arg5[%c0_104, %c0_105] : memref<32x32xbf16, #tpu.memory_space<vmem>>, vector<32x32xbf16>
      %cst_106 = arith.constant dense<0.000000e+00> : vector<8x32xf32>
      %180 = tpu.matmul %178, %179, %cst_106 {dimension_numbers = #tpu.dot_dimension_numbers<[1], [0], [0], [1], [0, 0, 1, 1], [], []>} : vector<8x32xbf16>, vector<32x32xbf16>, vector<8x32xf32> -> vector<8x32xf32>
      %c0_107 = arith.constant 0 : index
      %c0_108 = arith.constant 0 : index
      %181 = vector.load %arg6[%c0_107, %c0_108] : memref<1x32xf32, #tpu.memory_space<vmem>>, vector<1x32xf32>
      %182 = vector.broadcast %181 : vector<1x32xf32> to vector<8x32xf32>
      %183 = arith.addf %180, %182 : vector<8x32xf32>
      %184 = arith.truncf %183 : vector<8x32xf32> to vector<8x32xbf16>
      %c0_109 = arith.constant 0 : index
      %c0_110 = arith.constant 0 : index
      %185 = vector.load %arg10[%c0_109, %c0_110] : memref<8x32xbf16, #tpu.memory_space<vmem>>, vector<8x32xbf16>
      tpu.vector_store %arg10[%c0_109, %c0_110], %184 {strides = array<i32>} : memref<8x32xbf16, #tpu.memory_space<vmem>>, vector<8x32xbf16>,
      %cst_111 = arith.constant -1.000000e+30 : f32
      %186 = vector.broadcast %cst_111 : f32 to vector<4x8x1xf32>
      %c0_112 = arith.constant 0 : index
      %c0_113 = arith.constant 0 : index
      %c0_114 = arith.constant 0 : index
      %187 = vector.load %arg11[%c0_112, %c0_113, %c0_114] : memref<4x8x1xf32, #tpu.memory_space<vmem>>, vector<4x8x1xf32>
      tpu.vector_store %arg11[%c0_112, %c0_113, %c0_114], %186 {strides = array<i32>} : memref<4x8x1xf32, #tpu.memory_space<vmem>>, vector<4x8x1xf32>,
      %cst_115 = arith.constant 0.000000e+00 : f32
      %188 = vector.broadcast %cst_115 : f32 to vector<4x8x1xf32>
      %c0_116 = arith.constant 0 : index
      %c0_117 = arith.constant 0 : index
      %c0_118 = arith.constant 0 : index
      %189 = vector.load %arg12[%c0_116, %c0_117, %c0_118] : memref<4x8x1xf32, #tpu.memory_space<vmem>>, vector<4x8x1xf32>
      tpu.vector_store %arg12[%c0_116, %c0_117, %c0_118], %188 {strides = array<i32>} : memref<4x8x1xf32, #tpu.memory_space<vmem>>, vector<4x8x1xf32>,
      %cst_119 = arith.constant 0.000000e+00 : f32
      %190 = vector.broadcast %cst_119 : f32 to vector<8x32xf32>
      %c0_120 = arith.constant 0 : index
      %c0_121 = arith.constant 0 : index
      %191 = vector.load %arg13[%c0_120, %c0_121] : memref<8x32xf32, #tpu.memory_space<vmem>>, vector<8x32xf32>
      tpu.vector_store %arg13[%c0_120, %c0_121], %190 {strides = array<i32>} : memref<8x32xf32, #tpu.memory_space<vmem>>, vector<8x32xf32>,
    } else {
    }
    %c0 = arith.constant 0 : index
    %c0_1 = arith.constant 0 : index
    %c0_2 = arith.constant 0 : index
    %3 = vector.load %arg4[%c0, %c0_1, %c0_2] : memref<1x8x32xbf16, #tpu.memory_space<vmem>>, vector<1x8x32xbf16>
    %4 = vector.shape_cast %3 : vector<1x8x32xbf16> to vector<8x32xbf16>
    %c0_3 = arith.constant 0 : index
    %c0_4 = arith.constant 0 : index
    %5 = vector.load %arg7[%c0_3, %c0_4] : memref<32x64xbf16, #tpu.memory_space<vmem>>, vector<32x64xbf16>
    %cst = arith.constant dense<0.000000e+00> : vector<8x64xf32>
    %6 = tpu.matmul %4, %5, %cst {dimension_numbers = #tpu.dot_dimension_numbers<[1], [0], [0], [1], [0, 0, 1, 1], [], []>} : vector<8x32xbf16>, vector<32x64xbf16>, vector<8x64xf32> -> vector<8x64xf32>
    %c0_5 = arith.constant 0 : index
    %c0_6 = arith.constant 0 : index
    %7 = vector.load %arg8[%c0_5, %c0_6] : memref<1x64xf32, #tpu.memory_space<vmem>>, vector<1x64xf32>
    %8 = vector.broadcast %7 : vector<1x64xf32> to vector<8x64xf32>
    %9 = arith.addf %6, %8 : vector<8x64xf32>
    %10 = vector.extract_strided_slice %9 {offsets = [0, 0], sizes = [8, 32], strides = [1, 1]} : vector<8x64xf32> to vector<8x32xf32>
    %11 = arith.truncf %10 : vector<8x32xf32> to vector<8x32xbf16>
    %12 = vector.extract_strided_slice %9 {offsets = [0, 32], sizes = [8, 32], strides = [1, 1]} : vector<8x64xf32> to vector<8x32xf32>
    %13 = arith.truncf %12 : vector<8x32xf32> to vector<8x32xbf16>
    %c0_7 = arith.constant 0 : index
    %c0_8 = arith.constant 0 : index
    %c0_9 = arith.constant 0 : index
    %14 = vector.load %arg2[%c0_7, %c0_8, %c0_9] : memref<1x1x8xi32, #tpu.memory_space<vmem>>, vector<1x1x8xi32>
    %15 = vector.shape_cast %14 : vector<1x1x8xi32> to vector<1x8xi32>
    %c0_i32_10 = arith.constant 0 : i32
    %16 = vector.broadcast %c0_i32_10 : i32 to vector<1x8xi32>
    %17 = arith.cmpi ne, %15, %16 : vector<1x8xi32>
    %18 = vector.shape_cast %17 : vector<1x8xi1> to vector<1x8xi1>
    %19 = vector.broadcast %18 : vector<1x8xi1> to vector<8x8xi1>
    %20 = tpu.iota {dimensions = array<i32: 0>} : vector<8x8xi32>
    %21 = tpu.iota {dimensions = array<i32: 1>} : vector<8x8xi32>
    %c8_i32 = arith.constant 8 : i32
    %22 = arith.muli %arg1, %c8_i32 : i32
    %23 = vector.broadcast %22 : i32 to vector<8x8xi32>
    %24 = arith.addi %21, %23 : vector<8x8xi32>
    %25 = arith.cmpi sgt, %24, %20 : vector<8x8xi32>
    %26 = arith.ori %19, %25 : vector<8x8xi1>
    %cst_11 = arith.constant -1.000000e+09 : f32
    %cst_12 = arith.constant 0.000000e+00 : f32
    %27 = vector.broadcast %cst_11 : f32 to vector<8x8xf32>
    %28 = vector.broadcast %cst_12 : f32 to vector<8x8xf32>
    %29 = arith.select %26, %27, %28 : vector<8x8xi1>, vector<8x8xf32>
    %c0_13 = arith.constant 0 : index
    %c0_14 = arith.constant 0 : index
    %30 = vector.load %arg10[%c0_13, %c0_14] : memref<8x32xbf16, #tpu.memory_space<vmem>>, vector<8x8xbf16>
    %31 = vector.extract_strided_slice %11 {offsets = [0, 0], sizes = [8, 8], strides = [1, 1]} : vector<8x32xbf16> to vector<8x8xbf16>
    %cst_15 = arith.constant dense<0.000000e+00> : vector<8x8xf32>
    %32 = tpu.matmul %30, %31, %cst_15 {dimension_numbers = #tpu.dot_dimension_numbers<[1], [1], [0], [0], [0, 0, 1, 0], [], []>} : vector<8x8xbf16>, vector<8x8xbf16>, vector<8x8xf32> -> vector<8x8xf32>
    %cst_16 = arith.constant 0.353553385 : f32
    %33 = vector.broadcast %cst_16 : f32 to vector<8x8xf32>
    %34 = arith.mulf %32, %33 : vector<8x8xf32>
    %35 = arith.addf %34, %29 : vector<8x8xf32>
    %c0_17 = arith.constant 0 : index
    %c0_18 = arith.constant 0 : index
    %c0_19 = arith.constant 0 : index
    %36 = vector.load %arg11[%c0_17, %c0_18, %c0_19] : memref<4x8x1xf32, #tpu.memory_space<vmem>>, vector<1x8x1xf32>
    %37 = vector.shape_cast %36 : vector<1x8x1xf32> to vector<8x1xf32>
    %cst_20 = arith.constant dense<0xFF800000> : vector<8xf32>
    %38 = vector.multi_reduction <maximumf>, %35, %cst_20 [1] : vector<8x8xf32> to vector<8xf32>
    %39 = vector.shape_cast %38 : vector<8xf32> to vector<8x1xf32>
    %40 = arith.maximumf %37, %39 : vector<8x1xf32>
    %41 = arith.subf %37, %40 : vector<8x1xf32>
    %42 = math.exp %41 : vector<8x1xf32>
    %43 = vector.broadcast %40 : vector<8x1xf32> to vector<8x8xf32>
    %44 = arith.subf %35, %43 : vector<8x8xf32>
    %45 = math.exp %44 : vector<8x8xf32>
    %c0_21 = arith.constant 0 : index
    %c0_22 = arith.constant 0 : index
    %c0_23 = arith.constant 0 : index
    %46 = vector.load %arg12[%c0_21, %c0_22, %c0_23] : memref<4x8x1xf32, #tpu.memory_space<vmem>>, vector<1x8x1xf32>
    %47 = vector.shape_cast %46 : vector<1x8x1xf32> to vector<8x1xf32>
    %48 = arith.mulf %42, %47 : vector<8x1xf32>
    %cst_24 = arith.constant dense<0.000000e+00> : vector<8xf32>
    %49 = vector.multi_reduction <add>, %45, %cst_24 [1] : vector<8x8xf32> to vector<8xf32>
    %50 = vector.shape_cast %49 : vector<8xf32> to vector<8x1xf32>
    %51 = arith.addf %48, %50 : vector<8x1xf32>
    %c0_25 = arith.constant 0 : index
    %c0_26 = arith.constant 0 : index
    %c0_27 = arith.constant 0 : index
    %52 = vector.load %arg12[%c0_25, %c0_26, %c0_27] : memref<4x8x1xf32, #tpu.memory_space<vmem>>, vector<1x8x1xf32>
    %53 = vector.shape_cast %52 : vector<1x8x1xf32> to vector<8x1xf32>
    %54 = vector.shape_cast %51 : vector<8x1xf32> to vector<1x8x1xf32>
    tpu.vector_store %arg12[%c0_25, %c0_26, %c0_27], %54 {strides = array<i32>} : memref<4x8x1xf32, #tpu.memory_space<vmem>>, vector<1x8x1xf32>,
    %c0_28 = arith.constant 0 : index
    %c0_29 = arith.constant 0 : index
    %55 = vector.load %arg13[%c0_28, %c0_29] : memref<8x32xf32, #tpu.memory_space<vmem>>, vector<8x8xf32>
    %56 = vector.broadcast %42 : vector<8x1xf32> to vector<8x8xf32>
    %57 = arith.mulf %56, %55 : vector<8x8xf32>
    %58 = arith.truncf %45 : vector<8x8xf32> to vector<8x8xbf16>
    %59 = vector.extract_strided_slice %13 {offsets = [0, 0], sizes = [8, 8], strides = [1, 1]} : vector<8x32xbf16> to vector<8x8xbf16>
    %cst_30 = arith.constant dense<0.000000e+00> : vector<8x8xf32>
    %60 = tpu.matmul %58, %59, %cst_30 {dimension_numbers = #tpu.dot_dimension_numbers<[1], [0], [0], [1], [0, 0, 1, 1], [], []>} : vector<8x8xbf16>, vector<8x8xbf16>, vector<8x8xf32> -> vector<8x8xf32>
    %61 = arith.addf %57, %60 : vector<8x8xf32>
    %c0_31 = arith.constant 0 : index
    %c0_32 = arith.constant 0 : index
    %62 = vector.load %arg13[%c0_31, %c0_32] : memref<8x32xf32, #tpu.memory_space<vmem>>, vector<8x8xf32>
    tpu.vector_store %arg13[%c0_31, %c0_32], %61 {strides = array<i32>} : memref<8x32xf32, #tpu.memory_space<vmem>>, vector<8x8xf32>,
    %c0_33 = arith.constant 0 : index
    %c0_34 = arith.constant 0 : index
    %c0_35 = arith.constant 0 : index
    %63 = vector.load %arg11[%c0_33, %c0_34, %c0_35] : memref<4x8x1xf32, #tpu.memory_space<vmem>>, vector<1x8x1xf32>
    %64 = vector.shape_cast %63 : vector<1x8x1xf32> to vector<8x1xf32>
    %65 = vector.shape_cast %40 : vector<8x1xf32> to vector<1x8x1xf32>
    tpu.vector_store %arg11[%c0_33, %c0_34, %c0_35], %65 {strides = array<i32>} : memref<4x8x1xf32, #tpu.memory_space<vmem>>, vector<1x8x1xf32>,
    %c0_36 = arith.constant 0 : index
    %c8 = arith.constant 8 : index
    %66 = vector.load %arg10[%c0_36, %c8] : memref<8x32xbf16, #tpu.memory_space<vmem>>, vector<8x8xbf16>
    %67 = vector.extract_strided_slice %11 {offsets = [0, 8], sizes = [8, 8], strides = [1, 1]} : vector<8x32xbf16> to vector<8x8xbf16>
    %cst_37 = arith.constant dense<0.000000e+00> : vector<8x8xf32>
    %68 = tpu.matmul %66, %67, %cst_37 {dimension_numbers = #tpu.dot_dimension_numbers<[1], [1], [0], [0], [0, 0, 1, 0], [], []>} : vector<8x8xbf16>, vector<8x8xbf16>, vector<8x8xf32> -> vector<8x8xf32>
    %cst_38 = arith.constant 0.353553385 : f32
    %69 = vector.broadcast %cst_38 : f32 to vector<8x8xf32>
    %70 = arith.mulf %68, %69 : vector<8x8xf32>
    %71 = arith.addf %70, %29 : vector<8x8xf32>
    %c1 = arith.constant 1 : index
    %c0_39 = arith.constant 0 : index
    %c0_40 = arith.constant 0 : index
    %72 = vector.load %arg11[%c1, %c0_39, %c0_40] : memref<4x8x1xf32, #tpu.memory_space<vmem>>, vector<1x8x1xf32>
    %73 = vector.shape_cast %72 : vector<1x8x1xf32> to vector<8x1xf32>
    %cst_41 = arith.constant dense<0xFF800000> : vector<8xf32>
    %74 = vector.multi_reduction <maximumf>, %71, %cst_41 [1] : vector<8x8xf32> to vector<8xf32>
    %75 = vector.shape_cast %74 : vector<8xf32> to vector<8x1xf32>
    %76 = arith.maximumf %73, %75 : vector<8x1xf32>
    %77 = arith.subf %73, %76 : vector<8x1xf32>
    %78 = math.exp %77 : vector<8x1xf32>
    %79 = vector.broadcast %76 : vector<8x1xf32> to vector<8x8xf32>
    %80 = arith.subf %71, %79 : vector<8x8xf32>
    %81 = math.exp %80 : vector<8x8xf32>
    %c1_42 = arith.constant 1 : index
    %c0_43 = arith.constant 0 : index
    %c0_44 = arith.constant 0 : index
    %82 = vector.load %arg12[%c1_42, %c0_43, %c0_44] : memref<4x8x1xf32, #tpu.memory_space<vmem>>, vector<1x8x1xf32>
    %83 = vector.shape_cast %82 : vector<1x8x1xf32> to vector<8x1xf32>
    %84 = arith.mulf %78, %83 : vector<8x1xf32>
    %cst_45 = arith.constant dense<0.000000e+00> : vector<8xf32>
    %85 = vector.multi_reduction <add>, %81, %cst_45 [1] : vector<8x8xf32> to vector<8xf32>
    %86 = vector.shape_cast %85 : vector<8xf32> to vector<8x1xf32>
    %87 = arith.addf %84, %86 : vector<8x1xf32>
    %c1_46 = arith.constant 1 : index
    %c0_47 = arith.constant 0 : index
    %c0_48 = arith.constant 0 : index
    %88 = vector.load %arg12[%c1_46, %c0_47, %c0_48] : memref<4x8x1xf32, #tpu.memory_space<vmem>>, vector<1x8x1xf32>
    %89 = vector.shape_cast %88 : vector<1x8x1xf32> to vector<8x1xf32>
    %90 = vector.shape_cast %87 : vector<8x1xf32> to vector<1x8x1xf32>
    tpu.vector_store %arg12[%c1_46, %c0_47, %c0_48], %90 {strides = array<i32>} : memref<4x8x1xf32, #tpu.memory_space<vmem>>, vector<1x8x1xf32>,
    %c0_49 = arith.constant 0 : index
    %c8_50 = arith.constant 8 : index
    %91 = vector.load %arg13[%c0_49, %c8_50] : memref<8x32xf32, #tpu.memory_space<vmem>>, vector<8x8xf32>
    %92 = vector.broadcast %78 : vector<8x1xf32> to vector<8x8xf32>
    %93 = arith.mulf %92, %91 : vector<8x8xf32>
    %94 = arith.truncf %81 : vector<8x8xf32> to vector<8x8xbf16>
    %95 = vector.extract_strided_slice %13 {offsets = [0, 8], sizes = [8, 8], strides = [1, 1]} : vector<8x32xbf16> to vector<8x8xbf16>
    %cst_51 = arith.constant dense<0.000000e+00> : vector<8x8xf32>
    %96 = tpu.matmul %94, %95, %cst_51 {dimension_numbers = #tpu.dot_dimension_numbers<[1], [0], [0], [1], [0, 0, 1, 1], [], []>} : vector<8x8xbf16>, vector<8x8xbf16>, vector<8x8xf32> -> vector<8x8xf32>
    %97 = arith.addf %93, %96 : vector<8x8xf32>
    %c0_52 = arith.constant 0 : index
    %c8_53 = arith.constant 8 : index
    %98 = vector.load %arg13[%c0_52, %c8_53] : memref<8x32xf32, #tpu.memory_space<vmem>>, vector<8x8xf32>
    tpu.vector_store %arg13[%c0_52, %c8_53], %97 {strides = array<i32>} : memref<8x32xf32, #tpu.memory_space<vmem>>, vector<8x8xf32>,
    %c1_54 = arith.constant 1 : index
    %c0_55 = arith.constant 0 : index
    %c0_56 = arith.constant 0 : index
    %99 = vector.load %arg11[%c1_54, %c0_55, %c0_56] : memref<4x8x1xf32, #tpu.memory_space<vmem>>, vector<1x8x1xf32>
    %100 = vector.shape_cast %99 : vector<1x8x1xf32> to vector<8x1xf32>
    %101 = vector.shape_cast %76 : vector<8x1xf32> to vector<1x8x1xf32>
    tpu.vector_store %arg11[%c1_54, %c0_55, %c0_56], %101 {strides = array<i32>} : memref<4x8x1xf32, #tpu.memory_space<vmem>>, vector<1x8x1xf32>,
    %c0_57 = arith.constant 0 : index
    %c16 = arith.constant 16 : index
    %102 = vector.load %arg10[%c0_57, %c16] : memref<8x32xbf16, #tpu.memory_space<vmem>>, vector<8x8xbf16>
    %103 = vector.extract_strided_slice %11 {offsets = [0, 16], sizes = [8, 8], strides = [1, 1]} : vector<8x32xbf16> to vector<8x8xbf16>
    %cst_58 = arith.constant dense<0.000000e+00> : vector<8x8xf32>
    %104 = tpu.matmul %102, %103, %cst_58 {dimension_numbers = #tpu.dot_dimension_numbers<[1], [1], [0], [0], [0, 0, 1, 0], [], []>} : vector<8x8xbf16>, vector<8x8xbf16>, vector<8x8xf32> -> vector<8x8xf32>
    %cst_59 = arith.constant 0.353553385 : f32
    %105 = vector.broadcast %cst_59 : f32 to vector<8x8xf32>
    %106 = arith.mulf %104, %105 : vector<8x8xf32>
    %107 = arith.addf %106, %29 : vector<8x8xf32>
    %c2 = arith.constant 2 : index
    %c0_60 = arith.constant 0 : index
    %c0_61 = arith.constant 0 : index
    %108 = vector.load %arg11[%c2, %c0_60, %c0_61] : memref<4x8x1xf32, #tpu.memory_space<vmem>>, vector<1x8x1xf32>
    %109 = vector.shape_cast %108 : vector<1x8x1xf32> to vector<8x1xf32>
    %cst_62 = arith.constant dense<0xFF800000> : vector<8xf32>
    %110 = vector.multi_reduction <maximumf>, %107, %cst_62 [1] : vector<8x8xf32> to vector<8xf32>
    %111 = vector.shape_cast %110 : vector<8xf32> to vector<8x1xf32>
    %112 = arith.maximumf %109, %111 : vector<8x1xf32>
    %113 = arith.subf %109, %112 : vector<8x1xf32>
    %114 = math.exp %113 : vector<8x1xf32>
    %115 = vector.broadcast %112 : vector<8x1xf32> to vector<8x8xf32>
    %116 = arith.subf %107, %115 : vector<8x8xf32>
    %117 = math.exp %116 : vector<8x8xf32>
    %c2_63 = arith.constant 2 : index
    %c0_64 = arith.constant 0 : index
    %c0_65 = arith.constant 0 : index
    %118 = vector.load %arg12[%c2_63, %c0_64, %c0_65] : memref<4x8x1xf32, #tpu.memory_space<vmem>>, vector<1x8x1xf32>
    %119 = vector.shape_cast %118 : vector<1x8x1xf32> to vector<8x1xf32>
    %120 = arith.mulf %114, %119 : vector<8x1xf32>
    %cst_66 = arith.constant dense<0.000000e+00> : vector<8xf32>
    %121 = vector.multi_reduction <add>, %117, %cst_66 [1] : vector<8x8xf32> to vector<8xf32>
    %122 = vector.shape_cast %121 : vector<8xf32> to vector<8x1xf32>
    %123 = arith.addf %120, %122 : vector<8x1xf32>
    %c2_67 = arith.constant 2 : index
    %c0_68 = arith.constant 0 : index
    %c0_69 = arith.constant 0 : index
    %124 = vector.load %arg12[%c2_67, %c0_68, %c0_69] : memref<4x8x1xf32, #tpu.memory_space<vmem>>, vector<1x8x1xf32>
    %125 = vector.shape_cast %124 : vector<1x8x1xf32> to vector<8x1xf32>
    %126 = vector.shape_cast %123 : vector<8x1xf32> to vector<1x8x1xf32>
    tpu.vector_store %arg12[%c2_67, %c0_68, %c0_69], %126 {strides = array<i32>} : memref<4x8x1xf32, #tpu.memory_space<vmem>>, vector<1x8x1xf32>,
    %c0_70 = arith.constant 0 : index
    %c16_71 = arith.constant 16 : index
    %127 = vector.load %arg13[%c0_70, %c16_71] : memref<8x32xf32, #tpu.memory_space<vmem>>, vector<8x8xf32>
    %128 = vector.broadcast %114 : vector<8x1xf32> to vector<8x8xf32>
    %129 = arith.mulf %128, %127 : vector<8x8xf32>
    %130 = arith.truncf %117 : vector<8x8xf32> to vector<8x8xbf16>
    %131 = vector.extract_strided_slice %13 {offsets = [0, 16], sizes = [8, 8], strides = [1, 1]} : vector<8x32xbf16> to vector<8x8xbf16>
    %cst_72 = arith.constant dense<0.000000e+00> : vector<8x8xf32>
    %132 = tpu.matmul %130, %131, %cst_72 {dimension_numbers = #tpu.dot_dimension_numbers<[1], [0], [0], [1], [0, 0, 1, 1], [], []>} : vector<8x8xbf16>, vector<8x8xbf16>, vector<8x8xf32> -> vector<8x8xf32>
    %133 = arith.addf %129, %132 : vector<8x8xf32>
    %c0_73 = arith.constant 0 : index
    %c16_74 = arith.constant 16 : index
    %134 = vector.load %arg13[%c0_73, %c16_74] : memref<8x32xf32, #tpu.memory_space<vmem>>, vector<8x8xf32>
    tpu.vector_store %arg13[%c0_73, %c16_74], %133 {strides = array<i32>} : memref<8x32xf32, #tpu.memory_space<vmem>>, vector<8x8xf32>,
    %c2_75 = arith.constant 2 : index
    %c0_76 = arith.constant 0 : index
    %c0_77 = arith.constant 0 : index
    %135 = vector.load %arg11[%c2_75, %c0_76, %c0_77] : memref<4x8x1xf32, #tpu.memory_space<vmem>>, vector<1x8x1xf32>
    %136 = vector.shape_cast %135 : vector<1x8x1xf32> to vector<8x1xf32>
    %137 = vector.shape_cast %112 : vector<8x1xf32> to vector<1x8x1xf32>
    tpu.vector_store %arg11[%c2_75, %c0_76, %c0_77], %137 {strides = array<i32>} : memref<4x8x1xf32, #tpu.memory_space<vmem>>, vector<1x8x1xf32>,
    %c0_78 = arith.constant 0 : index
    %c24 = arith.constant 24 : index
    %138 = vector.load %arg10[%c0_78, %c24] : memref<8x32xbf16, #tpu.memory_space<vmem>>, vector<8x8xbf16>
    %139 = vector.extract_strided_slice %11 {offsets = [0, 24], sizes = [8, 8], strides = [1, 1]} : vector<8x32xbf16> to vector<8x8xbf16>
    %cst_79 = arith.constant dense<0.000000e+00> : vector<8x8xf32>
    %140 = tpu.matmul %138, %139, %cst_79 {dimension_numbers = #tpu.dot_dimension_numbers<[1], [1], [0], [0], [0, 0, 1, 0], [], []>} : vector<8x8xbf16>, vector<8x8xbf16>, vector<8x8xf32> -> vector<8x8xf32>
    %cst_80 = arith.constant 0.353553385 : f32
    %141 = vector.broadcast %cst_80 : f32 to vector<8x8xf32>
    %142 = arith.mulf %140, %141 : vector<8x8xf32>
    %143 = arith.addf %142, %29 : vector<8x8xf32>
    %c3 = arith.constant 3 : index
    %c0_81 = arith.constant 0 : index
    %c0_82 = arith.constant 0 : index
    %144 = vector.load %arg11[%c3, %c0_81, %c0_82] : memref<4x8x1xf32, #tpu.memory_space<vmem>>, vector<1x8x1xf32>
    %145 = vector.shape_cast %144 : vector<1x8x1xf32> to vector<8x1xf32>
    %cst_83 = arith.constant dense<0xFF800000> : vector<8xf32>
    %146 = vector.multi_reduction <maximumf>, %143, %cst_83 [1] : vector<8x8xf32> to vector<8xf32>
    %147 = vector.shape_cast %146 : vector<8xf32> to vector<8x1xf32>
    %148 = arith.maximumf %145, %147 : vector<8x1xf32>
    %149 = arith.subf %145, %148 : vector<8x1xf32>
    %150 = math.exp %149 : vector<8x1xf32>
    %151 = vector.broadcast %148 : vector<8x1xf32> to vector<8x8xf32>
    %152 = arith.subf %143, %151 : vector<8x8xf32>
    %153 = math.exp %152 : vector<8x8xf32>
    %c3_84 = arith.constant 3 : index
    %c0_85 = arith.constant 0 : index
    %c0_86 = arith.constant 0 : index
    %154 = vector.load %arg12[%c3_84, %c0_85, %c0_86] : memref<4x8x1xf32, #tpu.memory_space<vmem>>, vector<1x8x1xf32>
    %155 = vector.shape_cast %154 : vector<1x8x1xf32> to vector<8x1xf32>
    %156 = arith.mulf %150, %155 : vector<8x1xf32>
    %cst_87 = arith.constant dense<0.000000e+00> : vector<8xf32>
    %157 = vector.multi_reduction <add>, %153, %cst_87 [1] : vector<8x8xf32> to vector<8xf32>
    %158 = vector.shape_cast %157 : vector<8xf32> to vector<8x1xf32>
    %159 = arith.addf %156, %158 : vector<8x1xf32>
    %c3_88 = arith.constant 3 : index
    %c0_89 = arith.constant 0 : index
    %c0_90 = arith.constant 0 : index
    %160 = vector.load %arg12[%c3_88, %c0_89, %c0_90] : memref<4x8x1xf32, #tpu.memory_space<vmem>>, vector<1x8x1xf32>
    %161 = vector.shape_cast %160 : vector<1x8x1xf32> to vector<8x1xf32>
    %162 = vector.shape_cast %159 : vector<8x1xf32> to vector<1x8x1xf32>
    tpu.vector_store %arg12[%c3_88, %c0_89, %c0_90], %162 {strides = array<i32>} : memref<4x8x1xf32, #tpu.memory_space<vmem>>, vector<1x8x1xf32>,
    %c0_91 = arith.constant 0 : index
    %c24_92 = arith.constant 24 : index
    %163 = vector.load %arg13[%c0_91, %c24_92] : memref<8x32xf32, #tpu.memory_space<vmem>>, vector<8x8xf32>
    %164 = vector.broadcast %150 : vector<8x1xf32> to vector<8x8xf32>
    %165 = arith.mulf %164, %163 : vector<8x8xf32>
    %166 = arith.truncf %153 : vector<8x8xf32> to vector<8x8xbf16>
    %167 = vector.extract_strided_slice %13 {offsets = [0, 24], sizes = [8, 8], strides = [1, 1]} : vector<8x32xbf16> to vector<8x8xbf16>
    %cst_93 = arith.constant dense<0.000000e+00> : vector<8x8xf32>
    %168 = tpu.matmul %166, %167, %cst_93 {dimension_numbers = #tpu.dot_dimension_numbers<[1], [0], [0], [1], [0, 0, 1, 1], [], []>} : vector<8x8xbf16>, vector<8x8xbf16>, vector<8x8xf32> -> vector<8x8xf32>
    %169 = arith.addf %165, %168 : vector<8x8xf32>
    %c0_94 = arith.constant 0 : index
    %c24_95 = arith.constant 24 : index
    %170 = vector.load %arg13[%c0_94, %c24_95] : memref<8x32xf32, #tpu.memory_space<vmem>>, vector<8x8xf32>
    tpu.vector_store %arg13[%c0_94, %c24_95], %169 {strides = array<i32>} : memref<8x32xf32, #tpu.memory_space<vmem>>, vector<8x8xf32>,
    %c3_96 = arith.constant 3 : index
    %c0_97 = arith.constant 0 : index
    %c0_98 = arith.constant 0 : index
    %171 = vector.load %arg11[%c3_96, %c0_97, %c0_98] : memref<4x8x1xf32, #tpu.memory_space<vmem>>, vector<1x8x1xf32>
    %172 = vector.shape_cast %171 : vector<1x8x1xf32> to vector<8x1xf32>
    %173 = vector.shape_cast %148 : vector<8x1xf32> to vector<1x8x1xf32>
    tpu.vector_store %arg11[%c3_96, %c0_97, %c0_98], %173 {strides = array<i32>} : memref<4x8x1xf32, #tpu.memory_space<vmem>>, vector<1x8x1xf32>,
    %c0_i32_99 = arith.constant 0 : i32
    %174 = arith.cmpi eq, %arg1, %c0_i32_99 : i32
    %175 = arith.extui %174 : i1 to i32
    %c0_i32_100 = arith.constant 0 : i32
    %176 = arith.cmpi ne, %175, %c0_i32_100 : i32
    scf.if %176 {
      %c0_101 = arith.constant 0 : index
      %c0_102 = arith.constant 0 : index
      %177 = vector.load %arg13[%c0_101, %c0_102] : memref<8x32xf32, #tpu.memory_space<vmem>>, vector<8x8xf32>
      %c0_103 = arith.constant 0 : index
      %c0_104 = arith.constant 0 : index
      %c0_105 = arith.constant 0 : index
      %178 = vector.load %arg12[%c0_103, %c0_104, %c0_105] : memref<4x8x1xf32, #tpu.memory_space<vmem>>, vector<1x8x1xf32>
      %179 = vector.shape_cast %178 : vector<1x8x1xf32> to vector<8x1xf32>
      %180 = tpu.reciprocal %179 {approx = true} : vector<8x1xf32> -> vector<8x1xf32>
      %181 = vector.broadcast %180 : vector<8x1xf32> to vector<8x8xf32>
      %182 = arith.mulf %177, %181 : vector<8x8xf32>
      %c0_106 = arith.constant 0 : index
      %c0_107 = arith.constant 0 : index
      %183 = vector.load %arg13[%c0_106, %c0_107] : memref<8x32xf32, #tpu.memory_space<vmem>>, vector<8x8xf32>
      tpu.vector_store %arg13[%c0_106, %c0_107], %182 {strides = array<i32>} : memref<8x32xf32, #tpu.memory_space<vmem>>, vector<8x8xf32>,
      %c0_108 = arith.constant 0 : index
      %c8_109 = arith.constant 8 : index
      %184 = vector.load %arg13[%c0_108, %c8_109] : memref<8x32xf32, #tpu.memory_space<vmem>>, vector<8x8xf32>
      %c1_110 = arith.constant 1 : index
      %c0_111 = arith.constant 0 : index
      %c0_112 = arith.constant 0 : index
      %185 = vector.load %arg12[%c1_110, %c0_111, %c0_112] : memref<4x8x1xf32, #tpu.memory_space<vmem>>, vector<1x8x1xf32>
      %186 = vector.shape_cast %185 : vector<1x8x1xf32> to vector<8x1xf32>
      %187 = tpu.reciprocal %186 {approx = true} : vector<8x1xf32> -> vector<8x1xf32>
      %188 = vector.broadcast %187 : vector<8x1xf32> to vector<8x8xf32>
      %189 = arith.mulf %184, %188 : vector<8x8xf32>
      %c0_113 = arith.constant 0 : index
      %c8_114 = arith.constant 8 : index
      %190 = vector.load %arg13[%c0_113, %c8_114] : memref<8x32xf32, #tpu.memory_space<vmem>>, vector<8x8xf32>
      tpu.vector_store %arg13[%c0_113, %c8_114], %189 {strides = array<i32>} : memref<8x32xf32, #tpu.memory_space<vmem>>, vector<8x8xf32>,
      %c0_115 = arith.constant 0 : index
      %c16_116 = arith.constant 16 : index
      %191 = vector.load %arg13[%c0_115, %c16_116] : memref<8x32xf32, #tpu.memory_space<vmem>>, vector<8x8xf32>
      %c2_117 = arith.constant 2 : index
      %c0_118 = arith.constant 0 : index
      %c0_119 = arith.constant 0 : index
      %192 = vector.load %arg12[%c2_117, %c0_118, %c0_119] : memref<4x8x1xf32, #tpu.memory_space<vmem>>, vector<1x8x1xf32>
      %193 = vector.shape_cast %192 : vector<1x8x1xf32> to vector<8x1xf32>
      %194 = tpu.reciprocal %193 {approx = true} : vector<8x1xf32> -> vector<8x1xf32>
      %195 = vector.broadcast %194 : vector<8x1xf32> to vector<8x8xf32>
      %196 = arith.mulf %191, %195 : vector<8x8xf32>
      %c0_120 = arith.constant 0 : index
      %c16_121 = arith.constant 16 : index
      %197 = vector.load %arg13[%c0_120, %c16_121] : memref<8x32xf32, #tpu.memory_space<vmem>>, vector<8x8xf32>
      tpu.vector_store %arg13[%c0_120, %c16_121], %196 {strides = array<i32>} : memref<8x32xf32, #tpu.memory_space<vmem>>, vector<8x8xf32>,
      %c0_122 = arith.constant 0 : index
      %c24_123 = arith.constant 24 : index
      %198 = vector.load %arg13[%c0_122, %c24_123] : memref<8x32xf32, #tpu.memory_space<vmem>>, vector<8x8xf32>
      %c3_124 = arith.constant 3 : index
      %c0_125 = arith.constant 0 : index
      %c0_126 = arith.constant 0 : index
      %199 = vector.load %arg12[%c3_124, %c0_125, %c0_126] : memref<4x8x1xf32, #tpu.memory_space<vmem>>, vector<1x8x1xf32>
      %200 = vector.shape_cast %199 : vector<1x8x1xf32> to vector<8x1xf32>
      %201 = tpu.reciprocal %200 {approx = true} : vector<8x1xf32> -> vector<8x1xf32>
      %202 = vector.broadcast %201 : vector<8x1xf32> to vector<8x8xf32>
      %203 = arith.mulf %198, %202 : vector<8x8xf32>
      %c0_127 = arith.constant 0 : index
      %c24_128 = arith.constant 24 : index
      %204 = vector.load %arg13[%c0_127, %c24_128] : memref<8x32xf32, #tpu.memory_space<vmem>>, vector<8x8xf32>
      tpu.vector_store %arg13[%c0_127, %c24_128], %203 {strides = array<i32>} : memref<8x32xf32, #tpu.memory_space<vmem>>, vector<8x8xf32>,
      %c0_129 = arith.constant 0 : index
      %c0_130 = arith.constant 0 : index
      %205 = vector.load %arg13[%c0_129, %c0_130] : memref<8x32xf32, #tpu.memory_space<vmem>>, vector<8x32xf32>
      %206 = arith.truncf %205 : vector<8x32xf32> to vector<8x32xbf16>
      %c0_131 = arith.constant 0 : index
      %c0_132 = arith.constant 0 : index
      %c0_133 = arith.constant 0 : index
      %207 = vector.load %arg9[%c0_131, %c0_132, %c0_133] : memref<1x8x32xbf16, #tpu.memory_space<vmem>>, vector<1x8x32xbf16>
      %208 = vector.shape_cast %207 : vector<1x8x32xbf16> to vector<8x32xbf16>
      %209 = vector.shape_cast %206 : vector<8x32xbf16> to vector<1x8x32xbf16>
      tpu.vector_store %arg9[%c0_131, %c0_132, %c0_133], %209 {strides = array<i32>} : memref<1x8x32xbf16, #tpu.memory_space<vmem>>, vector<1x8x32xbf16>,
    } else {
    }
    return
  }
  func.func @transform_0(%arg0: i32, %arg1: i32) -> (i32, i32, i32) {
    %c0_i32 = arith.constant 0 : i32
    %c0_i32_0 = arith.constant 0 : i32
    return %arg0, %c0_i32, %arg1 : i32, i32, i32
  }
  func.func @transform_1(%arg0: i32, %arg1: i32) -> (i32, i32, i32) {
    %c0_i32 = arith.constant 0 : i32
    %c0_i32_0 = arith.constant 0 : i32
    %c0_i32_1 = arith.constant 0 : i32
    return %arg0, %c0_i32, %c0_i32_0 : i32, i32, i32
  }
  func.func @transform_2(%arg0: i32, %arg1: i32) -> (i32, i32, i32) {
    %c0_i32 = arith.constant 0 : i32
    %c0_i32_0 = arith.constant 0 : i32
    return %arg0, %arg1, %c0_i32 : i32, i32, i32
  }
  func.func @transform_3(%arg0: i32, %arg1: i32) -> (i32, i32) {
    %c0_i32 = arith.constant 0 : i32
    %c0_i32_0 = arith.constant 0 : i32
    %c0_i32_1 = arith.constant 0 : i32
    return %c0_i32, %c0_i32_0 : i32, i32
  }
  func.func @transform_4(%arg0: i32, %arg1: i32) -> (i32, i32) {
    %c0_i32 = arith.constant 0 : i32
    %c0_i32_0 = arith.constant 0 : i32
    %c0_i32_1 = arith.constant 0 : i32
    return %c0_i32, %c0_i32_0 : i32, i32
  }
  func.func @transform_5(%arg0: i32, %arg1: i32) -> (i32, i32) {
    %c0_i32 = arith.constant 0 : i32
    %c0_i32_0 = arith.constant 0 : i32
    %c0_i32_1 = arith.constant 0 : i32
    return %c0_i32, %c0_i32_0 : i32, i32
  }
  func.func @transform_6(%arg0: i32, %arg1: i32) -> (i32, i32) {
    %c0_i32 = arith.constant 0 : i32
    %c0_i32_0 = arith.constant 0 : i32
    %c0_i32_1 = arith.constant 0 : i32
    return %c0_i32, %c0_i32_0 : i32, i32
  }
  func.func @transform_7(%arg0: i32, %arg1: i32) -> (i32, i32, i32) {
    %c0_i32 = arith.constant 0 : i32
    %c0_i32_0 = arith.constant 0 : i32
    %c0_i32_1 = arith.constant 0 : i32
    return %arg0, %c0_i32, %c0_i32_0 : i32, i32, i32
  }
}

module attributes {stable_mosaic.version = 11 : i64} {
  func.func @kernel(%arg0: i32, %arg1: i32, %arg2: i32, %arg3: memref<8x32xbf16, #tpu.memory_space<vmem>>, %arg4: memref<64x32xbf16, #tpu.memory_space<vmem>>, %arg5: memref<1x64xf32, #tpu.memory_space<vmem>>, %arg6: memref<8x64xf32, #tpu.memory_space<vmem>>, %arg7: memref<8x64xf32, #tpu.memory_space<vmem>>) attributes {dimension_semantics = [#tpu.dimension_semantics<parallel>, #tpu.dimension_semantics<parallel>, #tpu.dimension_semantics<arbitrary>], iteration_bounds = array<i64: 2, 1, 1>, scalar_prefetch = 0 : i64, scratch_operands = 1 : i64, tpu.core_type = #tpu.core_type<tc>, window_params = [{transform_indices = @transform_0, window_bounds = array<i64: 8, 32>}, {transform_indices = @transform_1, window_bounds = array<i64: 64, 32>}, {transform_indices = @transform_2, window_bounds = array<i64: 1, 64>}, {transform_indices = @transform_3, window_bounds = array<i64: 8, 64>}]} {
    %c0_i32 = arith.constant 0 : i32
    %0 = arith.cmpi eq, %arg2, %c0_i32 : i32
    %1 = arith.extui %0 : i1 to i32
    %c0_i32_0 = arith.constant 0 : i32
    %2 = arith.cmpi ne, %1, %c0_i32_0 : i32
    scf.if %2 {
      %cst_10 = arith.constant 0.000000e+00 : f32
      %12 = vector.broadcast %cst_10 : f32 to vector<8x64xf32>
      %c0_11 = arith.constant 0 : index
      %c0_12 = arith.constant 0 : index
      %13 = vector.load %arg7[%c0_11, %c0_12] : memref<8x64xf32, #tpu.memory_space<vmem>>, vector<8x64xf32>
      tpu.vector_store %arg7[%c0_11, %c0_12], %12 {strides = array<i32>} : memref<8x64xf32, #tpu.memory_space<vmem>>, vector<8x64xf32>,
    } else {
    }
    %c0 = arith.constant 0 : index
    %c0_1 = arith.constant 0 : index
    %3 = vector.load %arg7[%c0, %c0_1] : memref<8x64xf32, #tpu.memory_space<vmem>>, vector<8x64xf32>
    %c0_2 = arith.constant 0 : index
    %c0_3 = arith.constant 0 : index
    %4 = vector.load %arg3[%c0_2, %c0_3] : memref<8x32xbf16, #tpu.memory_space<vmem>>, vector<8x32xbf16>
    %c0_4 = arith.constant 0 : index
    %c0_5 = arith.constant 0 : index
    %5 = vector.load %arg4[%c0_4, %c0_5] : memref<64x32xbf16, #tpu.memory_space<vmem>>, vector<64x32xbf16>
    %cst = arith.constant dense<0.000000e+00> : vector<8x64xf32>
    %6 = tpu.matmul %4, %5, %cst {dimension_numbers = #tpu.dot_dimension_numbers<[1], [1], [0], [0], [0, 0, 1, 0], [], []>} : vector<8x32xbf16>, vector<64x32xbf16>, vector<8x64xf32> -> vector<8x64xf32>
    %7 = arith.addf %3, %6 : vector<8x64xf32>
    %c0_6 = arith.constant 0 : index
    %c0_7 = arith.constant 0 : index
    %8 = vector.load %arg7[%c0_6, %c0_7] : memref<8x64xf32, #tpu.memory_space<vmem>>, vector<8x64xf32>
    tpu.vector_store %arg7[%c0_6, %c0_7], %7 {strides = array<i32>} : memref<8x64xf32, #tpu.memory_space<vmem>>, vector<8x64xf32>,
    %c0_i32_8 = arith.constant 0 : i32
    %9 = arith.cmpi eq, %arg2, %c0_i32_8 : i32
    %10 = arith.extui %9 : i1 to i32
    %c0_i32_9 = arith.constant 0 : i32
    %11 = arith.cmpi ne, %10, %c0_i32_9 : i32
    scf.if %11 {
      %c0_10 = arith.constant 0 : index
      %c0_11 = arith.constant 0 : index
      %12 = vector.load %arg7[%c0_10, %c0_11] : memref<8x64xf32, #tpu.memory_space<vmem>>, vector<8x64xf32>
      %c0_12 = arith.constant 0 : index
      %c0_13 = arith.constant 0 : index
      %13 = vector.load %arg5[%c0_12, %c0_13] : memref<1x64xf32, #tpu.memory_space<vmem>>, vector<1x64xf32>
      %14 = vector.broadcast %13 : vector<1x64xf32> to vector<8x64xf32>
      %15 = arith.addf %12, %14 : vector<8x64xf32>
      %c0_14 = arith.constant 0 : index
      %c0_15 = arith.constant 0 : index
      %16 = vector.load %arg6[%c0_14, %c0_15] : memref<8x64xf32, #tpu.memory_space<vmem>>, vector<8x64xf32>
      tpu.vector_store %arg6[%c0_14, %c0_15], %15 {strides = array<i32>} : memref<8x64xf32, #tpu.memory_space<vmem>>, vector<8x64xf32>,
    } else {
    }
    return
  }
  func.func @transform_0(%arg0: i32, %arg1: i32, %arg2: i32) -> (i32, i32) {
    %c0_i32 = arith.constant 0 : i32
    return %arg0, %arg2 : i32, i32
  }
  func.func @transform_1(%arg0: i32, %arg1: i32, %arg2: i32) -> (i32, i32) {
    %c0_i32 = arith.constant 0 : i32
    return %arg1, %arg2 : i32, i32
  }
  func.func @transform_2(%arg0: i32, %arg1: i32, %arg2: i32) -> (i32, i32) {
    %c0_i32 = arith.constant 0 : i32
    %c0_i32_0 = arith.constant 0 : i32
    return %c0_i32, %arg1 : i32, i32
  }
  func.func @transform_3(%arg0: i32, %arg1: i32, %arg2: i32) -> (i32, i32) {
    %c0_i32 = arith.constant 0 : i32
    return %arg0, %arg1 : i32, i32
  }
}

</mosaic_0001>

<llo_original>
// kernel: forward.19
$region0: #{forward.19}
  #allocation0 [shape = 'u32[]', space=smem, size = 0x4, offset = 0x4, fixed_abs, tag = 'smem constant byte address 0x4 - core index']
  #allocation1 [shape = 'u32[144,128]{1,0:T(1,128)}', space=vmem, size = 0x12000, scoped, tag = 'internal scratch']
  #allocation2 [shape = 'f32[8,32]{1,0:T(8,128)}', space=vmem, size = 0x1000, scoped, tag = 'scratch operand']
  %s0 = inlined_call_operand.vmem [shape: bf16[16,32], index: 0, kind: input, shape index: {}]
  %s1 = inlined_call_operand.vmem [shape: bf16[32,64], index: 1, kind: input, shape index: {}]
  %s2 = inlined_call_operand.vmem [shape: f32[1,64], index: 2, kind: input, shape index: {}]
  %s3 = inlined_call_operand.vmem [shape: bf16[64,32], index: 3, kind: input, shape index: {}]
  %s4 = inlined_call_operand.vmem [shape: f32[1,32], index: 4, kind: input, shape index: {}]
  %s5 = inlined_call_operand.vmem [shape: f32[1,32], index: 5, kind: input, shape index: {}]
  %s6 = inlined_call_operand.vmem [shape: f32[1,32], index: 6, kind: input, shape index: {}]
  %s7 = inlined_call_operand.vmem [shape: bf16[16,32], index: 7, kind: output, shape index: {}]
  %s8 = sld [smem:[#allocation0]]
  $region69: #{forward.19} parent=0
    _
  %s10 = ssub.s32 1, %s8
  %s11 = scalar_select 0, %s10, %s8
  loop: start=0, step=1, limit=4
  $region2: #{forward.19} parent=0 // loop_pre_header
    _
  $region3: #{forward.19} parent=0 // loop_header
    %s13 = sphi 0, %s17
    %p14 = scmp.ge.s32.totalorder %s13, 4
    %s20 = sphi 0, %s32
    %s21 = sphi 0, %s28
    %s22 = sphi 0, %s20
    %s23 = sphi 0, %s21
    %s24 = sphi 0, %s22
    %s25 = sphi 0, %s23
    %s35 = sphi 0, %s37
    %s38 = sphi 0, %s35
    %s39 = sphi 0, %s38
    %s55 = sphi 0, %s39
    %s61 = sphi 0, %s63
    %s64 = sphi 0, %s61
    %s65 = sphi 0, %s64
    %s81 = sphi 0, %s65
    %s87 = sphi 0, %s89
    %s90 = sphi 0, %s87
    %s91 = sphi 0, %s90
    %s107 = sphi 0, %s91
    %s113 = sphi 0, %s115
    %s116 = sphi 0, %s113
    %s117 = sphi 0, %s116
    %s133 = sphi 0, %s117
    %s137 = sphi 0, %s137
    %s139 = sphi 0, %s137
    %s140 = sphi 0, %s139
    %s154 = sphi 0, %s140
    %s158 = sphi 0, %s158
    %s160 = sphi 0, %s158
    %s161 = sphi 0, %s160
    %s175 = sphi 0, %s161
    %s179 = sphi 0, %s179
    %s181 = sphi 0, %s179
    %s182 = sphi 0, %s181
    %s196 = sphi 0, %s182
    %s202 = sphi 0, %s204
    %s205 = sphi 0, %s202
    %s206 = sphi 0, %s205
    %s222 = sphi 0, %s206
  $region4: #{forward.19} parent=0 // loop_header_branch
    %16 = sbr.rel (%p14) target = $region8
  $region5: #{forward.19} parent=0 // loop_body
    %s18 = ssub.s32 %s13, 1
    %s19 = ssub.s32 %s13, 2
    %s26 = sadd.s32 1, %s21
    %p27 = scmp.ge.s32.totalorder %s26, 1
    %s28 = scalar_select %p27, 0, %s26
    %s29 = sadd.s32 1, %s20
    %s30 = scalar_select %p27, %s29, %s20
    %p31 = scmp.ge.s32.totalorder %s30, 2
    %s32 = scalar_select %p31, 0, %s30
    %s33 = ssub.s32 %s20, %s32
    %p34 = scmp.eq.s32.totalorder %s33, 0
    %s36 = sadd.s32 %s35, 1
    %s37 = scalar_select %p34, %s35, %s36
    %p40 = pneg %p34
    %p41 = scmp.eq.s32.totalorder %s13, 1
    %p42 = por %p40, %p41
    %p43 = scmp.ne.s32.totalorder %s35, %s38
    %p44 = scmp.eq.s32.totalorder %s13, 0
    %p45 = por %p43, %p44
    %p46 = scmp.ne.s32.totalorder %s35, %s38
    %p47 = scmp.eq.s32.totalorder %s18, 1
    %p48 = por %p46, %p47
    %p49 = scmp.ne.s32.totalorder %s38, %s39
    %p50 = scmp.eq.s32.totalorder %s18, 0
    %p51 = por %p49, %p50
    %p52 = scmp.ne.s32.totalorder %s38, %s39
    %p53 = scmp.eq.s32.totalorder %s19, 1
    %p54 = por %p52, %p53
    %p56 = scmp.ne.s32.totalorder %s39, %s55
    %p57 = scmp.eq.s32.totalorder %s19, 0
    %p58 = por %p56, %p57
    %s59 = ssub.s32 %s21, %s28
    %p60 = scmp.eq.s32.totalorder %s59, 0
    %s62 = sadd.s32 %s61, 1
    %s63 = scalar_select %p60, %s61, %s62
    %p66 = pneg %p60
    %p67 = scmp.eq.s32.totalorder %s13, 1
    %p68 = por %p66, %p67
    %p69 = scmp.ne.s32.totalorder %s61, %s64
    %p70 = scmp.eq.s32.totalorder %s13, 0
    %p71 = por %p69, %p70
    %p72 = scmp.ne.s32.totalorder %s61, %s64
    %p73 = scmp.eq.s32.totalorder %s18, 1
    %p74 = por %p72, %p73
    %p75 = scmp.ne.s32.totalorder %s64, %s65
    %p76 = scmp.eq.s32.totalorder %s18, 0
    %p77 = por %p75, %p76
    %p78 = scmp.ne.s32.totalorder %s64, %s65
    %p79 = scmp.eq.s32.totalorder %s19, 1
    %p80 = por %p78, %p79
    %p82 = scmp.ne.s32.totalorder %s65, %s81
    %p83 = scmp.eq.s32.totalorder %s19, 0
    %p84 = por %p82, %p83
    %s85 = ssub.s32 %s21, %s28
    %p86 = scmp.eq.s32.totalorder %s85, 0
    %s88 = sadd.s32 %s87, 1
    %s89 = scalar_select %p86, %s87, %s88
    %p92 = pneg %p86
    %p93 = scmp.eq.s32.totalorder %s13, 1
    %p94 = por %p92, %p93
    %p95 = scmp.ne.s32.totalorder %s87, %s90
    %p96 = scmp.eq.s32.totalorder %s13, 0
    %p97 = por %p95, %p96
    %p98 = scmp.ne.s32.totalorder %s87, %s90
    %p99 = scmp.eq.s32.totalorder %s18, 1
    %p100 = por %p98, %p99
    %p101 = scmp.ne.s32.totalorder %s90, %s91
    %p102 = scmp.eq.s32.totalorder %s18, 0
    %p103 = por %p101, %p102
    %p104 = scmp.ne.s32.totalorder %s90, %s91
    %p105 = scmp.eq.s32.totalorder %s19, 1
    %p106 = por %p104, %p105
    %p108 = scmp.ne.s32.totalorder %s91, %s107
    %p109 = scmp.eq.s32.totalorder %s19, 0
    %p110 = por %p108, %p109
    %s111 = ssub.s32 %s21, %s28
    %p112 = scmp.eq.s32.totalorder %s111, 0
    %s114 = sadd.s32 %s113, 1
    %s115 = scalar_select %p112, %s113, %s114
    %p118 = pneg %p112
    %p119 = scmp.eq.s32.totalorder %s13, 1
    %p120 = por %p118, %p119
    %p121 = scmp.ne.s32.totalorder %s113, %s116
    %p122 = scmp.eq.s32.totalorder %s13, 0
    %p123 = por %p121, %p122
    %p124 = scmp.ne.s32.totalorder %s113, %s116
    %p125 = scmp.eq.s32.totalorder %s18, 1
    %p126 = por %p124, %p125
    %p127 = scmp.ne.s32.totalorder %s116, %s117
    %p128 = scmp.eq.s32.totalorder %s18, 0
    %p129 = por %p127, %p128
    %p130 = scmp.ne.s32.totalorder %s116, %s117
    %p131 = scmp.eq.s32.totalorder %s19, 1
    %p132 = por %p130, %p131
    %p134 = scmp.ne.s32.totalorder %s117, %s133
    %p135 = scmp.eq.s32.totalorder %s19, 0
    %p136 = por %p134, %p135
    %s138 = sadd.s32 %s137, 1
    %p141 = scmp.eq.s32.totalorder %s13, 1
    %p142 = scmp.ne.s32.totalorder %s137, %s139
    %p143 = scmp.eq.s32.totalorder %s13, 0
    %p144 = por %p142, %p143
    %p145 = scmp.ne.s32.totalorder %s137, %s139
    %p146 = scmp.eq.s32.totalorder %s18, 1
    %p147 = por %p145, %p146
    %p148 = scmp.ne.s32.totalorder %s139, %s140
    %p149 = scmp.eq.s32.totalorder %s18, 0
    %p150 = por %p148, %p149
    %p151 = scmp.ne.s32.totalorder %s139, %s140
    %p152 = scmp.eq.s32.totalorder %s19, 1
    %p153 = por %p151, %p152
    %p155 = scmp.ne.s32.totalorder %s140, %s154
    %p156 = scmp.eq.s32.totalorder %s19, 0
    %p157 = por %p155, %p156
    %s159 = sadd.s32 %s158, 1
    %p162 = scmp.eq.s32.totalorder %s13, 1
    %p163 = scmp.ne.s32.totalorder %s158, %s160
    %p164 = scmp.eq.s32.totalorder %s13, 0
    %p165 = por %p163, %p164
    %p166 = scmp.ne.s32.totalorder %s158, %s160
    %p167 = scmp.eq.s32.totalorder %s18, 1
    %p168 = por %p166, %p167
    %p169 = scmp.ne.s32.totalorder %s160, %s161
    %p170 = scmp.eq.s32.totalorder %s18, 0
    %p171 = por %p169, %p170
    %p172 = scmp.ne.s32.totalorder %s160, %s161
    %p173 = scmp.eq.s32.totalorder %s19, 1
    %p174 = por %p172, %p173
    %p176 = scmp.ne.s32.totalorder %s161, %s175
    %p177 = scmp.eq.s32.totalorder %s19, 0
    %p178 = por %p176, %p177
    %s180 = sadd.s32 %s179, 1
    %p183 = scmp.eq.s32.totalorder %s13, 1
    %p184 = scmp.ne.s32.totalorder %s179, %s181
    %p185 = scmp.eq.s32.totalorder %s13, 0
    %p186 = por %p184, %p185
    %p187 = scmp.ne.s32.totalorder %s179, %s181
    %p188 = scmp.eq.s32.totalorder %s18, 1
    %p189 = por %p187, %p188
    %p190 = scmp.ne.s32.totalorder %s181, %s182
    %p191 = scmp.eq.s32.totalorder %s18, 0
    %p192 = por %p190, %p191
    %p193 = scmp.ne.s32.totalorder %s181, %s182
    %p194 = scmp.eq.s32.totalorder %s19, 1
    %p195 = por %p193, %p194
    %p197 = scmp.ne.s32.totalorder %s182, %s196
    %p198 = scmp.eq.s32.totalorder %s19, 0
    %p199 = por %p197, %p198
    %s200 = ssub.s32 %s20, %s32
    %p201 = scmp.eq.s32.totalorder %s200, 0
    %s203 = sadd.s32 %s202, 1
    %s204 = scalar_select %p201, %s202, %s203
    %p207 = pneg %p201
    %p208 = scmp.eq.s32.totalorder %s13, 1
    %p209 = por %p207, %p208
    %p210 = scmp.ne.s32.totalorder %s202, %s205
    %p211 = scmp.eq.s32.totalorder %s13, 0
    %p212 = por %p210, %p211
    %p213 = scmp.ne.s32.totalorder %s202, %s205
    %p214 = scmp.eq.s32.totalorder %s18, 1
    %p215 = por %p213, %p214
    %p216 = scmp.ne.s32.totalorder %s205, %s206
    %p217 = scmp.eq.s32.totalorder %s18, 0
    %p218 = por %p216, %p217
    %p219 = scmp.ne.s32.totalorder %s205, %s206
    %p220 = scmp.eq.s32.totalorder %s19, 1
    %p221 = por %p219, %p220
    %p223 = scmp.ne.s32.totalorder %s206, %s222
    %p224 = scmp.eq.s32.totalorder %s19, 0
    %p225 = por %p223, %p224
    %p226 = scmp.le.s32.totalorder 1, %s13
    %p227 = scmp.lt.s32.totalorder %s13, 3
    %p228 = pnand %p226, %p227
    %p229 = pneg %p228
    // Predicated region
    $region9: #{forward.19} parent=5 // pred_check
      _
    $region10: #{forward.19} parent=5 // pred_check_branch
      %231 = sbr.rel (%p228) target = $region12
    $region11: #{forward.19} parent=5 // pred_region
      %s232 = ssub.s32 %s13, 1
      // Predicated region
      $region13: #{forward.19} parent=11 // pred_check
        %p233 = pneg %p77
      $region14: #{forward.19} parent=11 // pred_check_branch
        %235 = sbr.rel (%p233) target = $region16
      $region15: #{forward.19} parent=11 // pred_region
        %p236 = scmp.lt.s32.totalorder %s23, 0
        %s237 = scalar_select %p236, %s23, 0
        %s238 = smul.addr %s237, 4
        %s239 = scalar_lea.vmem %s1, %s238
      $region16: #{forward.19} parent=11 // pred_fallthru
        _
      // Predicated region
      $region17: #{forward.19} parent=11 // pred_check
        %p240 = pneg %p103
      $region18: #{forward.19} parent=11 // pred_check_branch
        %242 = sbr.rel (%p240) target = $region20
      $region19: #{forward.19} parent=11 // pred_region
        %p243 = scmp.lt.s32.totalorder %s23, 0
        %s244 = scalar_select %p243, %s23, 0
        %s245 = scalar_lea.vmem %s2, %s244
      $region20: #{forward.19} parent=11 // pred_fallthru
        _
      // Predicated region
      $region21: #{forward.19} parent=11 // pred_check
        %p246 = pneg %p129
      $region22: #{forward.19} parent=11 // pred_check_branch
        %248 = sbr.rel (%p246) target = $region24
      $region23: #{forward.19} parent=11 // pred_region
        %s249 = smul.u32 8, %s23
        %p250 = scmp.lt.s32.totalorder %s249, 7
        %s251 = scalar_select %p250, %s249, 7
        %s252 = smul.addr %s251, 4
        %s253 = scalar_lea.vmem %s3, %s252
        %s254 = smul.u32 8, %s23
      $region24: #{forward.19} parent=11 // pred_fallthru
        _
      // Predicated region
      $region25: #{forward.19} parent=11 // pred_check
        %p255 = pneg %p150
      $region26: #{forward.19} parent=11 // pred_check_branch
        %257 = sbr.rel (%p255) target = $region28
      $region27: #{forward.19} parent=11 // pred_region
        _
      $region28: #{forward.19} parent=11 // pred_fallthru
        _
      // Predicated region
      $region29: #{forward.19} parent=11 // pred_check
        %p258 = pneg %p171
      $region30: #{forward.19} parent=11 // pred_check_branch
        %260 = sbr.rel (%p258) target = $region32
      $region31: #{forward.19} parent=11 // pred_region
        _
      $region32: #{forward.19} parent=11 // pred_fallthru
        _
      // Predicated region
      $region33: #{forward.19} parent=11 // pred_check
        %p261 = pneg %p192
      $region34: #{forward.19} parent=11 // pred_check_branch
        %263 = sbr.rel (%p261) target = $region36
      $region35: #{forward.19} parent=11 // pred_region
        _
      $region36: #{forward.19} parent=11 // pred_fallthru
        _
    $region12: #{forward.19} parent=5 // pred_fallthru
      _
    %p264 = scmp.lt.s32.totalorder %s13, 2
    // Predicated region
    $region37: #{forward.19} parent=5 // pred_check
      %p265 = pneg %p264
    $region38: #{forward.19} parent=5 // pred_check_branch
      %267 = sbr.rel (%p265) target = $region40
    $region39: #{forward.19} parent=5 // pred_region
      // Predicated region
      $region41: #{forward.19} parent=39 // pred_check
        %p268 = pneg %p45
      $region42: #{forward.19} parent=39 // pred_check_branch
        %270 = sbr.rel (%p268) target = $region44
      $region43: #{forward.19} parent=39 // pred_region
        %p271 = scmp.lt.s32.totalorder %s20, 1
        %s272 = scalar_select %p271, %s20, 1
        %s273 = smul.addr %s272, 4
        %s274 = scalar_lea.vmem %s0, %s273
      $region44: #{forward.19} parent=39 // pred_fallthru
        _
    $region40: #{forward.19} parent=5 // pred_fallthru
      _
    %p275 = scmp.le.s32.totalorder 1, %s13
    %p276 = scmp.lt.s32.totalorder %s13, 3
    %p277 = pnand %p275, %p276
    %p278 = pneg %p277
    // Predicated region
    $region45: #{forward.19} parent=5 // pred_check
      _
    $region46: #{forward.19} parent=5 // pred_check_branch
      %280 = sbr.rel (%p277) target = $region48
    $region47: #{forward.19} parent=5 // pred_region
      %s281 = ssub.s32 %s13, 1
      %p282 = scmp.lt.s32.totalorder %s22, 1
      %s283 = scalar_select %p282, %s22, 1
      %s284 = smul.addr %s283, 4
      %s285 = scalar_lea.vmem %s0, %s284
      %p286 = pneg %p51
      %p287 = pneg %p48
      %p288 = scmp.lt.s32.totalorder %s23, 0
      %s289 = scalar_select %p288, %s23, 0
      %s290 = smul.addr %s289, 4
      %s291 = scalar_lea.vmem %s1, %s290
      %p292 = pneg %p77
      %p293 = pneg %p74
      %p294 = scmp.lt.s32.totalorder %s23, 0
      %s295 = scalar_select %p294, %s23, 0
      %s296 = scalar_lea.vmem %s2, %s295
      %p297 = pneg %p103
      %p298 = pneg %p100
      %s299 = smul.u32 8, %s23
      %p300 = scmp.lt.s32.totalorder %s299, 7
      %s301 = scalar_select %p300, %s299, 7
      %s302 = smul.addr %s301, 4
      %s303 = scalar_lea.vmem %s3, %s302
      %p304 = pneg %p129
      %p305 = pneg %p126
      %p306 = pneg %p150
      %p307 = pneg %p147
      %p308 = pneg %p171
      %p309 = pneg %p168
      %p310 = pneg %p192
      %p311 = pneg %p189
      %p312 = pneg %p218
      %p313 = pneg %p215
      %p314 = scmp.lt.s32.totalorder %s22, 1
      %s315 = scalar_select %p314, %s22, 1
      %s316 = smul.addr %s315, 4
      %s317 = scalar_lea.vmem %s7, %s316
      %p318 = scmp.lt.s32.totalorder %s22, 1
      %s319 = scalar_select %p318, %s22, 1
      %s320 = smul.addr %s319, 4
      %s321 = scalar_lea.vmem %s0, %s320
      %p322 = scmp.lt.s32.totalorder %s23, 0
      %s323 = scalar_select %p322, %s23, 0
      %s324 = smul.addr %s323, 4
      %s325 = scalar_lea.vmem %s1, %s324
      %p326 = scmp.lt.s32.totalorder %s23, 0
      %s327 = scalar_select %p326, %s23, 0
      %s328 = scalar_lea.vmem %s2, %s327
      %s329 = smul.u32 8, %s23
      %p330 = scmp.lt.s32.totalorder %s329, 7
      %s331 = scalar_select %p330, %s329, 7
      %s332 = smul.addr %s331, 4
      %s333 = scalar_lea.vmem %s3, %s332
      %s334 = smul.u32 8, %s23
      %p335 = scmp.lt.s32.totalorder %s22, 1
      %s336 = scalar_select %p335, %s22, 1
      %s337 = smul.addr %s336, 4
      %s338 = scalar_lea.vmem %s7, %s337
      %p340 = scmp.eq.s32.totalorder %s23, 0
      // Predicated region
      $region49: #{forward.19} parent=47 // pred_check
        %p341 = pneg %p340
      $region50: #{forward.19} parent=47 // pred_check_branch
        %343 = sbr.rel (%p341) target = $region52
      $region51: #{forward.19} parent=47 // pred_region
        %vm344 = vcmask 261120
        %345 = vst.msk [vmem:[#allocation2] sm:$0xff] %vm344, 0.0
      $region52: #{forward.19} parent=47 // pred_fallthru
        _
      %v346 = vld [vmem:[%s321] sm:$0xf]
      %v347 = vld [vmem:[%s325] sm:$0xf]
      %v348 = vld [vmem:[%s325 + $0x4] sm:$0xf]
      %v349 = vld [vmem:[%s325 + $0x8] sm:$0xf]
      %v350 = vld [vmem:[%s325 + $0xc] sm:$0xf]
      %v351 = vld [vmem:[%s328] sm:$0x1]
      %v353 = vlaneseq
      %v354 = vshrl.u32 %v353, 7
      %v355 = vsub.s32 0, %v354
      %v356 = vrot.slane %v351, %v355
      %v362 = vunpack.c.l.b16 %v347
      %v363 = vunpack.c.l.b16 %v348
      %v364 = vunpack.c.l.b16 %v349
      %v365 = vunpack.c.l.b16 %v350
      %v366 = vpack.c.b16 %v363, %v362
      %v367 = vpack.c.b16 %v365, %v364
      %vm370 = vcmask 261120
      %v372 = vsel %vm370, %v346, 0
      %374 = vmatprep.subr.bf16.mxu0 0
      %375 = vmatpush1.bf16.msra.mxu0 %v366
      %376 = vmatprep.subr.bf16.mxu0 0
      %377 = vmatpush1.bf16.msra.mxu0 %v367
      %378 = vmatprep.subr.bf16.mxu0 0
      %379 = vmatpush1.bf16.msra.mxu0 0
      %380 = vmatprep.subr.bf16.mxu0 0
      %381 = vmatpush1.bf16.msra.mxu0 0
      %382 = vmatprep.subr.bf16.mxu0 0
      %383 = vmatpush1.bf16.msra.mxu0 0
      %384 = vmatprep.subr.bf16.mxu0 0
      %385 = vmatpush1.bf16.msra.mxu0 0
      %386 = vmatprep.subr.bf16.mxu0 0
      %387 = vmatpush1.bf16.msra.mxu0 0
      %388 = vmatprep.subr.bf16.mxu0 0
      %389 = vmatpush1.bf16.msra.mxu0 0
      %390 = vmatprep.subr.bf16.mxu0 0
      %391 = vmatpush1.bf16.msra.mxu0 0
      %392 = vmatprep.subr.bf16.mxu0 0
      %393 = vmatpush1.bf16.msra.mxu0 0
      %394 = vmatprep.subr.bf16.mxu0 0
      %395 = vmatpush1.bf16.msra.mxu0 0
      %396 = vmatprep.subr.bf16.mxu0 0
      %397 = vmatpush1.bf16.msra.mxu0 0
      %398 = vmatprep.subr.bf16.mxu0 0
      %399 = vmatpush1.bf16.msra.mxu0 0
      %400 = vmatprep.subr.bf16.mxu0 0
      %401 = vmatpush1.bf16.msra.mxu0 0
      %402 = vmatprep.subr.bf16.mxu0 0
      %403 = vmatpush1.bf16.msra.mxu0 0
      %404 = vmatprep.subr.bf16.mxu0 0
      %405 = vmatpush1.bf16.msra.mxu0 0
      %406 = vmatprep.mubr.bf16.mxu0 0
      %407 = vmatmul.mubr.bf16.gmra.mrb[0].mxu0 %v372
      %v408 = vpop.f32.mrb[0].mxu0
      %v409 = vadd.f32 %v356, %v408
      %v410 = vpop.f32.mrb[0].mxu0
      %v411 = vpop.f32.mrb[0].mxu0
      %v412 = vpop.f32.mrb[0].mxu0
      %413 = vdwg.mxu0
      %v414 = vmax.f32 %v409, 0.0
      %v415 = vld [vmem:[#allocation2] sm:$0xff]
      %v416 = vpack.c.bf16 %v414, %v414
      %v417 = vld [vmem:[%s333] sm:$0xf]
      %v418 = vld [vmem:[%s333 + $0x4] sm:$0xf]
      %v419 = vld [vmem:[%s333 + $0x8] sm:$0xf]
      %v420 = vld [vmem:[%s333 + $0xc] sm:$0xf]
      %v421 = vld [vmem:[%s333 + $0x10] sm:$0xf]
      %v422 = vld [vmem:[%s333 + $0x14] sm:$0xf]
      %v423 = vld [vmem:[%s333 + $0x18] sm:$0xf]
      %v424 = vld [vmem:[%s333 + $0x1c] sm:$0xf]
      %v433 = vunpack.c.l.b16 %v417
      %v434 = vunpack.c.l.b16 %v418
      %v435 = vunpack.c.l.b16 %v419
      %v436 = vunpack.c.l.b16 %v420
      %v437 = vunpack.c.l.b16 %v421
      %v438 = vunpack.c.l.b16 %v422
      %v439 = vunpack.c.l.b16 %v423
      %v440 = vunpack.c.l.b16 %v424
      %v441 = vpack.c.b16 %v434, %v433
      %v442 = vpack.c.b16 %v436, %v435
      %v443 = vpack.c.b16 %v438, %v437
      %v444 = vpack.c.b16 %v440, %v439
      %vm449 = vcmask 523264
      %v451 = vsel %vm449, %v416, 0
      %453 = vmatprep.subr.bf16.mxu0 0
      %454 = vmatpush1.bf16.msra.mxu0 %v441
      %455 = vmatprep.subr.bf16.mxu0 0
      %456 = vmatpush1.bf16.msra.mxu0 %v442
      %457 = vmatprep.subr.bf16.mxu0 0
      %458 = vmatpush1.bf16.msra.mxu0 %v443
      %459 = vmatprep.subr.bf16.mxu0 0
      %460 = vmatpush1.bf16.msra.mxu0 %v444
      %461 = vmatprep.subr.bf16.mxu0 0
      %462 = vmatpush1.bf16.msra.mxu0 0
      %463 = vmatprep.subr.bf16.mxu0 0
      %464 = vmatpush1.bf16.msra.mxu0 0
      %465 = vmatprep.subr.bf16.mxu0 0
      %466 = vmatpush1.bf16.msra.mxu0 0
      %467 = vmatprep.subr.bf16.mxu0 0
      %468 = vmatpush1.bf16.msra.mxu0 0
      %469 = vmatprep.subr.bf16.mxu0 0
      %470 = vmatpush1.bf16.msra.mxu0 0
      %471 = vmatprep.subr.bf16.mxu0 0
      %472 = vmatpush1.bf16.msra.mxu0 0
      %473 = vmatprep.subr.bf16.mxu0 0
      %474 = vmatpush1.bf16.msra.mxu0 0
      %475 = vmatprep.subr.bf16.mxu0 0
      %476 = vmatpush1.bf16.msra.mxu0 0
      %477 = vmatprep.subr.bf16.mxu0 0
      %478 = vmatpush1.bf16.msra.mxu0 0
      %479 = vmatprep.subr.bf16.mxu0 0
      %480 = vmatpush1.bf16.msra.mxu0 0
      %481 = vmatprep.subr.bf16.mxu0 0
      %482 = vmatpush1.bf16.msra.mxu0 0
      %483 = vmatprep.subr.bf16.mxu0 0
      %484 = vmatpush1.bf16.msra.mxu0 0
      %485 = vmatprep.mubr.bf16.mxu0 0
      %486 = vmatmul.mubr.bf16.gmra.mrb[0].mxu0 %v451
      %v487 = vpop.f32.mrb[0].mxu0
      %v488 = vadd.f32 0.0, %v487
      %v489 = vpop.f32.mrb[0].mxu0
      %v490 = vpop.f32.mrb[0].mxu0
      %v491 = vpop.f32.mrb[0].mxu0
      %492 = vdwg.mxu0
      %v493 = vadd.f32 %v415, %v488
      %494 = vst.msk [vmem:[#allocation2] sm:$0xff] %vm370, %v493
      // Predicated region
      $region53: #{forward.19} parent=47 // pred_check
        %p495 = pneg %p340
      $region54: #{forward.19} parent=47 // pred_check_branch
        %497 = sbr.rel (%p495) target = $region56
      $region55: #{forward.19} parent=47 // pred_region
        %v498 = vld [vmem:[%s321] sm:$0xf]
        %v499 = vunpack.c.l.bf16 %v498
        %v500 = vld [vmem:[#allocation2] sm:$0xff]
        %v501 = vadd.f32 %v499, %v500
        %v502 = vld [vmem:[%s4] sm:$0x1]
        %v504 = vlaneseq
        %v505 = vshrl.u32 %v504, 7
        %v506 = vsub.s32 0, %v505
        %v507 = vrot.slane %v502, %v506
        %v509 = vadd.f32 %v501, %v507
        %v510 = vsel %vm370, %v509, 0.0
        %511 = vadd.xlane.f32.xlu0 %v510
        %v512 = vpop.xlane.xlu0 %511
        %v513 = vrcp.pop 32.0
        %v514 = vmul.f32 %v512, %v513
        %v515 = vsub.f32 %v509, %v514
        %v516 = vmul.f32 %v515, %v515
        %v517 = vsel %vm370, %v516, 0.0
        %518 = vadd.xlane.f32.xlu0 %v517
        %v519 = vpop.xlane.xlu0 %518
        %v520 = vmul.f32 %v519, %v513
        %v521 = vadd.f32 %v520, 1e-05
        %v522 = vrsqrt.pop %v521
        %v523 = vmul.f32 %v515, %v522
        %v524 = vld [vmem:[%s5] sm:$0x1]
        %v526 = vlaneseq
        %v527 = vshrl.u32 %v526, 7
        %v528 = vsub.s32 0, %v527
        %v529 = vrot.slane %v524, %v528
        %v531 = vmul.f32 %v523, %v529
        %v532 = vld [vmem:[%s6] sm:$0x1]
        %v534 = vlaneseq
        %v535 = vshrl.u32 %v534, 7
        %v536 = vsub.s32 0, %v535
        %v537 = vrot.slane %v532, %v536
        %v539 = vadd.f32 %v531, %v537
        %v540 = vpack.c.bf16 %v539, %v539
        %vm541 = vcmask 257024
        %542 = vst.msk [vmem:[%s338] sm:$0xf] %vm541, %v540
      $region56: #{forward.19} parent=47 // pred_fallthru
        _
      %p543 = scmp.lt.s32.totalorder %s22, 1
      %s544 = scalar_select %p543, %s22, 1
      %s545 = smul.addr %s544, 4
      %s546 = scalar_lea.vmem %s7, %s545
      // Predicated region
      $region57: #{forward.19} parent=47 // pred_check
        %p547 = pneg %p215
      $region58: #{forward.19} parent=47 // pred_check_branch
        %549 = sbr.rel (%p547) target = $region60
      $region59: #{forward.19} parent=47 // pred_region
        _
      $region60: #{forward.19} parent=47 // pred_fallthru
        _
    $region48: #{forward.19} parent=5 // pred_fallthru
      _
    %p550 = scmp.le.s32.totalorder 2, %s13
    // Predicated region
    $region61: #{forward.19} parent=5 // pred_check
      %p551 = pneg %p550
    $region62: #{forward.19} parent=5 // pred_check_branch
      %553 = sbr.rel (%p551) target = $region64
    $region63: #{forward.19} parent=5 // pred_region
      %s554 = ssub.s32 %s13, 2
      // Predicated region
      $region65: #{forward.19} parent=63 // pred_check
        %p555 = pneg %p221
      $region66: #{forward.19} parent=63 // pred_check_branch
        %557 = sbr.rel (%p555) target = $region68
      $region67: #{forward.19} parent=63 // pred_region
        %p558 = scmp.lt.s32.totalorder %s24, 1
        %s559 = scalar_select %p558, %s24, 1
        %s560 = smul.addr %s559, 4
        %s561 = scalar_lea.vmem %s7, %s560
      $region68: #{forward.19} parent=63 // pred_fallthru
        _
    $region64: #{forward.19} parent=5 // pred_fallthru
      _
  $region6: #{forward.19} parent=0 // loop_footer
    %s17 = sadd.s32 1, %s13
  $region7: #{forward.19} parent=0 // loop_footer_branch
    %12 = sbr.rel target = $region3
  $region8: #{forward.19} parent=0 // loop_exit
    _

// kernel: forward.18
$region0: #{forward.18}
  #allocation0 [shape = 'u32[]', space=smem, size = 0x4, offset = 0x4, fixed_abs, tag = 'smem constant byte address 0x4 - core index']
  #allocation1 [shape = 'u32[144,128]{1,0:T(1,128)}', space=vmem, size = 0x12000, scoped, tag = 'internal scratch']
  %s0 = inlined_call_operand.vmem [shape: bf16[16,32], index: 0, kind: input, shape index: {}]
  %s1 = inlined_call_operand.vmem [shape: bf16[16,32], index: 1, kind: input, shape index: {}]
  %s2 = inlined_call_operand.vmem [shape: bf16[32,32], index: 2, kind: input, shape index: {}]
  %s3 = inlined_call_operand.vmem [shape: f32[1,32], index: 3, kind: input, shape index: {}]
  %s4 = inlined_call_operand.vmem [shape: f32[1,32], index: 4, kind: input, shape index: {}]
  %s5 = inlined_call_operand.vmem [shape: f32[1,32], index: 5, kind: input, shape index: {}]
  %s6 = inlined_call_operand.vmem [shape: bf16[16,32], index: 6, kind: output, shape index: {}]
  %s7 = sld [smem:[#allocation0]]
  $region57: #{forward.18} parent=0
    _
  %s9 = ssub.s32 1, %s7
  %s10 = scalar_select 0, %s9, %s7
  loop: start=0, step=1, limit=4
  $region2: #{forward.18} parent=0 // loop_pre_header
    _
  $region3: #{forward.18} parent=0 // loop_header
    %s12 = sphi 0, %s16
    %p13 = scmp.ge.s32.totalorder %s12, 4
    %s22 = sphi 0, %s24
    %s25 = sphi 0, %s22
    %s26 = sphi 0, %s25
    %s42 = sphi 0, %s26
    %s48 = sphi 0, %s50
    %s51 = sphi 0, %s48
    %s52 = sphi 0, %s51
    %s68 = sphi 0, %s52
    %s72 = sphi 0, %s72
    %s74 = sphi 0, %s72
    %s75 = sphi 0, %s74
    %s89 = sphi 0, %s75
    %s93 = sphi 0, %s93
    %s95 = sphi 0, %s93
    %s96 = sphi 0, %s95
    %s110 = sphi 0, %s96
    %s114 = sphi 0, %s114
    %s116 = sphi 0, %s114
    %s117 = sphi 0, %s116
    %s131 = sphi 0, %s117
    %s135 = sphi 0, %s135
    %s137 = sphi 0, %s135
    %s138 = sphi 0, %s137
    %s152 = sphi 0, %s138
    %s158 = sphi 0, %s160
    %s161 = sphi 0, %s158
    %s162 = sphi 0, %s161
    %s178 = sphi 0, %s162
  $region4: #{forward.18} parent=0 // loop_header_branch
    %15 = sbr.rel (%p13) target = $region8
  $region5: #{forward.18} parent=0 // loop_body
    %s17 = ssub.s32 %s12, 1
    %s18 = ssub.s32 %s12, 2
    %s19 = sadd.s32 %s12, 1
    %s20 = ssub.s32 %s12, %s19
    %p21 = scmp.eq.s32.totalorder %s20, 0
    %s23 = sadd.s32 %s22, 1
    %s24 = scalar_select %p21, %s22, %s23
    %p27 = pneg %p21
    %p28 = scmp.eq.s32.totalorder %s12, 1
    %p29 = por %p27, %p28
    %p30 = scmp.ne.s32.totalorder %s22, %s25
    %p31 = scmp.eq.s32.totalorder %s12, 0
    %p32 = por %p30, %p31
    %p33 = scmp.ne.s32.totalorder %s22, %s25
    %p34 = scmp.eq.s32.totalorder %s17, 1
    %p35 = por %p33, %p34
    %p36 = scmp.ne.s32.totalorder %s25, %s26
    %p37 = scmp.eq.s32.totalorder %s17, 0
    %p38 = por %p36, %p37
    %p39 = scmp.ne.s32.totalorder %s25, %s26
    %p40 = scmp.eq.s32.totalorder %s18, 1
    %p41 = por %p39, %p40
    %p43 = scmp.ne.s32.totalorder %s26, %s42
    %p44 = scmp.eq.s32.totalorder %s18, 0
    %p45 = por %p43, %p44
    %s46 = ssub.s32 %s12, %s19
    %p47 = scmp.eq.s32.totalorder %s46, 0
    %s49 = sadd.s32 %s48, 1
    %s50 = scalar_select %p47, %s48, %s49
    %p53 = pneg %p47
    %p54 = scmp.eq.s32.totalorder %s12, 1
    %p55 = por %p53, %p54
    %p56 = scmp.ne.s32.totalorder %s48, %s51
    %p57 = scmp.eq.s32.totalorder %s12, 0
    %p58 = por %p56, %p57
    %p59 = scmp.ne.s32.totalorder %s48, %s51
    %p60 = scmp.eq.s32.totalorder %s17, 1
    %p61 = por %p59, %p60
    %p62 = scmp.ne.s32.totalorder %s51, %s52
    %p63 = scmp.eq.s32.totalorder %s17, 0
    %p64 = por %p62, %p63
    %p65 = scmp.ne.s32.totalorder %s51, %s52
    %p66 = scmp.eq.s32.totalorder %s18, 1
    %p67 = por %p65, %p66
    %p69 = scmp.ne.s32.totalorder %s52, %s68
    %p70 = scmp.eq.s32.totalorder %s18, 0
    %p71 = por %p69, %p70
    %s73 = sadd.s32 %s72, 1
    %p76 = scmp.eq.s32.totalorder %s12, 1
    %p77 = scmp.ne.s32.totalorder %s72, %s74
    %p78 = scmp.eq.s32.totalorder %s12, 0
    %p79 = por %p77, %p78
    %p80 = scmp.ne.s32.totalorder %s72, %s74
    %p81 = scmp.eq.s32.totalorder %s17, 1
    %p82 = por %p80, %p81
    %p83 = scmp.ne.s32.totalorder %s74, %s75
    %p84 = scmp.eq.s32.totalorder %s17, 0
    %p85 = por %p83, %p84
    %p86 = scmp.ne.s32.totalorder %s74, %s75
    %p87 = scmp.eq.s32.totalorder %s18, 1
    %p88 = por %p86, %p87
    %p90 = scmp.ne.s32.totalorder %s75, %s89
    %p91 = scmp.eq.s32.totalorder %s18, 0
    %p92 = por %p90, %p91
    %s94 = sadd.s32 %s93, 1
    %p97 = scmp.eq.s32.totalorder %s12, 1
    %p98 = scmp.ne.s32.totalorder %s93, %s95
    %p99 = scmp.eq.s32.totalorder %s12, 0
    %p100 = por %p98, %p99
    %p101 = scmp.ne.s32.totalorder %s93, %s95
    %p102 = scmp.eq.s32.totalorder %s17, 1
    %p103 = por %p101, %p102
    %p104 = scmp.ne.s32.totalorder %s95, %s96
    %p105 = scmp.eq.s32.totalorder %s17, 0
    %p106 = por %p104, %p105
    %p107 = scmp.ne.s32.totalorder %s95, %s96
    %p108 = scmp.eq.s32.totalorder %s18, 1
    %p109 = por %p107, %p108
    %p111 = scmp.ne.s32.totalorder %s96, %s110
    %p112 = scmp.eq.s32.totalorder %s18, 0
    %p113 = por %p111, %p112
    %s115 = sadd.s32 %s114, 1
    %p118 = scmp.eq.s32.totalorder %s12, 1
    %p119 = scmp.ne.s32.totalorder %s114, %s116
    %p120 = scmp.eq.s32.totalorder %s12, 0
    %p121 = por %p119, %p120
    %p122 = scmp.ne.s32.totalorder %s114, %s116
    %p123 = scmp.eq.s32.totalorder %s17, 1
    %p124 = por %p122, %p123
    %p125 = scmp.ne.s32.totalorder %s116, %s117
    %p126 = scmp.eq.s32.totalorder %s17, 0
    %p127 = por %p125, %p126
    %p128 = scmp.ne.s32.totalorder %s116, %s117
    %p129 = scmp.eq.s32.totalorder %s18, 1
    %p130 = por %p128, %p129
    %p132 = scmp.ne.s32.totalorder %s117, %s131
    %p133 = scmp.eq.s32.totalorder %s18, 0
    %p134 = por %p132, %p133
    %s136 = sadd.s32 %s135, 1
    %p139 = scmp.eq.s32.totalorder %s12, 1
    %p140 = scmp.ne.s32.totalorder %s135, %s137
    %p141 = scmp.eq.s32.totalorder %s12, 0
    %p142 = por %p140, %p141
    %p143 = scmp.ne.s32.totalorder %s135, %s137
    %p144 = scmp.eq.s32.totalorder %s17, 1
    %p145 = por %p143, %p144
    %p146 = scmp.ne.s32.totalorder %s137, %s138
    %p147 = scmp.eq.s32.totalorder %s17, 0
    %p148 = por %p146, %p147
    %p149 = scmp.ne.s32.totalorder %s137, %s138
    %p150 = scmp.eq.s32.totalorder %s18, 1
    %p151 = por %p149, %p150
    %p153 = scmp.ne.s32.totalorder %s138, %s152
    %p154 = scmp.eq.s32.totalorder %s18, 0
    %p155 = por %p153, %p154
    %s156 = ssub.s32 %s12, %s19
    %p157 = scmp.eq.s32.totalorder %s156, 0
    %s159 = sadd.s32 %s158, 1
    %s160 = scalar_select %p157, %s158, %s159
    %p163 = pneg %p157
    %p164 = scmp.eq.s32.totalorder %s12, 1
    %p165 = por %p163, %p164
    %p166 = scmp.ne.s32.totalorder %s158, %s161
    %p167 = scmp.eq.s32.totalorder %s12, 0
    %p168 = por %p166, %p167
    %p169 = scmp.ne.s32.totalorder %s158, %s161
    %p170 = scmp.eq.s32.totalorder %s17, 1
    %p171 = por %p169, %p170
    %p172 = scmp.ne.s32.totalorder %s161, %s162
    %p173 = scmp.eq.s32.totalorder %s17, 0
    %p174 = por %p172, %p173
    %p175 = scmp.ne.s32.totalorder %s161, %s162
    %p176 = scmp.eq.s32.totalorder %s18, 1
    %p177 = por %p175, %p176
    %p179 = scmp.ne.s32.totalorder %s162, %s178
    %p180 = scmp.eq.s32.totalorder %s18, 0
    %p181 = por %p179, %p180
    %p182 = scmp.le.s32.totalorder 1, %s12
    %p183 = scmp.lt.s32.totalorder %s12, 3
    %p184 = pnand %p182, %p183
    %p185 = pneg %p184
    // Predicated region
    $region9: #{forward.18} parent=5 // pred_check
      _
    $region10: #{forward.18} parent=5 // pred_check_branch
      %187 = sbr.rel (%p184) target = $region12
    $region11: #{forward.18} parent=5 // pred_region
      %s188 = ssub.s32 %s12, 1
      // Predicated region
      $region13: #{forward.18} parent=11 // pred_check
        %p189 = pneg %p85
      $region14: #{forward.18} parent=11 // pred_check_branch
        %191 = sbr.rel (%p189) target = $region16
      $region15: #{forward.18} parent=11 // pred_region
        _
      $region16: #{forward.18} parent=11 // pred_fallthru
        _
      // Predicated region
      $region17: #{forward.18} parent=11 // pred_check
        %p192 = pneg %p106
      $region18: #{forward.18} parent=11 // pred_check_branch
        %194 = sbr.rel (%p192) target = $region20
      $region19: #{forward.18} parent=11 // pred_region
        _
      $region20: #{forward.18} parent=11 // pred_fallthru
        _
      // Predicated region
      $region21: #{forward.18} parent=11 // pred_check
        %p195 = pneg %p127
      $region22: #{forward.18} parent=11 // pred_check_branch
        %197 = sbr.rel (%p195) target = $region24
      $region23: #{forward.18} parent=11 // pred_region
        _
      $region24: #{forward.18} parent=11 // pred_fallthru
        _
      // Predicated region
      $region25: #{forward.18} parent=11 // pred_check
        %p198 = pneg %p148
      $region26: #{forward.18} parent=11 // pred_check_branch
        %200 = sbr.rel (%p198) target = $region28
      $region27: #{forward.18} parent=11 // pred_region
        _
      $region28: #{forward.18} parent=11 // pred_fallthru
        _
    $region12: #{forward.18} parent=5 // pred_fallthru
      _
    %p201 = scmp.lt.s32.totalorder %s12, 2
    // Predicated region
    $region29: #{forward.18} parent=5 // pred_check
      %p202 = pneg %p201
    $region30: #{forward.18} parent=5 // pred_check_branch
      %204 = sbr.rel (%p202) target = $region32
    $region31: #{forward.18} parent=5 // pred_region
      // Predicated region
      $region33: #{forward.18} parent=31 // pred_check
        %p205 = pneg %p32
      $region34: #{forward.18} parent=31 // pred_check_branch
        %207 = sbr.rel (%p205) target = $region36
      $region35: #{forward.18} parent=31 // pred_region
        %p208 = scmp.lt.s32.totalorder %s12, 1
        %s209 = scalar_select %p208, %s12, 1
        %s210 = smul.addr %s209, 4
        %s211 = scalar_lea.vmem %s0, %s210
      $region36: #{forward.18} parent=31 // pred_fallthru
        _
      // Predicated region
      $region37: #{forward.18} parent=31 // pred_check
        %p212 = pneg %p58
      $region38: #{forward.18} parent=31 // pred_check_branch
        %214 = sbr.rel (%p212) target = $region40
      $region39: #{forward.18} parent=31 // pred_region
        %p215 = scmp.lt.s32.totalorder %s12, 1
        %s216 = scalar_select %p215, %s12, 1
        %s217 = smul.addr %s216, 4
        %s218 = scalar_lea.vmem %s1, %s217
      $region40: #{forward.18} parent=31 // pred_fallthru
        _
    $region32: #{forward.18} parent=5 // pred_fallthru
      _
    %p219 = scmp.le.s32.totalorder 1, %s12
    %p220 = scmp.lt.s32.totalorder %s12, 3
    %p221 = pnand %p219, %p220
    %p222 = pneg %p221
    // Predicated region
    $region41: #{forward.18} parent=5 // pred_check
      _
    $region42: #{forward.18} parent=5 // pred_check_branch
      %224 = sbr.rel (%p221) target = $region44
    $region43: #{forward.18} parent=5 // pred_region
      %s225 = ssub.s32 %s12, 1
      %p226 = scmp.lt.s32.totalorder %s17, 1
      %s227 = scalar_select %p226, %s17, 1
      %s228 = smul.addr %s227, 4
      %s229 = scalar_lea.vmem %s0, %s228
      %p230 = pneg %p38
      %p231 = pneg %p35
      %p232 = scmp.lt.s32.totalorder %s17, 1
      %s233 = scalar_select %p232, %s17, 1
      %s234 = smul.addr %s233, 4
      %s235 = scalar_lea.vmem %s1, %s234
      %p236 = pneg %p64
      %p237 = pneg %p61
      %p238 = pneg %p85
      %p239 = pneg %p82
      %p240 = pneg %p106
      %p241 = pneg %p103
      %p242 = pneg %p127
      %p243 = pneg %p124
      %p244 = pneg %p148
      %p245 = pneg %p145
      %p246 = pneg %p174
      %p247 = pneg %p171
      %p248 = scmp.lt.s32.totalorder %s17, 1
      %s249 = scalar_select %p248, %s17, 1
      %s250 = smul.addr %s249, 4
      %s251 = scalar_lea.vmem %s6, %s250
      %p252 = scmp.lt.s32.totalorder %s17, 1
      %s253 = scalar_select %p252, %s17, 1
      %s254 = smul.addr %s253, 4
      %s255 = scalar_lea.vmem %s0, %s254
      %p256 = scmp.lt.s32.totalorder %s17, 1
      %s257 = scalar_select %p256, %s17, 1
      %s258 = smul.addr %s257, 4
      %s259 = scalar_lea.vmem %s1, %s258
      %p260 = scmp.lt.s32.totalorder %s17, 1
      %s261 = scalar_select %p260, %s17, 1
      %s262 = smul.addr %s261, 4
      %s263 = scalar_lea.vmem %s6, %s262
      %v265 = vld [vmem:[%s255] sm:$0xf]
      %v266 = vld [vmem:[%s2] sm:$0xf]
      %v267 = vld [vmem:[%s2 + $0x4] sm:$0xf]
      %v268 = vld [vmem:[%s2 + $0x8] sm:$0xf]
      %v269 = vld [vmem:[%s2 + $0xc] sm:$0xf]
      %v270 = vld [vmem:[%s3] sm:$0x1]
      %v272 = vlaneseq
      %v273 = vshrl.u32 %v272, 7
      %v274 = vsub.s32 0, %v273
      %v275 = vrot.slane %v270, %v274
      %v281 = vunpack.c.l.b16 %v266
      %v282 = vunpack.c.l.b16 %v267
      %v283 = vunpack.c.l.b16 %v268
      %v284 = vunpack.c.l.b16 %v269
      %v285 = vpack.c.b16 %v282, %v281
      %v286 = vpack.c.b16 %v284, %v283
      %vm289 = vcmask 261120
      %v291 = vsel %vm289, %v265, 0
      %293 = vmatprep.subr.bf16.mxu0 0
      %294 = vmatpush1.bf16.msra.mxu0 %v285
      %295 = vmatprep.subr.bf16.mxu0 0
      %296 = vmatpush1.bf16.msra.mxu0 %v286
      %297 = vmatprep.subr.bf16.mxu0 0
      %298 = vmatpush1.bf16.msra.mxu0 0
      %299 = vmatprep.subr.bf16.mxu0 0
      %300 = vmatpush1.bf16.msra.mxu0 0
      %301 = vmatprep.subr.bf16.mxu0 0
      %302 = vmatpush1.bf16.msra.mxu0 0
      %303 = vmatprep.subr.bf16.mxu0 0
      %304 = vmatpush1.bf16.msra.mxu0 0
      %305 = vmatprep.subr.bf16.mxu0 0
      %306 = vmatpush1.bf16.msra.mxu0 0
      %307 = vmatprep.subr.bf16.mxu0 0
      %308 = vmatpush1.bf16.msra.mxu0 0
      %309 = vmatprep.subr.bf16.mxu0 0
      %310 = vmatpush1.bf16.msra.mxu0 0
      %311 = vmatprep.subr.bf16.mxu0 0
      %312 = vmatpush1.bf16.msra.mxu0 0
      %313 = vmatprep.subr.bf16.mxu0 0
      %314 = vmatpush1.bf16.msra.mxu0 0
      %315 = vmatprep.subr.bf16.mxu0 0
      %316 = vmatpush1.bf16.msra.mxu0 0
      %317 = vmatprep.subr.bf16.mxu0 0
      %318 = vmatpush1.bf16.msra.mxu0 0
      %319 = vmatprep.subr.bf16.mxu0 0
      %320 = vmatpush1.bf16.msra.mxu0 0
      %321 = vmatprep.subr.bf16.mxu0 0
      %322 = vmatpush1.bf16.msra.mxu0 0
      %323 = vmatprep.subr.bf16.mxu0 0
      %324 = vmatpush1.bf16.msra.mxu0 0
      %325 = vmatprep.mubr.bf16.mxu0 0
      %326 = vmatmul.mubr.bf16.gmra.mrb[0].mxu0 %v291
      %v327 = vpop.f32.mrb[0].mxu0
      %v328 = vadd.f32 %v275, %v327
      %v329 = vpop.f32.mrb[0].mxu0
      %v330 = vpop.f32.mrb[0].mxu0
      %v331 = vpop.f32.mrb[0].mxu0
      %332 = vdwg.mxu0
      %v333 = vld [vmem:[%s259] sm:$0xf]
      %v334 = vunpack.c.l.bf16 %v333
      %v335 = vadd.f32 %v334, %v328
      %v336 = vsel %vm289, %v335, 0.0
      %337 = vadd.xlane.f32.xlu0 %v336
      %v338 = vpop.xlane.xlu0 %337
      %v339 = vrcp.pop 32.0
      %v340 = vmul.f32 %v338, %v339
      %v341 = vsub.f32 %v335, %v340
      %v342 = vmul.f32 %v341, %v341
      %v343 = vsel %vm289, %v342, 0.0
      %344 = vadd.xlane.f32.xlu0 %v343
      %v345 = vpop.xlane.xlu0 %344
      %v346 = vmul.f32 %v345, %v339
      %v347 = vadd.f32 %v346, 1e-05
      %v348 = vrsqrt.pop %v347
      %v349 = vmul.f32 %v341, %v348
      %v350 = vld [vmem:[%s4] sm:$0x1]
      %v352 = vlaneseq
      %v353 = vshrl.u32 %v352, 7
      %v354 = vsub.s32 0, %v353
      %v355 = vrot.slane %v350, %v354
      %v357 = vmul.f32 %v349, %v355
      %v358 = vld [vmem:[%s5] sm:$0x1]
      %v360 = vlaneseq
      %v361 = vshrl.u32 %v360, 7
      %v362 = vsub.s32 0, %v361
      %v363 = vrot.slane %v358, %v362
      %v365 = vadd.f32 %v357, %v363
      %v366 = vpack.c.bf16 %v365, %v365
      %vm367 = vcmask 257024
      %368 = vst.msk [vmem:[%s263] sm:$0xf] %vm367, %v366
      %p369 = scmp.lt.s32.totalorder %s17, 1
      %s370 = scalar_select %p369, %s17, 1
      %s371 = smul.addr %s370, 4
      %s372 = scalar_lea.vmem %s6, %s371
      // Predicated region
      $region45: #{forward.18} parent=43 // pred_check
        %p373 = pneg %p171
      $region46: #{forward.18} parent=43 // pred_check_branch
        %375 = sbr.rel (%p373) target = $region48
      $region47: #{forward.18} parent=43 // pred_region
        _
      $region48: #{forward.18} parent=43 // pred_fallthru
        _
    $region44: #{forward.18} parent=5 // pred_fallthru
      _
    %p376 = scmp.le.s32.totalorder 2, %s12
    // Predicated region
    $region49: #{forward.18} parent=5 // pred_check
      %p377 = pneg %p376
    $region50: #{forward.18} parent=5 // pred_check_branch
      %379 = sbr.rel (%p377) target = $region52
    $region51: #{forward.18} parent=5 // pred_region
      %s380 = ssub.s32 %s12, 2
      // Predicated region
      $region53: #{forward.18} parent=51 // pred_check
        %p381 = pneg %p177
      $region54: #{forward.18} parent=51 // pred_check_branch
        %383 = sbr.rel (%p381) target = $region56
      $region55: #{forward.18} parent=51 // pred_region
        %p384 = scmp.lt.s32.totalorder %s18, 1
        %s385 = scalar_select %p384, %s18, 1
        %s386 = smul.addr %s385, 4
        %s387 = scalar_lea.vmem %s6, %s386
      $region56: #{forward.18} parent=51 // pred_fallthru
        _
    $region52: #{forward.18} parent=5 // pred_fallthru
      _
  $region6: #{forward.18} parent=0 // loop_footer
    %s16 = sadd.s32 1, %s12
  $region7: #{forward.18} parent=0 // loop_footer_branch
    %11 = sbr.rel target = $region3
  $region8: #{forward.18} parent=0 // loop_exit
    _

// kernel: forward.17
$region0: #{forward.17}
  #allocation0 [shape = 'u32[]', space=smem, size = 0x4, offset = 0x4, fixed_abs, tag = 'smem constant byte address 0x4 - core index']
  #allocation1 [shape = 'u32[144,128]{1,0:T(1,128)}', space=vmem, size = 0x12000, scoped, tag = 'internal scratch']
  #allocation2 [shape = 'bf16[8,32]{1,0:T(8,128)(2,1)}', space=vmem, size = 0x800, scoped, tag = 'scratch operand']
  #allocation3 [shape = 'f32[4,8,1]{2,1,0:T(8,128)}', space=vmem, size = 0x4000, scoped, tag = 'scratch operand']
  #allocation4 [shape = 'f32[4,8,1]{2,1,0:T(8,128)}', space=vmem, size = 0x4000, scoped, tag = 'scratch operand']
  #allocation5 [shape = 'f32[8,32]{1,0:T(8,128)}', space=vmem, size = 0x1000, scoped, tag = 'scratch operand']
  %s0 = inlined_call_operand.vmem [shape: s32[2,1,8], index: 0, kind: input, shape index: {}]
  %s1 = inlined_call_operand.vmem [shape: bf16[2,8,32], index: 1, kind: input, shape index: {}, may-alias: {1,2}]
  %s2 = inlined_call_operand.vmem [shape: bf16[2,8,32], index: 2, kind: input, shape index: {}, may-alias: {1,2}]
  %s3 = inlined_call_operand.vmem [shape: bf16[32,32], index: 3, kind: input, shape index: {}]
  %s4 = inlined_call_operand.vmem [shape: f32[1,32], index: 4, kind: input, shape index: {}]
  %s5 = inlined_call_operand.vmem [shape: bf16[32,64], index: 5, kind: input, shape index: {}]
  %s6 = inlined_call_operand.vmem [shape: f32[1,64], index: 6, kind: input, shape index: {}]
  %s7 = inlined_call_operand.vmem [shape: bf16[2,8,32], index: 7, kind: output, shape index: {}]
  %s8 = sld [smem:[#allocation0]]
  $region69: #{forward.17} parent=0
    _
  %s10 = ssub.s32 1, %s8
  %s11 = scalar_select 0, %s10, %s8
  loop: start=0, step=1, limit=4
  $region2: #{forward.17} parent=0 // loop_pre_header
    _
  $region3: #{forward.17} parent=0 // loop_header
    %s13 = sphi 0, %s17
    %p14 = scmp.ge.s32.totalorder %s13, 4
    %s20 = sphi 0, %s32
    %s21 = sphi 0, %s28
    %s22 = sphi 0, %s20
    %s23 = sphi 0, %s21
    %s24 = sphi 0, %s22
    %s25 = sphi 0, %s23
    %s37 = sphi 0, %s39
    %s40 = sphi 0, %s37
    %s41 = sphi 0, %s40
    %s57 = sphi 0, %s41
    %s63 = sphi 0, %s65
    %s66 = sphi 0, %s63
    %s67 = sphi 0, %s66
    %s83 = sphi 0, %s67
    %s91 = sphi 0, %s93
    %s94 = sphi 0, %s91
    %s95 = sphi 0, %s94
    %s111 = sphi 0, %s95
    %s115 = sphi 0, %s115
    %s117 = sphi 0, %s115
    %s118 = sphi 0, %s117
    %s132 = sphi 0, %s118
    %s136 = sphi 0, %s136
    %s138 = sphi 0, %s136
    %s139 = sphi 0, %s138
    %s153 = sphi 0, %s139
    %s157 = sphi 0, %s157
    %s159 = sphi 0, %s157
    %s160 = sphi 0, %s159
    %s174 = sphi 0, %s160
    %s178 = sphi 0, %s178
    %s180 = sphi 0, %s178
    %s181 = sphi 0, %s180
    %s195 = sphi 0, %s181
    %s201 = sphi 0, %s203
    %s204 = sphi 0, %s201
    %s205 = sphi 0, %s204
    %s221 = sphi 0, %s205
  $region4: #{forward.17} parent=0 // loop_header_branch
    %16 = sbr.rel (%p14) target = $region8
  $region5: #{forward.17} parent=0 // loop_body
    %s18 = ssub.s32 %s13, 1
    %s19 = ssub.s32 %s13, 2
    %s26 = sadd.s32 1, %s21
    %p27 = scmp.ge.s32.totalorder %s26, 1
    %s28 = scalar_select %p27, 0, %s26
    %s29 = sadd.s32 1, %s20
    %s30 = scalar_select %p27, %s29, %s20
    %p31 = scmp.ge.s32.totalorder %s30, 2
    %s32 = scalar_select %p31, 0, %s30
    %s33 = ssub.s32 %s20, %s32
    %s34 = ssub.s32 %s21, %s28
    %s35 = sor.u32 %s33, %s34
    %p36 = scmp.eq.s32.totalorder %s35, 0
    %s38 = sadd.s32 %s37, 1
    %s39 = scalar_select %p36, %s37, %s38
    %p42 = pneg %p36
    %p43 = scmp.eq.s32.totalorder %s13, 1
    %p44 = por %p42, %p43
    %p45 = scmp.ne.s32.totalorder %s37, %s40
    %p46 = scmp.eq.s32.totalorder %s13, 0
    %p47 = por %p45, %p46
    %p48 = scmp.ne.s32.totalorder %s37, %s40
    %p49 = scmp.eq.s32.totalorder %s18, 1
    %p50 = por %p48, %p49
    %p51 = scmp.ne.s32.totalorder %s40, %s41
    %p52 = scmp.eq.s32.totalorder %s18, 0
    %p53 = por %p51, %p52
    %p54 = scmp.ne.s32.totalorder %s40, %s41
    %p55 = scmp.eq.s32.totalorder %s19, 1
    %p56 = por %p54, %p55
    %p58 = scmp.ne.s32.totalorder %s41, %s57
    %p59 = scmp.eq.s32.totalorder %s19, 0
    %p60 = por %p58, %p59
    %s61 = ssub.s32 %s20, %s32
    %p62 = scmp.eq.s32.totalorder %s61, 0
    %s64 = sadd.s32 %s63, 1
    %s65 = scalar_select %p62, %s63, %s64
    %p68 = pneg %p62
    %p69 = scmp.eq.s32.totalorder %s13, 1
    %p70 = por %p68, %p69
    %p71 = scmp.ne.s32.totalorder %s63, %s66
    %p72 = scmp.eq.s32.totalorder %s13, 0
    %p73 = por %p71, %p72
    %p74 = scmp.ne.s32.totalorder %s63, %s66
    %p75 = scmp.eq.s32.totalorder %s18, 1
    %p76 = por %p74, %p75
    %p77 = scmp.ne.s32.totalorder %s66, %s67
    %p78 = scmp.eq.s32.totalorder %s18, 0
    %p79 = por %p77, %p78
    %p80 = scmp.ne.s32.totalorder %s66, %s67
    %p81 = scmp.eq.s32.totalorder %s19, 1
    %p82 = por %p80, %p81
    %p84 = scmp.ne.s32.totalorder %s67, %s83
    %p85 = scmp.eq.s32.totalorder %s19, 0
    %p86 = por %p84, %p85
    %s87 = ssub.s32 %s20, %s32
    %s88 = ssub.s32 %s21, %s28
    %s89 = sor.u32 %s87, %s88
    %p90 = scmp.eq.s32.totalorder %s89, 0
    %s92 = sadd.s32 %s91, 1
    %s93 = scalar_select %p90, %s91, %s92
    %p96 = pneg %p90
    %p97 = scmp.eq.s32.totalorder %s13, 1
    %p98 = por %p96, %p97
    %p99 = scmp.ne.s32.totalorder %s91, %s94
    %p100 = scmp.eq.s32.totalorder %s13, 0
    %p101 = por %p99, %p100
    %p102 = scmp.ne.s32.totalorder %s91, %s94
    %p103 = scmp.eq.s32.totalorder %s18, 1
    %p104 = por %p102, %p103
    %p105 = scmp.ne.s32.totalorder %s94, %s95
    %p106 = scmp.eq.s32.totalorder %s18, 0
    %p107 = por %p105, %p106
    %p108 = scmp.ne.s32.totalorder %s94, %s95
    %p109 = scmp.eq.s32.totalorder %s19, 1
    %p110 = por %p108, %p109
    %p112 = scmp.ne.s32.totalorder %s95, %s111
    %p113 = scmp.eq.s32.totalorder %s19, 0
    %p114 = por %p112, %p113
    %s116 = sadd.s32 %s115, 1
    %p119 = scmp.eq.s32.totalorder %s13, 1
    %p120 = scmp.ne.s32.totalorder %s115, %s117
    %p121 = scmp.eq.s32.totalorder %s13, 0
    %p122 = por %p120, %p121
    %p123 = scmp.ne.s32.totalorder %s115, %s117
    %p124 = scmp.eq.s32.totalorder %s18, 1
    %p125 = por %p123, %p124
    %p126 = scmp.ne.s32.totalorder %s117, %s118
    %p127 = scmp.eq.s32.totalorder %s18, 0
    %p128 = por %p126, %p127
    %p129 = scmp.ne.s32.totalorder %s117, %s118
    %p130 = scmp.eq.s32.totalorder %s19, 1
    %p131 = por %p129, %p130
    %p133 = scmp.ne.s32.totalorder %s118, %s132
    %p134 = scmp.eq.s32.totalorder %s19, 0
    %p135 = por %p133, %p134
    %s137 = sadd.s32 %s136, 1
    %p140 = scmp.eq.s32.totalorder %s13, 1
    %p141 = scmp.ne.s32.totalorder %s136, %s138
    %p142 = scmp.eq.s32.totalorder %s13, 0
    %p143 = por %p141, %p142
    %p144 = scmp.ne.s32.totalorder %s136, %s138
    %p145 = scmp.eq.s32.totalorder %s18, 1
    %p146 = por %p144, %p145
    %p147 = scmp.ne.s32.totalorder %s138, %s139
    %p148 = scmp.eq.s32.totalorder %s18, 0
    %p149 = por %p147, %p148
    %p150 = scmp.ne.s32.totalorder %s138, %s139
    %p151 = scmp.eq.s32.totalorder %s19, 1
    %p152 = por %p150, %p151
    %p154 = scmp.ne.s32.totalorder %s139, %s153
    %p155 = scmp.eq.s32.totalorder %s19, 0
    %p156 = por %p154, %p155
    %s158 = sadd.s32 %s157, 1
    %p161 = scmp.eq.s32.totalorder %s13, 1
    %p162 = scmp.ne.s32.totalorder %s157, %s159
    %p163 = scmp.eq.s32.totalorder %s13, 0
    %p164 = por %p162, %p163
    %p165 = scmp.ne.s32.totalorder %s157, %s159
    %p166 = scmp.eq.s32.totalorder %s18, 1
    %p167 = por %p165, %p166
    %p168 = scmp.ne.s32.totalorder %s159, %s160
    %p169 = scmp.eq.s32.totalorder %s18, 0
    %p170 = por %p168, %p169
    %p171 = scmp.ne.s32.totalorder %s159, %s160
    %p172 = scmp.eq.s32.totalorder %s19, 1
    %p173 = por %p171, %p172
    %p175 = scmp.ne.s32.totalorder %s160, %s174
    %p176 = scmp.eq.s32.totalorder %s19, 0
    %p177 = por %p175, %p176
    %s179 = sadd.s32 %s178, 1
    %p182 = scmp.eq.s32.totalorder %s13, 1
    %p183 = scmp.ne.s32.totalorder %s178, %s180
    %p184 = scmp.eq.s32.totalorder %s13, 0
    %p185 = por %p183, %p184
    %p186 = scmp.ne.s32.totalorder %s178, %s180
    %p187 = scmp.eq.s32.totalorder %s18, 1
    %p188 = por %p186, %p187
    %p189 = scmp.ne.s32.totalorder %s180, %s181
    %p190 = scmp.eq.s32.totalorder %s18, 0
    %p191 = por %p189, %p190
    %p192 = scmp.ne.s32.totalorder %s180, %s181
    %p193 = scmp.eq.s32.totalorder %s19, 1
    %p194 = por %p192, %p193
    %p196 = scmp.ne.s32.totalorder %s181, %s195
    %p197 = scmp.eq.s32.totalorder %s19, 0
    %p198 = por %p196, %p197
    %s199 = ssub.s32 %s20, %s32
    %p200 = scmp.eq.s32.totalorder %s199, 0
    %s202 = sadd.s32 %s201, 1
    %s203 = scalar_select %p200, %s201, %s202
    %p206 = pneg %p200
    %p207 = scmp.eq.s32.totalorder %s13, 1
    %p208 = por %p206, %p207
    %p209 = scmp.ne.s32.totalorder %s201, %s204
    %p210 = scmp.eq.s32.totalorder %s13, 0
    %p211 = por %p209, %p210
    %p212 = scmp.ne.s32.totalorder %s201, %s204
    %p213 = scmp.eq.s32.totalorder %s18, 1
    %p214 = por %p212, %p213
    %p215 = scmp.ne.s32.totalorder %s204, %s205
    %p216 = scmp.eq.s32.totalorder %s18, 0
    %p217 = por %p215, %p216
    %p218 = scmp.ne.s32.totalorder %s204, %s205
    %p219 = scmp.eq.s32.totalorder %s19, 1
    %p220 = por %p218, %p219
    %p222 = scmp.ne.s32.totalorder %s205, %s221
    %p223 = scmp.eq.s32.totalorder %s19, 0
    %p224 = por %p222, %p223
    %p225 = scmp.le.s32.totalorder 1, %s13
    %p226 = scmp.lt.s32.totalorder %s13, 3
    %p227 = pnand %p225, %p226
    %p228 = pneg %p227
    // Predicated region
    $region9: #{forward.17} parent=5 // pred_check
      _
    $region10: #{forward.17} parent=5 // pred_check_branch
      %230 = sbr.rel (%p227) target = $region12
    $region11: #{forward.17} parent=5 // pred_region
      %s231 = ssub.s32 %s13, 1
      // Predicated region
      $region13: #{forward.17} parent=11 // pred_check
        %p232 = pneg %p128
      $region14: #{forward.17} parent=11 // pred_check_branch
        %234 = sbr.rel (%p232) target = $region16
      $region15: #{forward.17} parent=11 // pred_region
        _
      $region16: #{forward.17} parent=11 // pred_fallthru
        _
      // Predicated region
      $region17: #{forward.17} parent=11 // pred_check
        %p235 = pneg %p149
      $region18: #{forward.17} parent=11 // pred_check_branch
        %237 = sbr.rel (%p235) target = $region20
      $region19: #{forward.17} parent=11 // pred_region
        _
      $region20: #{forward.17} parent=11 // pred_fallthru
        _
      // Predicated region
      $region21: #{forward.17} parent=11 // pred_check
        %p238 = pneg %p170
      $region22: #{forward.17} parent=11 // pred_check_branch
        %240 = sbr.rel (%p238) target = $region24
      $region23: #{forward.17} parent=11 // pred_region
        _
      $region24: #{forward.17} parent=11 // pred_fallthru
        _
      // Predicated region
      $region25: #{forward.17} parent=11 // pred_check
        %p241 = pneg %p191
      $region26: #{forward.17} parent=11 // pred_check_branch
        %243 = sbr.rel (%p241) target = $region28
      $region27: #{forward.17} parent=11 // pred_region
        _
      $region28: #{forward.17} parent=11 // pred_fallthru
        _
    $region12: #{forward.17} parent=5 // pred_fallthru
      _
    %p244 = scmp.lt.s32.totalorder %s13, 2
    // Predicated region
    $region29: #{forward.17} parent=5 // pred_check
      %p245 = pneg %p244
    $region30: #{forward.17} parent=5 // pred_check_branch
      %247 = sbr.rel (%p245) target = $region32
    $region31: #{forward.17} parent=5 // pred_region
      // Predicated region
      $region33: #{forward.17} parent=31 // pred_check
        %p248 = pneg %p47
      $region34: #{forward.17} parent=31 // pred_check_branch
        %250 = sbr.rel (%p248) target = $region36
      $region35: #{forward.17} parent=31 // pred_region
        %p251 = scmp.lt.s32.totalorder %s20, 1
        %s252 = scalar_select %p251, %s20, 1
        %p253 = scmp.lt.s32.totalorder %s21, 0
        %s254 = scalar_select %p253, %s21, 0
        %s255 = sadd.s32 %s254, %s252
        %s256 = scalar_lea.vmem %s0, %s255
      $region36: #{forward.17} parent=31 // pred_fallthru
        _
      // Predicated region
      $region37: #{forward.17} parent=31 // pred_check
        %p257 = pneg %p73
      $region38: #{forward.17} parent=31 // pred_check_branch
        %259 = sbr.rel (%p257) target = $region40
      $region39: #{forward.17} parent=31 // pred_region
        %p260 = scmp.lt.s32.totalorder %s20, 1
        %s261 = scalar_select %p260, %s20, 1
        %s262 = smul.addr %s261, 4
        %s263 = scalar_lea.vmem %s1, %s262
      $region40: #{forward.17} parent=31 // pred_fallthru
        _
      // Predicated region
      $region41: #{forward.17} parent=31 // pred_check
        %p264 = pneg %p101
      $region42: #{forward.17} parent=31 // pred_check_branch
        %266 = sbr.rel (%p264) target = $region44
      $region43: #{forward.17} parent=31 // pred_region
        %p267 = scmp.lt.s32.totalorder %s20, 1
        %s268 = scalar_select %p267, %s20, 1
        %p269 = scmp.lt.s32.totalorder %s21, 0
        %s270 = scalar_select %p269, %s21, 0
        %s271 = sadd.s32 %s270, %s268
        %s272 = smul.addr %s271, 4
        %s273 = scalar_lea.vmem %s2, %s272
      $region44: #{forward.17} parent=31 // pred_fallthru
        _
    $region32: #{forward.17} parent=5 // pred_fallthru
      _
    %p274 = scmp.le.s32.totalorder 1, %s13
    %p275 = scmp.lt.s32.totalorder %s13, 3
    %p276 = pnand %p274, %p275
    %p277 = pneg %p276
    // Predicated region
    $region45: #{forward.17} parent=5 // pred_check
      _
    $region46: #{forward.17} parent=5 // pred_check_branch
      %279 = sbr.rel (%p276) target = $region48
    $region47: #{forward.17} parent=5 // pred_region
      %s280 = ssub.s32 %s13, 1
      %p281 = scmp.lt.s32.totalorder %s22, 1
      %s282 = scalar_select %p281, %s22, 1
      %p283 = scmp.lt.s32.totalorder %s23, 0
      %s284 = scalar_select %p283, %s23, 0
      %s285 = sadd.s32 %s284, %s282
      %s286 = scalar_lea.vmem %s0, %s285
      %p287 = pneg %p53
      %p288 = pneg %p50
      %p289 = scmp.lt.s32.totalorder %s22, 1
      %s290 = scalar_select %p289, %s22, 1
      %s291 = smul.addr %s290, 4
      %s292 = scalar_lea.vmem %s1, %s291
      %p293 = pneg %p79
      %p294 = pneg %p76
      %p295 = scmp.lt.s32.totalorder %s22, 1
      %s296 = scalar_select %p295, %s22, 1
      %p297 = scmp.lt.s32.totalorder %s23, 0
      %s298 = scalar_select %p297, %s23, 0
      %s299 = sadd.s32 %s298, %s296
      %s300 = smul.addr %s299, 4
      %s301 = scalar_lea.vmem %s2, %s300
      %p302 = pneg %p107
      %p303 = pneg %p104
      %p304 = pneg %p128
      %p305 = pneg %p125
      %p306 = pneg %p149
      %p307 = pneg %p146
      %p308 = pneg %p170
      %p309 = pneg %p167
      %p310 = pneg %p191
      %p311 = pneg %p188
      %p312 = pneg %p217
      %p313 = pneg %p214
      %p314 = scmp.lt.s32.totalorder %s22, 1
      %s315 = scalar_select %p314, %s22, 1
      %s316 = smul.addr %s315, 4
      %s317 = scalar_lea.vmem %s7, %s316
      %p318 = scmp.lt.s32.totalorder %s22, 1
      %s319 = scalar_select %p318, %s22, 1
      %p320 = scmp.lt.s32.totalorder %s23, 0
      %s321 = scalar_select %p320, %s23, 0
      %s322 = sadd.s32 %s321, %s319
      %s323 = scalar_lea.vmem %s0, %s322
      %p324 = scmp.lt.s32.totalorder %s22, 1
      %s325 = scalar_select %p324, %s22, 1
      %s326 = smul.addr %s325, 4
      %s327 = scalar_lea.vmem %s1, %s326
      %p328 = scmp.lt.s32.totalorder %s22, 1
      %s329 = scalar_select %p328, %s22, 1
      %p330 = scmp.lt.s32.totalorder %s23, 0
      %s331 = scalar_select %p330, %s23, 0
      %s332 = sadd.s32 %s331, %s329
      %s333 = smul.addr %s332, 4
      %s334 = scalar_lea.vmem %s2, %s333
      %p335 = scmp.lt.s32.totalorder %s22, 1
      %s336 = scalar_select %p335, %s22, 1
      %s337 = smul.addr %s336, 4
      %s338 = scalar_lea.vmem %s7, %s337
      %p340 = scmp.eq.s32.totalorder %s23, 0
      // Predicated region
      $region49: #{forward.17} parent=47 // pred_check
        %p341 = pneg %p340
      $region50: #{forward.17} parent=47 // pred_check_branch
        %343 = sbr.rel (%p341) target = $region52
      $region51: #{forward.17} parent=47 // pred_region
        %v344 = vld [vmem:[%s327] sm:$0xf]
        %v345 = vld [vmem:[%s3] sm:$0xf]
        %v346 = vld [vmem:[%s3 + $0x4] sm:$0xf]
        %v347 = vld [vmem:[%s3 + $0x8] sm:$0xf]
        %v348 = vld [vmem:[%s3 + $0xc] sm:$0xf]
        %v349 = vld [vmem:[%s4] sm:$0x1]
        %v351 = vlaneseq
        %v352 = vshrl.u32 %v351, 7
        %v353 = vsub.s32 0, %v352
        %v354 = vrot.slane %v349, %v353
        %v360 = vunpack.c.l.b16 %v345
        %v361 = vunpack.c.l.b16 %v346
        %v362 = vunpack.c.l.b16 %v347
        %v363 = vunpack.c.l.b16 %v348
        %v364 = vpack.c.b16 %v361, %v360
        %v365 = vpack.c.b16 %v363, %v362
        %vm368 = vcmask 261120
        %v370 = vsel %vm368, %v344, 0
        %372 = vmatprep.subr.bf16.mxu0 0
        %373 = vmatpush1.bf16.msra.mxu0 %v364
        %374 = vmatprep.subr.bf16.mxu0 0
        %375 = vmatpush1.bf16.msra.mxu0 %v365
        %376 = vmatprep.subr.bf16.mxu0 0
        %377 = vmatpush1.bf16.msra.mxu0 0
        %378 = vmatprep.subr.bf16.mxu0 0
        %379 = vmatpush1.bf16.msra.mxu0 0
        %380 = vmatprep.subr.bf16.mxu0 0
        %381 = vmatpush1.bf16.msra.mxu0 0
        %382 = vmatprep.subr.bf16.mxu0 0
        %383 = vmatpush1.bf16.msra.mxu0 0
        %384 = vmatprep.subr.bf16.mxu0 0
        %385 = vmatpush1.bf16.msra.mxu0 0
        %386 = vmatprep.subr.bf16.mxu0 0
        %387 = vmatpush1.bf16.msra.mxu0 0
        %388 = vmatprep.subr.bf16.mxu0 0
        %389 = vmatpush1.bf16.msra.mxu0 0
        %390 = vmatprep.subr.bf16.mxu0 0
        %391 = vmatpush1.bf16.msra.mxu0 0
        %392 = vmatprep.subr.bf16.mxu0 0
        %393 = vmatpush1.bf16.msra.mxu0 0
        %394 = vmatprep.subr.bf16.mxu0 0
        %395 = vmatpush1.bf16.msra.mxu0 0
        %396 = vmatprep.subr.bf16.mxu0 0
        %397 = vmatpush1.bf16.msra.mxu0 0
        %398 = vmatprep.subr.bf16.mxu0 0
        %399 = vmatpush1.bf16.msra.mxu0 0
        %400 = vmatprep.subr.bf16.mxu0 0
        %401 = vmatpush1.bf16.msra.mxu0 0
        %402 = vmatprep.subr.bf16.mxu0 0
        %403 = vmatpush1.bf16.msra.mxu0 0
        %404 = vmatprep.mubr.bf16.mxu0 0
        %405 = vmatmul.mubr.bf16.gmra.mrb[0].mxu0 %v370
        %v406 = vpop.f32.mrb[0].mxu0
        %v407 = vadd.f32 %v354, %v406
        %v408 = vpop.f32.mrb[0].mxu0
        %v409 = vpop.f32.mrb[0].mxu0
        %v410 = vpop.f32.mrb[0].mxu0
        %411 = vdwg.mxu0
        %v412 = vpack.c.bf16 %v407, %v407
        %vm413 = vcmask 257024
        %414 = vst.msk [vmem:[#allocation2] sm:$0xf] %vm413, %v412
        %vm415 = vcmask 7168
        %416 = vst.msk [vmem:[#allocation3] sm:$0xff] %vm415, -1e+30
        %417 = vst.msk [vmem:[#allocation3 + $0x8] sm:$0xff] %vm415, -1e+30
        %418 = vst.msk [vmem:[#allocation3 + $0x10] sm:$0xff] %vm415, -1e+30
        %419 = vst.msk [vmem:[#allocation3 + $0x18] sm:$0xff] %vm415, -1e+30
        %420 = vst.msk [vmem:[#allocation4] sm:$0xff] %vm415, 0.0
        %421 = vst.msk [vmem:[#allocation4 + $0x8] sm:$0xff] %vm415, 0.0
        %422 = vst.msk [vmem:[#allocation4 + $0x10] sm:$0xff] %vm415, 0.0
        %423 = vst.msk [vmem:[#allocation4 + $0x18] sm:$0xff] %vm415, 0.0
        %424 = vst.msk [vmem:[#allocation5] sm:$0xff] %vm368, 0.0
      $region52: #{forward.17} parent=47 // pred_fallthru
        _
      %v425 = vld [vmem:[%s334] sm:$0xf]
      %v426 = vld [vmem:[%s5] sm:$0xf]
      %v427 = vld [vmem:[%s5 + $0x4] sm:$0xf]
      %v428 = vld [vmem:[%s5 + $0x8] sm:$0xf]
      %v429 = vld [vmem:[%s5 + $0xc] sm:$0xf]
      %v430 = vld [vmem:[%s6] sm:$0x1]
      %v432 = vlaneseq
      %v433 = vshrl.u32 %v432, 7
      %v434 = vsub.s32 0, %v433
      %v435 = vrot.slane %v430, %v434
      %v441 = vunpack.c.l.b16 %v426
      %v442 = vunpack.c.l.b16 %v427
      %v443 = vunpack.c.l.b16 %v428
      %v444 = vunpack.c.l.b16 %v429
      %v445 = vpack.c.b16 %v442, %v441
      %v446 = vpack.c.b16 %v444, %v443
      %vm449 = vcmask 261120
      %v451 = vsel %vm449, %v425, 0
      %453 = vmatprep.subr.bf16.mxu0 0
      %454 = vmatpush1.bf16.msra.mxu0 %v445
      %455 = vmatprep.subr.bf16.mxu0 0
      %456 = vmatpush1.bf16.msra.mxu0 %v446
      %457 = vmatprep.subr.bf16.mxu0 0
      %458 = vmatpush1.bf16.msra.mxu0 0
      %459 = vmatprep.subr.bf16.mxu0 0
      %460 = vmatpush1.bf16.msra.mxu0 0
      %461 = vmatprep.subr.bf16.mxu0 0
      %462 = vmatpush1.bf16.msra.mxu0 0
      %463 = vmatprep.subr.bf16.mxu0 0
      %464 = vmatpush1.bf16.msra.mxu0 0
      %465 = vmatprep.subr.bf16.mxu0 0
      %466 = vmatpush1.bf16.msra.mxu0 0
      %467 = vmatprep.subr.bf16.mxu0 0
      %468 = vmatpush1.bf16.msra.mxu0 0
      %469 = vmatprep.subr.bf16.mxu0 0
      %470 = vmatpush1.bf16.msra.mxu0 0
      %471 = vmatprep.subr.bf16.mxu0 0
      %472 = vmatpush1.bf16.msra.mxu0 0
      %473 = vmatprep.subr.bf16.mxu0 0
      %474 = vmatpush1.bf16.msra.mxu0 0
      %475 = vmatprep.subr.bf16.mxu0 0
      %476 = vmatpush1.bf16.msra.mxu0 0
      %477 = vmatprep.subr.bf16.mxu0 0
      %478 = vmatpush1.bf16.msra.mxu0 0
      %479 = vmatprep.subr.bf16.mxu0 0
      %480 = vmatpush1.bf16.msra.mxu0 0
      %481 = vmatprep.subr.bf16.mxu0 0
      %482 = vmatpush1.bf16.msra.mxu0 0
      %483 = vmatprep.subr.bf16.mxu0 0
      %484 = vmatpush1.bf16.msra.mxu0 0
      %485 = vmatprep.mubr.bf16.mxu0 0
      %486 = vmatmul.mubr.bf16.gmra.mrb[0].mxu0 %v451
      %v487 = vpop.f32.mrb[0].mxu0
      %v488 = vadd.f32 %v435, %v487
      %v489 = vpop.f32.mrb[0].mxu0
      %v490 = vpop.f32.mrb[0].mxu0
      %v491 = vpop.f32.mrb[0].mxu0
      %492 = vdwg.mxu0
      %v493 = vpack.c.bf16 %v488, %v488
      %v494 = vld [vmem:[%s323] sm:$0x1]
      %vm495 = vcmp.ne.s32.totalorder %v494, 0
      %v496 = vsel %vm495, 1, 0
      %v497 = vlaneseq
      %v498 = vshrl.u32 %v497, 7
      %v499 = vsub.s32 0, %v498
      %v500 = vrot.slane %v496, %v499
      %vm501 = vcmp.eq.s32.totalorder %v500, 1
      %v502 = vsel %vm501, -1e+09, 0.0
      %v503 = vld [vmem:[#allocation2] sm:$0xf]
      %vm504 = vcmask 64512
      %v506 = vsel %vm504, %v503, 0
      %v509 = vsel %vm504, %v493, 0
      %511 = vmatprep.subr.bf16.mxu0 0
      %512 = vmatpush1.bf16.xpose.msra.mxu0 %v509
      %513 = vmatprep.subr.bf16.mxu0 0
      %514 = vmatpush1.bf16.xpose.msra.mxu0 0
      %515 = vmatprep.subr.bf16.mxu0 0
      %516 = vmatpush1.bf16.xpose.msra.mxu0 0
      %517 = vmatprep.subr.bf16.mxu0 0
      %518 = vmatpush1.bf16.xpose.msra.mxu0 0
      %519 = vmatprep.subr.bf16.mxu0 0
      %520 = vmatpush1.bf16.xpose.msra.mxu0 0
      %521 = vmatprep.subr.bf16.mxu0 0
      %522 = vmatpush1.bf16.xpose.msra.mxu0 0
      %523 = vmatprep.subr.bf16.mxu0 0
      %524 = vmatpush1.bf16.xpose.msra.mxu0 0
      %525 = vmatprep.subr.bf16.mxu0 0
      %526 = vmatpush1.bf16.xpose.msra.mxu0 0
      %527 = vmatprep.subr.bf16.mxu0 0
      %528 = vmatpush1.bf16.xpose.msra.mxu0 0
      %529 = vmatprep.subr.bf16.mxu0 0
      %530 = vmatpush1.bf16.xpose.msra.mxu0 0
      %531 = vmatprep.subr.bf16.mxu0 0
      %532 = vmatpush1.bf16.xpose.msra.mxu0 0
      %533 = vmatprep.subr.bf16.mxu0 0
      %534 = vmatpush1.bf16.xpose.msra.mxu0 0
      %535 = vmatprep.subr.bf16.mxu0 0
      %536 = vmatpush1.bf16.xpose.msra.mxu0 0
      %537 = vmatprep.subr.bf16.mxu0 0
      %538 = vmatpush1.bf16.xpose.msra.mxu0 0
      %539 = vmatprep.subr.bf16.mxu0 0
      %540 = vmatpush1.bf16.xpose.msra.mxu0 0
      %541 = vmatprep.subr.bf16.mxu0 0
      %542 = vmatpush1.bf16.xpose.msra.mxu0 0
      %543 = vmatprep.mubr.bf16.mxu0 0
      %544 = vmatmul.mubr.bf16.gmra.mrb[0].mxu0 %v506
      %v545 = vpop.f32.mrb[0].mxu0
      %v546 = vadd.f32 0.0, %v545
      %v547 = vpop.f32.mrb[0].mxu0
      %v548 = vpop.f32.mrb[0].mxu0
      %v549 = vpop.f32.mrb[0].mxu0
      %550 = vdwg.mxu0
      %v551 = vmul.f32 %v546, 0.35355338
      %v552 = vadd.f32 %v551, %v502
      %v553 = vld [vmem:[#allocation3] sm:$0xff]
      %v554 = vsel %vm504, %v552, -inf
      %555 = vmax.xlane.f32.xlu0 %v554
      %v556 = vpop.xlane.xlu0 %555
      %v557 = vmax.f32 %v553, %v556
      %v558 = vsub.f32 %v553, %v557
      %v559 = vmul.f32 %v558, 1.442695
      %v560 = vpow.pop %v559
      %562 = vset.pattern.permute.xlu0 0
      %563 = vperm.xlu0 %562, %v557
      %v564 = vpop.permute.xlu0 %563
      %v566 = vsub.f32 %v552, %v564
      %v567 = vmul.f32 %v566, 1.442695
      %v568 = vpow.pop %v567
      %v569 = vld [vmem:[#allocation4] sm:$0xff]
      %v570 = vmul.f32 %v560, %v569
      %v571 = vsel %vm504, %v568, 0.0
      %572 = vadd.xlane.f32.xlu0 %v571
      %v573 = vpop.xlane.xlu0 %572
      %v574 = vadd.f32 %v570, %v573
      %vm575 = vcmask 7168
      %576 = vst.msk [vmem:[#allocation4] sm:$0xff] %vm575, %v574
      %v577 = vld [vmem:[#allocation5] sm:$0xff]
      %579 = vset.pattern.permute.xlu0 0
      %580 = vperm.xlu0 %579, %v560
      %v581 = vpop.permute.xlu0 %580
      %v583 = vmul.f32 %v581, %v577
      %v584 = vpack.c.bf16 %v568, %v568
      %586 = vrot.lane.b32.xlu0 %v493, 96
      %v587 = vpop.permute.xlu0 %586
      %v589 = vsel %vm504, %v584, 0
      %vm591 = vcmask 1043456
      %v593 = vsel %vm591, %v587, 0
      %595 = vmatprep.subr.bf16.mxu0 0
      %596 = vmatpush1.bf16.msra.mxu0 %v593
      %597 = vmatprep.subr.bf16.mxu0 0
      %598 = vmatpush1.bf16.msra.mxu0 0
      %599 = vmatprep.subr.bf16.mxu0 0
      %600 = vmatpush1.bf16.msra.mxu0 0
      %601 = vmatprep.subr.bf16.mxu0 0
      %602 = vmatpush1.bf16.msra.mxu0 0
      %603 = vmatprep.subr.bf16.mxu0 0
      %604 = vmatpush1.bf16.msra.mxu0 0
      %605 = vmatprep.subr.bf16.mxu0 0
      %606 = vmatpush1.bf16.msra.mxu0 0
      %607 = vmatprep.subr.bf16.mxu0 0
      %608 = vmatpush1.bf16.msra.mxu0 0
      %609 = vmatprep.subr.bf16.mxu0 0
      %610 = vmatpush1.bf16.msra.mxu0 0
      %611 = vmatprep.subr.bf16.mxu0 0
      %612 = vmatpush1.bf16.msra.mxu0 0
      %613 = vmatprep.subr.bf16.mxu0 0
      %614 = vmatpush1.bf16.msra.mxu0 0
      %615 = vmatprep.subr.bf16.mxu0 0
      %616 = vmatpush1.bf16.msra.mxu0 0
      %617 = vmatprep.subr.bf16.mxu0 0
      %618 = vmatpush1.bf16.msra.mxu0 0
      %619 = vmatprep.subr.bf16.mxu0 0
      %620 = vmatpush1.bf16.msra.mxu0 0
      %621 = vmatprep.subr.bf16.mxu0 0
      %622 = vmatpush1.bf16.msra.mxu0 0
      %623 = vmatprep.subr.bf16.mxu0 0
      %624 = vmatpush1.bf16.msra.mxu0 0
      %625 = vmatprep.subr.bf16.mxu0 0
      %626 = vmatpush1.bf16.msra.mxu0 0
      %627 = vmatprep.mubr.bf16.mxu0 0
      %628 = vmatmul.mubr.bf16.gmra.mrb[0].mxu0 %v589
      %v629 = vpop.f32.mrb[0].mxu0
      %v630 = vadd.f32 0.0, %v629
      %v631 = vpop.f32.mrb[0].mxu0
      %v632 = vpop.f32.mrb[0].mxu0
      %v633 = vpop.f32.mrb[0].mxu0
      %634 = vdwg.mxu0
      %v635 = vadd.f32 %v583, %v630
      %636 = vst.msk [vmem:[#allocation5] sm:$0xff] %vm504, %v635
      %637 = vst.msk [vmem:[#allocation3] sm:$0xff] %vm575, %v557
      %v638 = vld [vmem:[#allocation2] sm:$0xf]
      %v640 = vunpack.c.l.b16 %v638
      %v641 = vpack.c.b16 %v640, %v640
      %642 = vrot.lane.b32.xlu0 %v641, 120
      %v643 = vpop.permute.xlu0 %642
      %644 = vrot.lane.b32.xlu0 %v493, 120
      %v645 = vpop.permute.xlu0 %644
      %v647 = vsel %vm504, %v643, 0
      %v650 = vsel %vm504, %v645, 0
      %652 = vmatprep.subr.bf16.mxu0 0
      %653 = vmatpush1.bf16.xpose.msra.mxu0 %v650
      %654 = vmatprep.subr.bf16.mxu0 0
      %655 = vmatpush1.bf16.xpose.msra.mxu0 0
      %656 = vmatprep.subr.bf16.mxu0 0
      %657 = vmatpush1.bf16.xpose.msra.mxu0 0
      %658 = vmatprep.subr.bf16.mxu0 0
      %659 = vmatpush1.bf16.xpose.msra.mxu0 0
      %660 = vmatprep.subr.bf16.mxu0 0
      %661 = vmatpush1.bf16.xpose.msra.mxu0 0
      %662 = vmatprep.subr.bf16.mxu0 0
      %663 = vmatpush1.bf16.xpose.msra.mxu0 0
      %664 = vmatprep.subr.bf16.mxu0 0
      %665 = vmatpush1.bf16.xpose.msra.mxu0 0
      %666 = vmatprep.subr.bf16.mxu0 0
      %667 = vmatpush1.bf16.xpose.msra.mxu0 0
      %668 = vmatprep.subr.bf16.mxu0 0
      %669 = vmatpush1.bf16.xpose.msra.mxu0 0
      %670 = vmatprep.subr.bf16.mxu0 0
      %671 = vmatpush1.bf16.xpose.msra.mxu0 0
      %672 = vmatprep.subr.bf16.mxu0 0
      %673 = vmatpush1.bf16.xpose.msra.mxu0 0
      %674 = vmatprep.subr.bf16.mxu0 0
      %675 = vmatpush1.bf16.xpose.msra.mxu0 0
      %676 = vmatprep.subr.bf16.mxu0 0
      %677 = vmatpush1.bf16.xpose.msra.mxu0 0
      %678 = vmatprep.subr.bf16.mxu0 0
      %679 = vmatpush1.bf16.xpose.msra.mxu0 0
      %680 = vmatprep.subr.bf16.mxu0 0
      %681 = vmatpush1.bf16.xpose.msra.mxu0 0
      %682 = vmatprep.subr.bf16.mxu0 0
      %683 = vmatpush1.bf16.xpose.msra.mxu0 0
      %684 = vmatprep.mubr.bf16.mxu0 0
      %685 = vmatmul.mubr.bf16.gmra.mrb[0].mxu0 %v647
      %v686 = vpop.f32.mrb[0].mxu0
      %v687 = vadd.f32 0.0, %v686
      %v688 = vpop.f32.mrb[0].mxu0
      %v689 = vpop.f32.mrb[0].mxu0
      %v690 = vpop.f32.mrb[0].mxu0
      %691 = vdwg.mxu0
      %v692 = vmul.f32 %v687, 0.35355338
      %v693 = vadd.f32 %v692, %v502
      %s694 = scalar_lea.vmem [#allocation3], 8
      %v695 = vld [vmem:[%s694] sm:$0xff]
      %v696 = vsel %vm504, %v693, -inf
      %697 = vmax.xlane.f32.xlu0 %v696
      %v698 = vpop.xlane.xlu0 %697
      %v699 = vmax.f32 %v695, %v698
      %v700 = vsub.f32 %v695, %v699
      %v701 = vmul.f32 %v700, 1.442695
      %v702 = vpow.pop %v701
      %704 = vset.pattern.permute.xlu0 0
      %705 = vperm.xlu0 %704, %v699
      %v706 = vpop.permute.xlu0 %705
      %v708 = vsub.f32 %v693, %v706
      %v709 = vmul.f32 %v708, 1.442695
      %v710 = vpow.pop %v709
      %s711 = scalar_lea.vmem [#allocation4], 8
      %v712 = vld [vmem:[%s711] sm:$0xff]
      %v713 = vmul.f32 %v702, %v712
      %v714 = vsel %vm504, %v710, 0.0
      %715 = vadd.xlane.f32.xlu0 %v714
      %v716 = vpop.xlane.xlu0 %715
      %v717 = vadd.f32 %v713, %v716
      %718 = vst.msk [vmem:[%s711] sm:$0xff] %vm575, %v717
      %v719 = vld [vmem:[#allocation5] sm:$0xff]
      %721 = vset.pattern.permute.xlu0 0
      %722 = vperm.xlu0 %721, %v702
      %v723 = vpop.permute.xlu0 %722
      %v725 = vmul.f32 %v723, %v719
      %v726 = vpack.c.bf16 %v710, %v710
      %727 = vrot.lane.b32.xlu0 %v493, 88
      %v728 = vpop.permute.xlu0 %727
      %v730 = vsel %vm504, %v726, 0
      %v733 = vsel %vm591, %v728, 0
      %735 = vmatprep.subr.bf16.mxu0 0
      %736 = vmatpush1.bf16.msra.mxu0 %v733
      %737 = vmatprep.subr.bf16.mxu0 0
      %738 = vmatpush1.bf16.msra.mxu0 0
      %739 = vmatprep.subr.bf16.mxu0 0
      %740 = vmatpush1.bf16.msra.mxu0 0
      %741 = vmatprep.subr.bf16.mxu0 0
      %742 = vmatpush1.bf16.msra.mxu0 0
      %743 = vmatprep.subr.bf16.mxu0 0
      %744 = vmatpush1.bf16.msra.mxu0 0
      %745 = vmatprep.subr.bf16.mxu0 0
      %746 = vmatpush1.bf16.msra.mxu0 0
      %747 = vmatprep.subr.bf16.mxu0 0
      %748 = vmatpush1.bf16.msra.mxu0 0
      %749 = vmatprep.subr.bf16.mxu0 0
      %750 = vmatpush1.bf16.msra.mxu0 0
      %751 = vmatprep.subr.bf16.mxu0 0
      %752 = vmatpush1.bf16.msra.mxu0 0
      %753 = vmatprep.subr.bf16.mxu0 0
      %754 = vmatpush1.bf16.msra.mxu0 0
      %755 = vmatprep.subr.bf16.mxu0 0
      %756 = vmatpush1.bf16.msra.mxu0 0
      %757 = vmatprep.subr.bf16.mxu0 0
      %758 = vmatpush1.bf16.msra.mxu0 0
      %759 = vmatprep.subr.bf16.mxu0 0
      %760 = vmatpush1.bf16.msra.mxu0 0
      %761 = vmatprep.subr.bf16.mxu0 0
      %762 = vmatpush1.bf16.msra.mxu0 0
      %763 = vmatprep.subr.bf16.mxu0 0
      %764 = vmatpush1.bf16.msra.mxu0 0
      %765 = vmatprep.subr.bf16.mxu0 0
      %766 = vmatpush1.bf16.msra.mxu0 0
      %767 = vmatprep.mubr.bf16.mxu0 0
      %768 = vmatmul.mubr.bf16.gmra.mrb[0].mxu0 %v730
      %v769 = vpop.f32.mrb[0].mxu0
      %v770 = vadd.f32 0.0, %v769
      %v771 = vpop.f32.mrb[0].mxu0
      %v772 = vpop.f32.mrb[0].mxu0
      %v773 = vpop.f32.mrb[0].mxu0
      %774 = vdwg.mxu0
      %776 = vrot.lane.b32.xlu0 %v770, 8
      %v777 = vpop.permute.xlu0 %776
      %v779 = vadd.f32 %v725, %v777
      %vm780 = vcmask 130112
      %781 = vst.msk [vmem:[#allocation5] sm:$0xff] %vm780, %v779
      %782 = vst.msk [vmem:[%s694] sm:$0xff] %vm575, %v699
      %v783 = vld [vmem:[#allocation2] sm:$0xf]
      %v785 = vunpack.c.l.b16 %v783
      %v786 = vpack.c.b16 %v785, %v785
      %787 = vrot.lane.b32.xlu0 %v786, 112
      %v788 = vpop.permute.xlu0 %787
      %789 = vrot.lane.b32.xlu0 %v493, 112
      %v790 = vpop.permute.xlu0 %789
      %v792 = vsel %vm504, %v788, 0
      %v795 = vsel %vm504, %v790, 0
      %797 = vmatprep.subr.bf16.mxu0 0
      %798 = vmatpush1.bf16.xpose.msra.mxu0 %v795
      %799 = vmatprep.subr.bf16.mxu0 0
      %800 = vmatpush1.bf16.xpose.msra.mxu0 0
      %801 = vmatprep.subr.bf16.mxu0 0
      %802 = vmatpush1.bf16.xpose.msra.mxu0 0
      %803 = vmatprep.subr.bf16.mxu0 0
      %804 = vmatpush1.bf16.xpose.msra.mxu0 0
      %805 = vmatprep.subr.bf16.mxu0 0
      %806 = vmatpush1.bf16.xpose.msra.mxu0 0
      %807 = vmatprep.subr.bf16.mxu0 0
      %808 = vmatpush1.bf16.xpose.msra.mxu0 0
      %809 = vmatprep.subr.bf16.mxu0 0
      %810 = vmatpush1.bf16.xpose.msra.mxu0 0
      %811 = vmatprep.subr.bf16.mxu0 0
      %812 = vmatpush1.bf16.xpose.msra.mxu0 0
      %813 = vmatprep.subr.bf16.mxu0 0
      %814 = vmatpush1.bf16.xpose.msra.mxu0 0
      %815 = vmatprep.subr.bf16.mxu0 0
      %816 = vmatpush1.bf16.xpose.msra.mxu0 0
      %817 = vmatprep.subr.bf16.mxu0 0
      %818 = vmatpush1.bf16.xpose.msra.mxu0 0
      %819 = vmatprep.subr.bf16.mxu0 0
      %820 = vmatpush1.bf16.xpose.msra.mxu0 0
      %821 = vmatprep.subr.bf16.mxu0 0
      %822 = vmatpush1.bf16.xpose.msra.mxu0 0
      %823 = vmatprep.subr.bf16.mxu0 0
      %824 = vmatpush1.bf16.xpose.msra.mxu0 0
      %825 = vmatprep.subr.bf16.mxu0 0
      %826 = vmatpush1.bf16.xpose.msra.mxu0 0
      %827 = vmatprep.subr.bf16.mxu0 0
      %828 = vmatpush1.bf16.xpose.msra.mxu0 0
      %829 = vmatprep.mubr.bf16.mxu0 0
      %830 = vmatmul.mubr.bf16.gmra.mrb[0].mxu0 %v792
      %v831 = vpop.f32.mrb[0].mxu0
      %v832 = vadd.f32 0.0, %v831
      %v833 = vpop.f32.mrb[0].mxu0
      %v834 = vpop.f32.mrb[0].mxu0
      %v835 = vpop.f32.mrb[0].mxu0
      %836 = vdwg.mxu0
      %v837 = vmul.f32 %v832, 0.35355338
      %v838 = vadd.f32 %v837, %v502
      %s839 = scalar_lea.vmem [#allocation3], 16
      %v840 = vld [vmem:[%s839] sm:$0xff]
      %v841 = vsel %vm504, %v838, -inf
      %842 = vmax.xlane.f32.xlu0 %v841
      %v843 = vpop.xlane.xlu0 %842
      %v844 = vmax.f32 %v840, %v843
      %v845 = vsub.f32 %v840, %v844
      %v846 = vmul.f32 %v845, 1.442695
      %v847 = vpow.pop %v846
      %849 = vset.pattern.permute.xlu0 0
      %850 = vperm.xlu0 %849, %v844
      %v851 = vpop.permute.xlu0 %850
      %v853 = vsub.f32 %v838, %v851
      %v854 = vmul.f32 %v853, 1.442695
      %v855 = vpow.pop %v854
      %s856 = scalar_lea.vmem [#allocation4], 16
      %v857 = vld [vmem:[%s856] sm:$0xff]
      %v858 = vmul.f32 %v847, %v857
      %v859 = vsel %vm504, %v855, 0.0
      %860 = vadd.xlane.f32.xlu0 %v859
      %v861 = vpop.xlane.xlu0 %860
      %v862 = vadd.f32 %v858, %v861
      %863 = vst.msk [vmem:[%s856] sm:$0xff] %vm575, %v862
      %v864 = vld [vmem:[#allocation5] sm:$0xff]
      %866 = vset.pattern.permute.xlu0 0
      %867 = vperm.xlu0 %866, %v847
      %v868 = vpop.permute.xlu0 %867
      %v870 = vmul.f32 %v868, %v864
      %v871 = vpack.c.bf16 %v855, %v855
      %872 = vrot.lane.b32.xlu0 %v493, 80
      %v873 = vpop.permute.xlu0 %872
      %v875 = vsel %vm504, %v871, 0
      %v878 = vsel %vm591, %v873, 0
      %880 = vmatprep.subr.bf16.mxu0 0
      %881 = vmatpush1.bf16.msra.mxu0 %v878
      %882 = vmatprep.subr.bf16.mxu0 0
      %883 = vmatpush1.bf16.msra.mxu0 0
      %884 = vmatprep.subr.bf16.mxu0 0
      %885 = vmatpush1.bf16.msra.mxu0 0
      %886 = vmatprep.subr.bf16.mxu0 0
      %887 = vmatpush1.bf16.msra.mxu0 0
      %888 = vmatprep.subr.bf16.mxu0 0
      %889 = vmatpush1.bf16.msra.mxu0 0
      %890 = vmatprep.subr.bf16.mxu0 0
      %891 = vmatpush1.bf16.msra.mxu0 0
      %892 = vmatprep.subr.bf16.mxu0 0
      %893 = vmatpush1.bf16.msra.mxu0 0
      %894 = vmatprep.subr.bf16.mxu0 0
      %895 = vmatpush1.bf16.msra.mxu0 0
      %896 = vmatprep.subr.bf16.mxu0 0
      %897 = vmatpush1.bf16.msra.mxu0 0
      %898 = vmatprep.subr.bf16.mxu0 0
      %899 = vmatpush1.bf16.msra.mxu0 0
      %900 = vmatprep.subr.bf16.mxu0 0
      %901 = vmatpush1.bf16.msra.mxu0 0
      %902 = vmatprep.subr.bf16.mxu0 0
      %903 = vmatpush1.bf16.msra.mxu0 0
      %904 = vmatprep.subr.bf16.mxu0 0
      %905 = vmatpush1.bf16.msra.mxu0 0
      %906 = vmatprep.subr.bf16.mxu0 0
      %907 = vmatpush1.bf16.msra.mxu0 0
      %908 = vmatprep.subr.bf16.mxu0 0
      %909 = vmatpush1.bf16.msra.mxu0 0
      %910 = vmatprep.subr.bf16.mxu0 0
      %911 = vmatpush1.bf16.msra.mxu0 0
      %912 = vmatprep.mubr.bf16.mxu0 0
      %913 = vmatmul.mubr.bf16.gmra.mrb[0].mxu0 %v875
      %v914 = vpop.f32.mrb[0].mxu0
      %v915 = vadd.f32 0.0, %v914
      %v916 = vpop.f32.mrb[0].mxu0
      %v917 = vpop.f32.mrb[0].mxu0
      %v918 = vpop.f32.mrb[0].mxu0
      %919 = vdwg.mxu0
      %921 = vrot.lane.b32.xlu0 %v915, 16
      %v922 = vpop.permute.xlu0 %921
      %v924 = vadd.f32 %v870, %v922
      %vm925 = vcmask 195712
      %926 = vst.msk [vmem:[#allocation5] sm:$0xff] %vm925, %v924
      %927 = vst.msk [vmem:[%s839] sm:$0xff] %vm575, %v844
      %v928 = vld [vmem:[#allocation2] sm:$0xf]
      %v930 = vunpack.c.l.b16 %v928
      %v931 = vpack.c.b16 %v930, %v930
      %932 = vrot.lane.b32.xlu0 %v931, 104
      %v933 = vpop.permute.xlu0 %932
      %934 = vrot.lane.b32.xlu0 %v493, 104
      %v935 = vpop.permute.xlu0 %934
      %v937 = vsel %vm504, %v933, 0
      %v940 = vsel %vm504, %v935, 0
      %942 = vmatprep.subr.bf16.mxu0 0
      %943 = vmatpush1.bf16.xpose.msra.mxu0 %v940
      %944 = vmatprep.subr.bf16.mxu0 0
      %945 = vmatpush1.bf16.xpose.msra.mxu0 0
      %946 = vmatprep.subr.bf16.mxu0 0
      %947 = vmatpush1.bf16.xpose.msra.mxu0 0
      %948 = vmatprep.subr.bf16.mxu0 0
      %949 = vmatpush1.bf16.xpose.msra.mxu0 0
      %950 = vmatprep.subr.bf16.mxu0 0
      %951 = vmatpush1.bf16.xpose.msra.mxu0 0
      %952 = vmatprep.subr.bf16.mxu0 0
      %953 = vmatpush1.bf16.xpose.msra.mxu0 0
      %954 = vmatprep.subr.bf16.mxu0 0
      %955 = vmatpush1.bf16.xpose.msra.mxu0 0
      %956 = vmatprep.subr.bf16.mxu0 0
      %957 = vmatpush1.bf16.xpose.msra.mxu0 0
      %958 = vmatprep.subr.bf16.mxu0 0
      %959 = vmatpush1.bf16.xpose.msra.mxu0 0
      %960 = vmatprep.subr.bf16.mxu0 0
      %961 = vmatpush1.bf16.xpose.msra.mxu0 0
      %962 = vmatprep.subr.bf16.mxu0 0
      %963 = vmatpush1.bf16.xpose.msra.mxu0 0
      %964 = vmatprep.subr.bf16.mxu0 0
      %965 = vmatpush1.bf16.xpose.msra.mxu0 0
      %966 = vmatprep.subr.bf16.mxu0 0
      %967 = vmatpush1.bf16.xpose.msra.mxu0 0
      %968 = vmatprep.subr.bf16.mxu0 0
      %969 = vmatpush1.bf16.xpose.msra.mxu0 0
      %970 = vmatprep.subr.bf16.mxu0 0
      %971 = vmatpush1.bf16.xpose.msra.mxu0 0
      %972 = vmatprep.subr.bf16.mxu0 0
      %973 = vmatpush1.bf16.xpose.msra.mxu0 0
      %974 = vmatprep.mubr.bf16.mxu0 0
      %975 = vmatmul.mubr.bf16.gmra.mrb[0].mxu0 %v937
      %v976 = vpop.f32.mrb[0].mxu0
      %v977 = vadd.f32 0.0, %v976
      %v978 = vpop.f32.mrb[0].mxu0
      %v979 = vpop.f32.mrb[0].mxu0
      %v980 = vpop.f32.mrb[0].mxu0
      %981 = vdwg.mxu0
      %v982 = vmul.f32 %v977, 0.35355338
      %v983 = vadd.f32 %v982, %v502
      %s984 = scalar_lea.vmem [#allocation3], 24
      %v985 = vld [vmem:[%s984] sm:$0xff]
      %v986 = vsel %vm504, %v983, -inf
      %987 = vmax.xlane.f32.xlu0 %v986
      %v988 = vpop.xlane.xlu0 %987
      %v989 = vmax.f32 %v985, %v988
      %v990 = vsub.f32 %v985, %v989
      %v991 = vmul.f32 %v990, 1.442695
      %v992 = vpow.pop %v991
      %994 = vset.pattern.permute.xlu0 0
      %995 = vperm.xlu0 %994, %v989
      %v996 = vpop.permute.xlu0 %995
      %v998 = vsub.f32 %v983, %v996
      %v999 = vmul.f32 %v998, 1.442695
      %v1000 = vpow.pop %v999
      %s1001 = scalar_lea.vmem [#allocation4], 24
      %v1002 = vld [vmem:[%s1001] sm:$0xff]
      %v1003 = vmul.f32 %v992, %v1002
      %v1004 = vsel %vm504, %v1000, 0.0
      %1005 = vadd.xlane.f32.xlu0 %v1004
      %v1006 = vpop.xlane.xlu0 %1005
      %v1007 = vadd.f32 %v1003, %v1006
      %1008 = vst.msk [vmem:[%s1001] sm:$0xff] %vm575, %v1007
      %v1009 = vld [vmem:[#allocation5] sm:$0xff]
      %1011 = vset.pattern.permute.xlu0 0
      %1012 = vperm.xlu0 %1011, %v992
      %v1013 = vpop.permute.xlu0 %1012
      %v1015 = vmul.f32 %v1013, %v1009
      %v1016 = vpack.c.bf16 %v1000, %v1000
      %1017 = vrot.lane.b32.xlu0 %v493, 72
      %v1018 = vpop.permute.xlu0 %1017
      %v1020 = vsel %vm504, %v1016, 0
      %v1023 = vsel %vm591, %v1018, 0
      %1025 = vmatprep.subr.bf16.mxu0 0
      %1026 = vmatpush1.bf16.msra.mxu0 %v1023
      %1027 = vmatprep.subr.bf16.mxu0 0
      %1028 = vmatpush1.bf16.msra.mxu0 0
      %1029 = vmatprep.subr.bf16.mxu0 0
      %1030 = vmatpush1.bf16.msra.mxu0 0
      %1031 = vmatprep.subr.bf16.mxu0 0
      %1032 = vmatpush1.bf16.msra.mxu0 0
      %1033 = vmatprep.subr.bf16.mxu0 0
      %1034 = vmatpush1.bf16.msra.mxu0 0
      %1035 = vmatprep.subr.bf16.mxu0 0
      %1036 = vmatpush1.bf16.msra.mxu0 0
      %1037 = vmatprep.subr.bf16.mxu0 0
      %1038 = vmatpush1.bf16.msra.mxu0 0
      %1039 = vmatprep.subr.bf16.mxu0 0
      %1040 = vmatpush1.bf16.msra.mxu0 0
      %1041 = vmatprep.subr.bf16.mxu0 0
      %1042 = vmatpush1.bf16.msra.mxu0 0
      %1043 = vmatprep.subr.bf16.mxu0 0
      %1044 = vmatpush1.bf16.msra.mxu0 0
      %1045 = vmatprep.subr.bf16.mxu0 0
      %1046 = vmatpush1.bf16.msra.mxu0 0
      %1047 = vmatprep.subr.bf16.mxu0 0
      %1048 = vmatpush1.bf16.msra.mxu0 0
      %1049 = vmatprep.subr.bf16.mxu0 0
      %1050 = vmatpush1.bf16.msra.mxu0 0
      %1051 = vmatprep.subr.bf16.mxu0 0
      %1052 = vmatpush1.bf16.msra.mxu0 0
      %1053 = vmatprep.subr.bf16.mxu0 0
      %1054 = vmatpush1.bf16.msra.mxu0 0
      %1055 = vmatprep.subr.bf16.mxu0 0
      %1056 = vmatpush1.bf16.msra.mxu0 0
      %1057 = vmatprep.mubr.bf16.mxu0 0
      %1058 = vmatmul.mubr.bf16.gmra.mrb[0].mxu0 %v1020
      %v1059 = vpop.f32.mrb[0].mxu0
      %v1060 = vadd.f32 0.0, %v1059
      %v1061 = vpop.f32.mrb[0].mxu0
      %v1062 = vpop.f32.mrb[0].mxu0
      %v1063 = vpop.f32.mrb[0].mxu0
      %1064 = vdwg.mxu0
      %1066 = vrot.lane.b32.xlu0 %v1060, 24
      %v1067 = vpop.permute.xlu0 %1066
      %v1069 = vadd.f32 %v1015, %v1067
      %vm1070 = vcmask 261312
      %1071 = vst.msk [vmem:[#allocation5] sm:$0xff] %vm1070, %v1069
      %1072 = vst.msk [vmem:[%s984] sm:$0xff] %vm575, %v989
      // Predicated region
      $region53: #{forward.17} parent=47 // pred_check
        %p1073 = pneg %p340
      $region54: #{forward.17} parent=47 // pred_check_branch
        %1075 = sbr.rel (%p1073) target = $region56
      $region55: #{forward.17} parent=47 // pred_region
        %v1076 = vld [vmem:[#allocation5] sm:$0xff]
        %v1077 = vld [vmem:[#allocation4] sm:$0xff]
        %v1078 = vrcp.pop %v1077
        %1080 = vset.pattern.permute.xlu0 0
        %1081 = vperm.xlu0 %1080, %v1078
        %v1082 = vpop.permute.xlu0 %1081
        %v1084 = vmul.f32 %v1076, %v1082
        %1085 = vst.msk [vmem:[#allocation5] sm:$0xff] %vm504, %v1084
        %v1086 = vld [vmem:[#allocation5] sm:$0xff]
        %v1087 = vld [vmem:[%s711] sm:$0xff]
        %v1088 = vrcp.pop %v1087
        %1090 = vset.pattern.permute.xlu0 0
        %1091 = vperm.xlu0 %1090, %v1088
        %v1092 = vpop.permute.xlu0 %1091
        %v1094 = vmul.f32 %v1086, %v1092
        %1095 = vst.msk [vmem:[#allocation5] sm:$0xff] %vm780, %v1094
        %v1096 = vld [vmem:[#allocation5] sm:$0xff]
        %v1097 = vld [vmem:[%s856] sm:$0xff]
        %v1098 = vrcp.pop %v1097
        %1100 = vset.pattern.permute.xlu0 0
        %1101 = vperm.xlu0 %1100, %v1098
        %v1102 = vpop.permute.xlu0 %1101
        %v1104 = vmul.f32 %v1096, %v1102
        %1105 = vst.msk [vmem:[#allocation5] sm:$0xff] %vm925, %v1104
        %v1106 = vld [vmem:[#allocation5] sm:$0xff]
        %v1107 = vld [vmem:[%s1001] sm:$0xff]
        %v1108 = vrcp.pop %v1107
        %1110 = vset.pattern.permute.xlu0 0
        %1111 = vperm.xlu0 %1110, %v1108
        %v1112 = vpop.permute.xlu0 %1111
        %v1114 = vmul.f32 %v1106, %v1112
        %1115 = vst.msk [vmem:[#allocation5] sm:$0xff] %vm1070, %v1114
        %v1116 = vld [vmem:[#allocation5] sm:$0xff]
        %v1117 = vpack.c.bf16 %v1116, %v1116
        %vm1118 = vcmask 257024
        %1119 = vst.msk [vmem:[%s338] sm:$0xf] %vm1118, %v1117
      $region56: #{forward.17} parent=47 // pred_fallthru
        _
      %p1120 = scmp.lt.s32.totalorder %s22, 1
      %s1121 = scalar_select %p1120, %s22, 1
      %s1122 = smul.addr %s1121, 4
      %s1123 = scalar_lea.vmem %s7, %s1122
      // Predicated region
      $region57: #{forward.17} parent=47 // pred_check
        %p1124 = pneg %p214
      $region58: #{forward.17} parent=47 // pred_check_branch
        %1126 = sbr.rel (%p1124) target = $region60
      $region59: #{forward.17} parent=47 // pred_region
        _
      $region60: #{forward.17} parent=47 // pred_fallthru
        _
    $region48: #{forward.17} parent=5 // pred_fallthru
      _
    %p1127 = scmp.le.s32.totalorder 2, %s13
    // Predicated region
    $region61: #{forward.17} parent=5 // pred_check
      %p1128 = pneg %p1127
    $region62: #{forward.17} parent=5 // pred_check_branch
      %1130 = sbr.rel (%p1128) target = $region64
    $region63: #{forward.17} parent=5 // pred_region
      %s1131 = ssub.s32 %s13, 2
      // Predicated region
      $region65: #{forward.17} parent=63 // pred_check
        %p1132 = pneg %p220
      $region66: #{forward.17} parent=63 // pred_check_branch
        %1134 = sbr.rel (%p1132) target = $region68
      $region67: #{forward.17} parent=63 // pred_region
        %p1135 = scmp.lt.s32.totalorder %s24, 1
        %s1136 = scalar_select %p1135, %s24, 1
        %s1137 = smul.addr %s1136, 4
        %s1138 = scalar_lea.vmem %s7, %s1137
      $region68: #{forward.17} parent=63 // pred_fallthru
        _
    $region64: #{forward.17} parent=5 // pred_fallthru
      _
  $region6: #{forward.17} parent=0 // loop_footer
    %s17 = sadd.s32 1, %s13
  $region7: #{forward.17} parent=0 // loop_footer_branch
    %12 = sbr.rel target = $region3
  $region8: #{forward.17} parent=0 // loop_exit
    _

// kernel: forward.23
$region0: #{forward.23}
  #allocation0 [shape = 'u32[]', space=smem, size = 0x4, offset = 0x4, fixed_abs, tag = 'smem constant byte address 0x4 - core index']
  #allocation1 [shape = 'u32[144,128]{1,0:T(1,128)}', space=vmem, size = 0x12000, scoped, tag = 'internal scratch']
  #allocation2 [shape = 'bf16[8,32]{1,0:T(8,128)(2,1)}', space=vmem, size = 0x800, scoped, tag = 'scratch operand']
  #allocation3 [shape = 'f32[4,8,1]{2,1,0:T(8,128)}', space=vmem, size = 0x4000, scoped, tag = 'scratch operand']
  #allocation4 [shape = 'f32[4,8,1]{2,1,0:T(8,128)}', space=vmem, size = 0x4000, scoped, tag = 'scratch operand']
  #allocation5 [shape = 'f32[8,32]{1,0:T(8,128)}', space=vmem, size = 0x1000, scoped, tag = 'scratch operand']
  %s0 = inlined_call_operand.vmem [shape: s32[2,1,8], index: 0, kind: input, shape index: {}]
  %s1 = inlined_call_operand.vmem [shape: bf16[2,8,32], index: 1, kind: input, shape index: {}, may-alias: {1,2}]
  %s2 = inlined_call_operand.vmem [shape: bf16[2,8,32], index: 2, kind: input, shape index: {}, may-alias: {1,2}]
  %s3 = inlined_call_operand.vmem [shape: bf16[32,32], index: 3, kind: input, shape index: {}]
  %s4 = inlined_call_operand.vmem [shape: f32[1,32], index: 4, kind: input, shape index: {}]
  %s5 = inlined_call_operand.vmem [shape: bf16[32,64], index: 5, kind: input, shape index: {}]
  %s6 = inlined_call_operand.vmem [shape: f32[1,64], index: 6, kind: input, shape index: {}]
  %s7 = inlined_call_operand.vmem [shape: bf16[2,8,32], index: 7, kind: output, shape index: {}]
  %s8 = sld [smem:[#allocation0]]
  $region69: #{forward.23} parent=0
    _
  %s10 = ssub.s32 1, %s8
  %s11 = scalar_select 0, %s10, %s8
  loop: start=0, step=1, limit=4
  $region2: #{forward.23} parent=0 // loop_pre_header
    _
  $region3: #{forward.23} parent=0 // loop_header
    %s13 = sphi 0, %s17
    %p14 = scmp.ge.s32.totalorder %s13, 4
    %s20 = sphi 0, %s32
    %s21 = sphi 0, %s28
    %s22 = sphi 0, %s20
    %s23 = sphi 0, %s21
    %s24 = sphi 0, %s22
    %s25 = sphi 0, %s23
    %s37 = sphi 0, %s39
    %s40 = sphi 0, %s37
    %s41 = sphi 0, %s40
    %s57 = sphi 0, %s41
    %s63 = sphi 0, %s65
    %s66 = sphi 0, %s63
    %s67 = sphi 0, %s66
    %s83 = sphi 0, %s67
    %s91 = sphi 0, %s93
    %s94 = sphi 0, %s91
    %s95 = sphi 0, %s94
    %s111 = sphi 0, %s95
    %s115 = sphi 0, %s115
    %s117 = sphi 0, %s115
    %s118 = sphi 0, %s117
    %s132 = sphi 0, %s118
    %s136 = sphi 0, %s136
    %s138 = sphi 0, %s136
    %s139 = sphi 0, %s138
    %s153 = sphi 0, %s139
    %s157 = sphi 0, %s157
    %s159 = sphi 0, %s157
    %s160 = sphi 0, %s159
    %s174 = sphi 0, %s160
    %s178 = sphi 0, %s178
    %s180 = sphi 0, %s178
    %s181 = sphi 0, %s180
    %s195 = sphi 0, %s181
    %s201 = sphi 0, %s203
    %s204 = sphi 0, %s201
    %s205 = sphi 0, %s204
    %s221 = sphi 0, %s205
  $region4: #{forward.23} parent=0 // loop_header_branch
    %16 = sbr.rel (%p14) target = $region8
  $region5: #{forward.23} parent=0 // loop_body
    %s18 = ssub.s32 %s13, 1
    %s19 = ssub.s32 %s13, 2
    %s26 = sadd.s32 1, %s21
    %p27 = scmp.ge.s32.totalorder %s26, 1
    %s28 = scalar_select %p27, 0, %s26
    %s29 = sadd.s32 1, %s20
    %s30 = scalar_select %p27, %s29, %s20
    %p31 = scmp.ge.s32.totalorder %s30, 2
    %s32 = scalar_select %p31, 0, %s30
    %s33 = ssub.s32 %s20, %s32
    %s34 = ssub.s32 %s21, %s28
    %s35 = sor.u32 %s33, %s34
    %p36 = scmp.eq.s32.totalorder %s35, 0
    %s38 = sadd.s32 %s37, 1
    %s39 = scalar_select %p36, %s37, %s38
    %p42 = pneg %p36
    %p43 = scmp.eq.s32.totalorder %s13, 1
    %p44 = por %p42, %p43
    %p45 = scmp.ne.s32.totalorder %s37, %s40
    %p46 = scmp.eq.s32.totalorder %s13, 0
    %p47 = por %p45, %p46
    %p48 = scmp.ne.s32.totalorder %s37, %s40
    %p49 = scmp.eq.s32.totalorder %s18, 1
    %p50 = por %p48, %p49
    %p51 = scmp.ne.s32.totalorder %s40, %s41
    %p52 = scmp.eq.s32.totalorder %s18, 0
    %p53 = por %p51, %p52
    %p54 = scmp.ne.s32.totalorder %s40, %s41
    %p55 = scmp.eq.s32.totalorder %s19, 1
    %p56 = por %p54, %p55
    %p58 = scmp.ne.s32.totalorder %s41, %s57
    %p59 = scmp.eq.s32.totalorder %s19, 0
    %p60 = por %p58, %p59
    %s61 = ssub.s32 %s20, %s32
    %p62 = scmp.eq.s32.totalorder %s61, 0
    %s64 = sadd.s32 %s63, 1
    %s65 = scalar_select %p62, %s63, %s64
    %p68 = pneg %p62
    %p69 = scmp.eq.s32.totalorder %s13, 1
    %p70 = por %p68, %p69
    %p71 = scmp.ne.s32.totalorder %s63, %s66
    %p72 = scmp.eq.s32.totalorder %s13, 0
    %p73 = por %p71, %p72
    %p74 = scmp.ne.s32.totalorder %s63, %s66
    %p75 = scmp.eq.s32.totalorder %s18, 1
    %p76 = por %p74, %p75
    %p77 = scmp.ne.s32.totalorder %s66, %s67
    %p78 = scmp.eq.s32.totalorder %s18, 0
    %p79 = por %p77, %p78
    %p80 = scmp.ne.s32.totalorder %s66, %s67
    %p81 = scmp.eq.s32.totalorder %s19, 1
    %p82 = por %p80, %p81
    %p84 = scmp.ne.s32.totalorder %s67, %s83
    %p85 = scmp.eq.s32.totalorder %s19, 0
    %p86 = por %p84, %p85
    %s87 = ssub.s32 %s20, %s32
    %s88 = ssub.s32 %s21, %s28
    %s89 = sor.u32 %s87, %s88
    %p90 = scmp.eq.s32.totalorder %s89, 0
    %s92 = sadd.s32 %s91, 1
    %s93 = scalar_select %p90, %s91, %s92
    %p96 = pneg %p90
    %p97 = scmp.eq.s32.totalorder %s13, 1
    %p98 = por %p96, %p97
    %p99 = scmp.ne.s32.totalorder %s91, %s94
    %p100 = scmp.eq.s32.totalorder %s13, 0
    %p101 = por %p99, %p100
    %p102 = scmp.ne.s32.totalorder %s91, %s94
    %p103 = scmp.eq.s32.totalorder %s18, 1
    %p104 = por %p102, %p103
    %p105 = scmp.ne.s32.totalorder %s94, %s95
    %p106 = scmp.eq.s32.totalorder %s18, 0
    %p107 = por %p105, %p106
    %p108 = scmp.ne.s32.totalorder %s94, %s95
    %p109 = scmp.eq.s32.totalorder %s19, 1
    %p110 = por %p108, %p109
    %p112 = scmp.ne.s32.totalorder %s95, %s111
    %p113 = scmp.eq.s32.totalorder %s19, 0
    %p114 = por %p112, %p113
    %s116 = sadd.s32 %s115, 1
    %p119 = scmp.eq.s32.totalorder %s13, 1
    %p120 = scmp.ne.s32.totalorder %s115, %s117
    %p121 = scmp.eq.s32.totalorder %s13, 0
    %p122 = por %p120, %p121
    %p123 = scmp.ne.s32.totalorder %s115, %s117
    %p124 = scmp.eq.s32.totalorder %s18, 1
    %p125 = por %p123, %p124
    %p126 = scmp.ne.s32.totalorder %s117, %s118
    %p127 = scmp.eq.s32.totalorder %s18, 0
    %p128 = por %p126, %p127
    %p129 = scmp.ne.s32.totalorder %s117, %s118
    %p130 = scmp.eq.s32.totalorder %s19, 1
    %p131 = por %p129, %p130
    %p133 = scmp.ne.s32.totalorder %s118, %s132
    %p134 = scmp.eq.s32.totalorder %s19, 0
    %p135 = por %p133, %p134
    %s137 = sadd.s32 %s136, 1
    %p140 = scmp.eq.s32.totalorder %s13, 1
    %p141 = scmp.ne.s32.totalorder %s136, %s138
    %p142 = scmp.eq.s32.totalorder %s13, 0
    %p143 = por %p141, %p142
    %p144 = scmp.ne.s32.totalorder %s136, %s138
    %p145 = scmp.eq.s32.totalorder %s18, 1
    %p146 = por %p144, %p145
    %p147 = scmp.ne.s32.totalorder %s138, %s139
    %p148 = scmp.eq.s32.totalorder %s18, 0
    %p149 = por %p147, %p148
    %p150 = scmp.ne.s32.totalorder %s138, %s139
    %p151 = scmp.eq.s32.totalorder %s19, 1
    %p152 = por %p150, %p151
    %p154 = scmp.ne.s32.totalorder %s139, %s153
    %p155 = scmp.eq.s32.totalorder %s19, 0
    %p156 = por %p154, %p155
    %s158 = sadd.s32 %s157, 1
    %p161 = scmp.eq.s32.totalorder %s13, 1
    %p162 = scmp.ne.s32.totalorder %s157, %s159
    %p163 = scmp.eq.s32.totalorder %s13, 0
    %p164 = por %p162, %p163
    %p165 = scmp.ne.s32.totalorder %s157, %s159
    %p166 = scmp.eq.s32.totalorder %s18, 1
    %p167 = por %p165, %p166
    %p168 = scmp.ne.s32.totalorder %s159, %s160
    %p169 = scmp.eq.s32.totalorder %s18, 0
    %p170 = por %p168, %p169
    %p171 = scmp.ne.s32.totalorder %s159, %s160
    %p172 = scmp.eq.s32.totalorder %s19, 1
    %p173 = por %p171, %p172
    %p175 = scmp.ne.s32.totalorder %s160, %s174
    %p176 = scmp.eq.s32.totalorder %s19, 0
    %p177 = por %p175, %p176
    %s179 = sadd.s32 %s178, 1
    %p182 = scmp.eq.s32.totalorder %s13, 1
    %p183 = scmp.ne.s32.totalorder %s178, %s180
    %p184 = scmp.eq.s32.totalorder %s13, 0
    %p185 = por %p183, %p184
    %p186 = scmp.ne.s32.totalorder %s178, %s180
    %p187 = scmp.eq.s32.totalorder %s18, 1
    %p188 = por %p186, %p187
    %p189 = scmp.ne.s32.totalorder %s180, %s181
    %p190 = scmp.eq.s32.totalorder %s18, 0
    %p191 = por %p189, %p190
    %p192 = scmp.ne.s32.totalorder %s180, %s181
    %p193 = scmp.eq.s32.totalorder %s19, 1
    %p194 = por %p192, %p193
    %p196 = scmp.ne.s32.totalorder %s181, %s195
    %p197 = scmp.eq.s32.totalorder %s19, 0
    %p198 = por %p196, %p197
    %s199 = ssub.s32 %s20, %s32
    %p200 = scmp.eq.s32.totalorder %s199, 0
    %s202 = sadd.s32 %s201, 1
    %s203 = scalar_select %p200, %s201, %s202
    %p206 = pneg %p200
    %p207 = scmp.eq.s32.totalorder %s13, 1
    %p208 = por %p206, %p207
    %p209 = scmp.ne.s32.totalorder %s201, %s204
    %p210 = scmp.eq.s32.totalorder %s13, 0
    %p211 = por %p209, %p210
    %p212 = scmp.ne.s32.totalorder %s201, %s204
    %p213 = scmp.eq.s32.totalorder %s18, 1
    %p214 = por %p212, %p213
    %p215 = scmp.ne.s32.totalorder %s204, %s205
    %p216 = scmp.eq.s32.totalorder %s18, 0
    %p217 = por %p215, %p216
    %p218 = scmp.ne.s32.totalorder %s204, %s205
    %p219 = scmp.eq.s32.totalorder %s19, 1
    %p220 = por %p218, %p219
    %p222 = scmp.ne.s32.totalorder %s205, %s221
    %p223 = scmp.eq.s32.totalorder %s19, 0
    %p224 = por %p222, %p223
    %p225 = scmp.le.s32.totalorder 1, %s13
    %p226 = scmp.lt.s32.totalorder %s13, 3
    %p227 = pnand %p225, %p226
    %p228 = pneg %p227
    // Predicated region
    $region9: #{forward.23} parent=5 // pred_check
      _
    $region10: #{forward.23} parent=5 // pred_check_branch
      %230 = sbr.rel (%p227) target = $region12
    $region11: #{forward.23} parent=5 // pred_region
      %s231 = ssub.s32 %s13, 1
      // Predicated region
      $region13: #{forward.23} parent=11 // pred_check
        %p232 = pneg %p128
      $region14: #{forward.23} parent=11 // pred_check_branch
        %234 = sbr.rel (%p232) target = $region16
      $region15: #{forward.23} parent=11 // pred_region
        _
      $region16: #{forward.23} parent=11 // pred_fallthru
        _
      // Predicated region
      $region17: #{forward.23} parent=11 // pred_check
        %p235 = pneg %p149
      $region18: #{forward.23} parent=11 // pred_check_branch
        %237 = sbr.rel (%p235) target = $region20
      $region19: #{forward.23} parent=11 // pred_region
        _
      $region20: #{forward.23} parent=11 // pred_fallthru
        _
      // Predicated region
      $region21: #{forward.23} parent=11 // pred_check
        %p238 = pneg %p170
      $region22: #{forward.23} parent=11 // pred_check_branch
        %240 = sbr.rel (%p238) target = $region24
      $region23: #{forward.23} parent=11 // pred_region
        _
      $region24: #{forward.23} parent=11 // pred_fallthru
        _
      // Predicated region
      $region25: #{forward.23} parent=11 // pred_check
        %p241 = pneg %p191
      $region26: #{forward.23} parent=11 // pred_check_branch
        %243 = sbr.rel (%p241) target = $region28
      $region27: #{forward.23} parent=11 // pred_region
        _
      $region28: #{forward.23} parent=11 // pred_fallthru
        _
    $region12: #{forward.23} parent=5 // pred_fallthru
      _
    %p244 = scmp.lt.s32.totalorder %s13, 2
    // Predicated region
    $region29: #{forward.23} parent=5 // pred_check
      %p245 = pneg %p244
    $region30: #{forward.23} parent=5 // pred_check_branch
      %247 = sbr.rel (%p245) target = $region32
    $region31: #{forward.23} parent=5 // pred_region
      // Predicated region
      $region33: #{forward.23} parent=31 // pred_check
        %p248 = pneg %p47
      $region34: #{forward.23} parent=31 // pred_check_branch
        %250 = sbr.rel (%p248) target = $region36
      $region35: #{forward.23} parent=31 // pred_region
        %p251 = scmp.lt.s32.totalorder %s20, 1
        %s252 = scalar_select %p251, %s20, 1
        %p253 = scmp.lt.s32.totalorder %s21, 0
        %s254 = scalar_select %p253, %s21, 0
        %s255 = sadd.s32 %s254, %s252
        %s256 = scalar_lea.vmem %s0, %s255
      $region36: #{forward.23} parent=31 // pred_fallthru
        _
      // Predicated region
      $region37: #{forward.23} parent=31 // pred_check
        %p257 = pneg %p73
      $region38: #{forward.23} parent=31 // pred_check_branch
        %259 = sbr.rel (%p257) target = $region40
      $region39: #{forward.23} parent=31 // pred_region
        %p260 = scmp.lt.s32.totalorder %s20, 1
        %s261 = scalar_select %p260, %s20, 1
        %s262 = smul.addr %s261, 4
        %s263 = scalar_lea.vmem %s1, %s262
      $region40: #{forward.23} parent=31 // pred_fallthru
        _
      // Predicated region
      $region41: #{forward.23} parent=31 // pred_check
        %p264 = pneg %p101
      $region42: #{forward.23} parent=31 // pred_check_branch
        %266 = sbr.rel (%p264) target = $region44
      $region43: #{forward.23} parent=31 // pred_region
        %p267 = scmp.lt.s32.totalorder %s20, 1
        %s268 = scalar_select %p267, %s20, 1
        %p269 = scmp.lt.s32.totalorder %s21, 0
        %s270 = scalar_select %p269, %s21, 0
        %s271 = sadd.s32 %s270, %s268
        %s272 = smul.addr %s271, 4
        %s273 = scalar_lea.vmem %s2, %s272
      $region44: #{forward.23} parent=31 // pred_fallthru
        _
    $region32: #{forward.23} parent=5 // pred_fallthru
      _
    %p274 = scmp.le.s32.totalorder 1, %s13
    %p275 = scmp.lt.s32.totalorder %s13, 3
    %p276 = pnand %p274, %p275
    %p277 = pneg %p276
    // Predicated region
    $region45: #{forward.23} parent=5 // pred_check
      _
    $region46: #{forward.23} parent=5 // pred_check_branch
      %279 = sbr.rel (%p276) target = $region48
    $region47: #{forward.23} parent=5 // pred_region
      %s280 = ssub.s32 %s13, 1
      %p281 = scmp.lt.s32.totalorder %s22, 1
      %s282 = scalar_select %p281, %s22, 1
      %p283 = scmp.lt.s32.totalorder %s23, 0
      %s284 = scalar_select %p283, %s23, 0
      %s285 = sadd.s32 %s284, %s282
      %s286 = scalar_lea.vmem %s0, %s285
      %p287 = pneg %p53
      %p288 = pneg %p50
      %p289 = scmp.lt.s32.totalorder %s22, 1
      %s290 = scalar_select %p289, %s22, 1
      %s291 = smul.addr %s290, 4
      %s292 = scalar_lea.vmem %s1, %s291
      %p293 = pneg %p79
      %p294 = pneg %p76
      %p295 = scmp.lt.s32.totalorder %s22, 1
      %s296 = scalar_select %p295, %s22, 1
      %p297 = scmp.lt.s32.totalorder %s23, 0
      %s298 = scalar_select %p297, %s23, 0
      %s299 = sadd.s32 %s298, %s296
      %s300 = smul.addr %s299, 4
      %s301 = scalar_lea.vmem %s2, %s300
      %p302 = pneg %p107
      %p303 = pneg %p104
      %p304 = pneg %p128
      %p305 = pneg %p125
      %p306 = pneg %p149
      %p307 = pneg %p146
      %p308 = pneg %p170
      %p309 = pneg %p167
      %p310 = pneg %p191
      %p311 = pneg %p188
      %p312 = pneg %p217
      %p313 = pneg %p214
      %p314 = scmp.lt.s32.totalorder %s22, 1
      %s315 = scalar_select %p314, %s22, 1
      %s316 = smul.addr %s315, 4
      %s317 = scalar_lea.vmem %s7, %s316
      %p318 = scmp.lt.s32.totalorder %s22, 1
      %s319 = scalar_select %p318, %s22, 1
      %p320 = scmp.lt.s32.totalorder %s23, 0
      %s321 = scalar_select %p320, %s23, 0
      %s322 = sadd.s32 %s321, %s319
      %s323 = scalar_lea.vmem %s0, %s322
      %p324 = scmp.lt.s32.totalorder %s22, 1
      %s325 = scalar_select %p324, %s22, 1
      %s326 = smul.addr %s325, 4
      %s327 = scalar_lea.vmem %s1, %s326
      %p328 = scmp.lt.s32.totalorder %s22, 1
      %s329 = scalar_select %p328, %s22, 1
      %p330 = scmp.lt.s32.totalorder %s23, 0
      %s331 = scalar_select %p330, %s23, 0
      %s332 = sadd.s32 %s331, %s329
      %s333 = smul.addr %s332, 4
      %s334 = scalar_lea.vmem %s2, %s333
      %p335 = scmp.lt.s32.totalorder %s22, 1
      %s336 = scalar_select %p335, %s22, 1
      %s337 = smul.addr %s336, 4
      %s338 = scalar_lea.vmem %s7, %s337
      %p340 = scmp.eq.s32.totalorder %s23, 0
      // Predicated region
      $region49: #{forward.23} parent=47 // pred_check
        %p341 = pneg %p340
      $region50: #{forward.23} parent=47 // pred_check_branch
        %343 = sbr.rel (%p341) target = $region52
      $region51: #{forward.23} parent=47 // pred_region
        %v344 = vld [vmem:[%s327] sm:$0xf]
        %v345 = vld [vmem:[%s3] sm:$0xf]
        %v346 = vld [vmem:[%s3 + $0x4] sm:$0xf]
        %v347 = vld [vmem:[%s3 + $0x8] sm:$0xf]
        %v348 = vld [vmem:[%s3 + $0xc] sm:$0xf]
        %v349 = vld [vmem:[%s4] sm:$0x1]
        %v351 = vlaneseq
        %v352 = vshrl.u32 %v351, 7
        %v353 = vsub.s32 0, %v352
        %v354 = vrot.slane %v349, %v353
        %v360 = vunpack.c.l.b16 %v345
        %v361 = vunpack.c.l.b16 %v346
        %v362 = vunpack.c.l.b16 %v347
        %v363 = vunpack.c.l.b16 %v348
        %v364 = vpack.c.b16 %v361, %v360
        %v365 = vpack.c.b16 %v363, %v362
        %vm368 = vcmask 261120
        %v370 = vsel %vm368, %v344, 0
        %372 = vmatprep.subr.bf16.mxu0 0
        %373 = vmatpush1.bf16.msra.mxu0 %v364
        %374 = vmatprep.subr.bf16.mxu0 0
        %375 = vmatpush1.bf16.msra.mxu0 %v365
        %376 = vmatprep.subr.bf16.mxu0 0
        %377 = vmatpush1.bf16.msra.mxu0 0
        %378 = vmatprep.subr.bf16.mxu0 0
        %379 = vmatpush1.bf16.msra.mxu0 0
        %380 = vmatprep.subr.bf16.mxu0 0
        %381 = vmatpush1.bf16.msra.mxu0 0
        %382 = vmatprep.subr.bf16.mxu0 0
        %383 = vmatpush1.bf16.msra.mxu0 0
        %384 = vmatprep.subr.bf16.mxu0 0
        %385 = vmatpush1.bf16.msra.mxu0 0
        %386 = vmatprep.subr.bf16.mxu0 0
        %387 = vmatpush1.bf16.msra.mxu0 0
        %388 = vmatprep.subr.bf16.mxu0 0
        %389 = vmatpush1.bf16.msra.mxu0 0
        %390 = vmatprep.subr.bf16.mxu0 0
        %391 = vmatpush1.bf16.msra.mxu0 0
        %392 = vmatprep.subr.bf16.mxu0 0
        %393 = vmatpush1.bf16.msra.mxu0 0
        %394 = vmatprep.subr.bf16.mxu0 0
        %395 = vmatpush1.bf16.msra.mxu0 0
        %396 = vmatprep.subr.bf16.mxu0 0
        %397 = vmatpush1.bf16.msra.mxu0 0
        %398 = vmatprep.subr.bf16.mxu0 0
        %399 = vmatpush1.bf16.msra.mxu0 0
        %400 = vmatprep.subr.bf16.mxu0 0
        %401 = vmatpush1.bf16.msra.mxu0 0
        %402 = vmatprep.subr.bf16.mxu0 0
        %403 = vmatpush1.bf16.msra.mxu0 0
        %404 = vmatprep.mubr.bf16.mxu0 0
        %405 = vmatmul.mubr.bf16.gmra.mrb[0].mxu0 %v370
        %v406 = vpop.f32.mrb[0].mxu0
        %v407 = vadd.f32 %v354, %v406
        %v408 = vpop.f32.mrb[0].mxu0
        %v409 = vpop.f32.mrb[0].mxu0
        %v410 = vpop.f32.mrb[0].mxu0
        %411 = vdwg.mxu0
        %v412 = vpack.c.bf16 %v407, %v407
        %vm413 = vcmask 257024
        %414 = vst.msk [vmem:[#allocation2] sm:$0xf] %vm413, %v412
        %vm415 = vcmask 7168
        %416 = vst.msk [vmem:[#allocation3] sm:$0xff] %vm415, -1e+30
        %417 = vst.msk [vmem:[#allocation3 + $0x8] sm:$0xff] %vm415, -1e+30
        %418 = vst.msk [vmem:[#allocation3 + $0x10] sm:$0xff] %vm415, -1e+30
        %419 = vst.msk [vmem:[#allocation3 + $0x18] sm:$0xff] %vm415, -1e+30
        %420 = vst.msk [vmem:[#allocation4] sm:$0xff] %vm415, 0.0
        %421 = vst.msk [vmem:[#allocation4 + $0x8] sm:$0xff] %vm415, 0.0
        %422 = vst.msk [vmem:[#allocation4 + $0x10] sm:$0xff] %vm415, 0.0
        %423 = vst.msk [vmem:[#allocation4 + $0x18] sm:$0xff] %vm415, 0.0
        %424 = vst.msk [vmem:[#allocation5] sm:$0xff] %vm368, 0.0
      $region52: #{forward.23} parent=47 // pred_fallthru
        _
      %v425 = vld [vmem:[%s334] sm:$0xf]
      %v426 = vld [vmem:[%s5] sm:$0xf]
      %v427 = vld [vmem:[%s5 + $0x4] sm:$0xf]
      %v428 = vld [vmem:[%s5 + $0x8] sm:$0xf]
      %v429 = vld [vmem:[%s5 + $0xc] sm:$0xf]
      %v430 = vld [vmem:[%s6] sm:$0x1]
      %v432 = vlaneseq
      %v433 = vshrl.u32 %v432, 7
      %v434 = vsub.s32 0, %v433
      %v435 = vrot.slane %v430, %v434
      %v441 = vunpack.c.l.b16 %v426
      %v442 = vunpack.c.l.b16 %v427
      %v443 = vunpack.c.l.b16 %v428
      %v444 = vunpack.c.l.b16 %v429
      %v445 = vpack.c.b16 %v442, %v441
      %v446 = vpack.c.b16 %v444, %v443
      %vm449 = vcmask 261120
      %v451 = vsel %vm449, %v425, 0
      %453 = vmatprep.subr.bf16.mxu0 0
      %454 = vmatpush1.bf16.msra.mxu0 %v445
      %455 = vmatprep.subr.bf16.mxu0 0
      %456 = vmatpush1.bf16.msra.mxu0 %v446
      %457 = vmatprep.subr.bf16.mxu0 0
      %458 = vmatpush1.bf16.msra.mxu0 0
      %459 = vmatprep.subr.bf16.mxu0 0
      %460 = vmatpush1.bf16.msra.mxu0 0
      %461 = vmatprep.subr.bf16.mxu0 0
      %462 = vmatpush1.bf16.msra.mxu0 0
      %463 = vmatprep.subr.bf16.mxu0 0
      %464 = vmatpush1.bf16.msra.mxu0 0
      %465 = vmatprep.subr.bf16.mxu0 0
      %466 = vmatpush1.bf16.msra.mxu0 0
      %467 = vmatprep.subr.bf16.mxu0 0
      %468 = vmatpush1.bf16.msra.mxu0 0
      %469 = vmatprep.subr.bf16.mxu0 0
      %470 = vmatpush1.bf16.msra.mxu0 0
      %471 = vmatprep.subr.bf16.mxu0 0
      %472 = vmatpush1.bf16.msra.mxu0 0
      %473 = vmatprep.subr.bf16.mxu0 0
      %474 = vmatpush1.bf16.msra.mxu0 0
      %475 = vmatprep.subr.bf16.mxu0 0
      %476 = vmatpush1.bf16.msra.mxu0 0
      %477 = vmatprep.subr.bf16.mxu0 0
      %478 = vmatpush1.bf16.msra.mxu0 0
      %479 = vmatprep.subr.bf16.mxu0 0
      %480 = vmatpush1.bf16.msra.mxu0 0
      %481 = vmatprep.subr.bf16.mxu0 0
      %482 = vmatpush1.bf16.msra.mxu0 0
      %483 = vmatprep.subr.bf16.mxu0 0
      %484 = vmatpush1.bf16.msra.mxu0 0
      %485 = vmatprep.mubr.bf16.mxu0 0
      %486 = vmatmul.mubr.bf16.gmra.mrb[0].mxu0 %v451
      %v487 = vpop.f32.mrb[0].mxu0
      %v488 = vadd.f32 %v435, %v487
      %v489 = vpop.f32.mrb[0].mxu0
      %v490 = vpop.f32.mrb[0].mxu0
      %v491 = vpop.f32.mrb[0].mxu0
      %492 = vdwg.mxu0
      %v493 = vpack.c.bf16 %v488, %v488
      %v494 = vld [vmem:[%s323] sm:$0x1]
      %vm495 = vcmp.ne.s32.totalorder %v494, 0
      %v496 = vsel %vm495, 1, 0
      %v497 = vlaneseq
      %v498 = vshrl.u32 %v497, 7
      %v499 = vsub.s32 0, %v498
      %v500 = vrot.slane %v496, %v499
      %vm501 = vcmp.eq.s32.totalorder %v500, 1
      %v502 = vlaneseq
      %v503 = vshrl.u32 %v502, 7
      %v504 = vlaneseq
      %v505 = vand.u32 %v504, 127
      %s506 = smul.u32 %s23, 8
      %v507 = vstv %s506
      %v508 = vadd.s32 %v505, %v507
      %vm509 = vcmp.gt.s32.totalorder %v508, %v503
      %vm510 = vmor %vm501, %vm509
      %v511 = vsel %vm510, -1e+09, 0.0
      %v512 = vld [vmem:[#allocation2] sm:$0xf]
      %vm513 = vcmask 64512
      %v515 = vsel %vm513, %v512, 0
      %v518 = vsel %vm513, %v493, 0
      %520 = vmatprep.subr.bf16.mxu0 0
      %521 = vmatpush1.bf16.xpose.msra.mxu0 %v518
      %522 = vmatprep.subr.bf16.mxu0 0
      %523 = vmatpush1.bf16.xpose.msra.mxu0 0
      %524 = vmatprep.subr.bf16.mxu0 0
      %525 = vmatpush1.bf16.xpose.msra.mxu0 0
      %526 = vmatprep.subr.bf16.mxu0 0
      %527 = vmatpush1.bf16.xpose.msra.mxu0 0
      %528 = vmatprep.subr.bf16.mxu0 0
      %529 = vmatpush1.bf16.xpose.msra.mxu0 0
      %530 = vmatprep.subr.bf16.mxu0 0
      %531 = vmatpush1.bf16.xpose.msra.mxu0 0
      %532 = vmatprep.subr.bf16.mxu0 0
      %533 = vmatpush1.bf16.xpose.msra.mxu0 0
      %534 = vmatprep.subr.bf16.mxu0 0
      %535 = vmatpush1.bf16.xpose.msra.mxu0 0
      %536 = vmatprep.subr.bf16.mxu0 0
      %537 = vmatpush1.bf16.xpose.msra.mxu0 0
      %538 = vmatprep.subr.bf16.mxu0 0
      %539 = vmatpush1.bf16.xpose.msra.mxu0 0
      %540 = vmatprep.subr.bf16.mxu0 0
      %541 = vmatpush1.bf16.xpose.msra.mxu0 0
      %542 = vmatprep.subr.bf16.mxu0 0
      %543 = vmatpush1.bf16.xpose.msra.mxu0 0
      %544 = vmatprep.subr.bf16.mxu0 0
      %545 = vmatpush1.bf16.xpose.msra.mxu0 0
      %546 = vmatprep.subr.bf16.mxu0 0
      %547 = vmatpush1.bf16.xpose.msra.mxu0 0
      %548 = vmatprep.subr.bf16.mxu0 0
      %549 = vmatpush1.bf16.xpose.msra.mxu0 0
      %550 = vmatprep.subr.bf16.mxu0 0
      %551 = vmatpush1.bf16.xpose.msra.mxu0 0
      %552 = vmatprep.mubr.bf16.mxu0 0
      %553 = vmatmul.mubr.bf16.gmra.mrb[0].mxu0 %v515
      %v554 = vpop.f32.mrb[0].mxu0
      %v555 = vadd.f32 0.0, %v554
      %v556 = vpop.f32.mrb[0].mxu0
      %v557 = vpop.f32.mrb[0].mxu0
      %v558 = vpop.f32.mrb[0].mxu0
      %559 = vdwg.mxu0
      %v560 = vmul.f32 %v555, 0.35355338
      %v561 = vadd.f32 %v560, %v511
      %v562 = vld [vmem:[#allocation3] sm:$0xff]
      %v563 = vsel %vm513, %v561, -inf
      %564 = vmax.xlane.f32.xlu0 %v563
      %v565 = vpop.xlane.xlu0 %564
      %v566 = vmax.f32 %v562, %v565
      %v567 = vsub.f32 %v562, %v566
      %v568 = vmul.f32 %v567, 1.442695
      %v569 = vpow.pop %v568
      %571 = vset.pattern.permute.xlu0 0
      %572 = vperm.xlu0 %571, %v566
      %v573 = vpop.permute.xlu0 %572
      %v575 = vsub.f32 %v561, %v573
      %v576 = vmul.f32 %v575, 1.442695
      %v577 = vpow.pop %v576
      %v578 = vld [vmem:[#allocation4] sm:$0xff]
      %v579 = vmul.f32 %v569, %v578
      %v580 = vsel %vm513, %v577, 0.0
      %581 = vadd.xlane.f32.xlu0 %v580
      %v582 = vpop.xlane.xlu0 %581
      %v583 = vadd.f32 %v579, %v582
      %vm584 = vcmask 7168
      %585 = vst.msk [vmem:[#allocation4] sm:$0xff] %vm584, %v583
      %v586 = vld [vmem:[#allocation5] sm:$0xff]
      %588 = vset.pattern.permute.xlu0 0
      %589 = vperm.xlu0 %588, %v569
      %v590 = vpop.permute.xlu0 %589
      %v592 = vmul.f32 %v590, %v586
      %v593 = vpack.c.bf16 %v577, %v577
      %595 = vrot.lane.b32.xlu0 %v493, 96
      %v596 = vpop.permute.xlu0 %595
      %v598 = vsel %vm513, %v593, 0
      %vm600 = vcmask 1043456
      %v602 = vsel %vm600, %v596, 0
      %604 = vmatprep.subr.bf16.mxu0 0
      %605 = vmatpush1.bf16.msra.mxu0 %v602
      %606 = vmatprep.subr.bf16.mxu0 0
      %607 = vmatpush1.bf16.msra.mxu0 0
      %608 = vmatprep.subr.bf16.mxu0 0
      %609 = vmatpush1.bf16.msra.mxu0 0
      %610 = vmatprep.subr.bf16.mxu0 0
      %611 = vmatpush1.bf16.msra.mxu0 0
      %612 = vmatprep.subr.bf16.mxu0 0
      %613 = vmatpush1.bf16.msra.mxu0 0
      %614 = vmatprep.subr.bf16.mxu0 0
      %615 = vmatpush1.bf16.msra.mxu0 0
      %616 = vmatprep.subr.bf16.mxu0 0
      %617 = vmatpush1.bf16.msra.mxu0 0
      %618 = vmatprep.subr.bf16.mxu0 0
      %619 = vmatpush1.bf16.msra.mxu0 0
      %620 = vmatprep.subr.bf16.mxu0 0
      %621 = vmatpush1.bf16.msra.mxu0 0
      %622 = vmatprep.subr.bf16.mxu0 0
      %623 = vmatpush1.bf16.msra.mxu0 0
      %624 = vmatprep.subr.bf16.mxu0 0
      %625 = vmatpush1.bf16.msra.mxu0 0
      %626 = vmatprep.subr.bf16.mxu0 0
      %627 = vmatpush1.bf16.msra.mxu0 0
      %628 = vmatprep.subr.bf16.mxu0 0
      %629 = vmatpush1.bf16.msra.mxu0 0
      %630 = vmatprep.subr.bf16.mxu0 0
      %631 = vmatpush1.bf16.msra.mxu0 0
      %632 = vmatprep.subr.bf16.mxu0 0
      %633 = vmatpush1.bf16.msra.mxu0 0
      %634 = vmatprep.subr.bf16.mxu0 0
      %635 = vmatpush1.bf16.msra.mxu0 0
      %636 = vmatprep.mubr.bf16.mxu0 0
      %637 = vmatmul.mubr.bf16.gmra.mrb[0].mxu0 %v598
      %v638 = vpop.f32.mrb[0].mxu0
      %v639 = vadd.f32 0.0, %v638
      %v640 = vpop.f32.mrb[0].mxu0
      %v641 = vpop.f32.mrb[0].mxu0
      %v642 = vpop.f32.mrb[0].mxu0
      %643 = vdwg.mxu0
      %v644 = vadd.f32 %v592, %v639
      %645 = vst.msk [vmem:[#allocation5] sm:$0xff] %vm513, %v644
      %646 = vst.msk [vmem:[#allocation3] sm:$0xff] %vm584, %v566
      %v647 = vld [vmem:[#allocation2] sm:$0xf]
      %v649 = vunpack.c.l.b16 %v647
      %v650 = vpack.c.b16 %v649, %v649
      %651 = vrot.lane.b32.xlu0 %v650, 120
      %v652 = vpop.permute.xlu0 %651
      %653 = vrot.lane.b32.xlu0 %v493, 120
      %v654 = vpop.permute.xlu0 %653
      %v656 = vsel %vm513, %v652, 0
      %v659 = vsel %vm513, %v654, 0
      %661 = vmatprep.subr.bf16.mxu0 0
      %662 = vmatpush1.bf16.xpose.msra.mxu0 %v659
      %663 = vmatprep.subr.bf16.mxu0 0
      %664 = vmatpush1.bf16.xpose.msra.mxu0 0
      %665 = vmatprep.subr.bf16.mxu0 0
      %666 = vmatpush1.bf16.xpose.msra.mxu0 0
      %667 = vmatprep.subr.bf16.mxu0 0
      %668 = vmatpush1.bf16.xpose.msra.mxu0 0
      %669 = vmatprep.subr.bf16.mxu0 0
      %670 = vmatpush1.bf16.xpose.msra.mxu0 0
      %671 = vmatprep.subr.bf16.mxu0 0
      %672 = vmatpush1.bf16.xpose.msra.mxu0 0
      %673 = vmatprep.subr.bf16.mxu0 0
      %674 = vmatpush1.bf16.xpose.msra.mxu0 0
      %675 = vmatprep.subr.bf16.mxu0 0
      %676 = vmatpush1.bf16.xpose.msra.mxu0 0
      %677 = vmatprep.subr.bf16.mxu0 0
      %678 = vmatpush1.bf16.xpose.msra.mxu0 0
      %679 = vmatprep.subr.bf16.mxu0 0
      %680 = vmatpush1.bf16.xpose.msra.mxu0 0
      %681 = vmatprep.subr.bf16.mxu0 0
      %682 = vmatpush1.bf16.xpose.msra.mxu0 0
      %683 = vmatprep.subr.bf16.mxu0 0
      %684 = vmatpush1.bf16.xpose.msra.mxu0 0
      %685 = vmatprep.subr.bf16.mxu0 0
      %686 = vmatpush1.bf16.xpose.msra.mxu0 0
      %687 = vmatprep.subr.bf16.mxu0 0
      %688 = vmatpush1.bf16.xpose.msra.mxu0 0
      %689 = vmatprep.subr.bf16.mxu0 0
      %690 = vmatpush1.bf16.xpose.msra.mxu0 0
      %691 = vmatprep.subr.bf16.mxu0 0
      %692 = vmatpush1.bf16.xpose.msra.mxu0 0
      %693 = vmatprep.mubr.bf16.mxu0 0
      %694 = vmatmul.mubr.bf16.gmra.mrb[0].mxu0 %v656
      %v695 = vpop.f32.mrb[0].mxu0
      %v696 = vadd.f32 0.0, %v695
      %v697 = vpop.f32.mrb[0].mxu0
      %v698 = vpop.f32.mrb[0].mxu0
      %v699 = vpop.f32.mrb[0].mxu0
      %700 = vdwg.mxu0
      %v701 = vmul.f32 %v696, 0.35355338
      %v702 = vadd.f32 %v701, %v511
      %s703 = scalar_lea.vmem [#allocation3], 8
      %v704 = vld [vmem:[%s703] sm:$0xff]
      %v705 = vsel %vm513, %v702, -inf
      %706 = vmax.xlane.f32.xlu0 %v705
      %v707 = vpop.xlane.xlu0 %706
      %v708 = vmax.f32 %v704, %v707
      %v709 = vsub.f32 %v704, %v708
      %v710 = vmul.f32 %v709, 1.442695
      %v711 = vpow.pop %v710
      %713 = vset.pattern.permute.xlu0 0
      %714 = vperm.xlu0 %713, %v708
      %v715 = vpop.permute.xlu0 %714
      %v717 = vsub.f32 %v702, %v715
      %v718 = vmul.f32 %v717, 1.442695
      %v719 = vpow.pop %v718
      %s720 = scalar_lea.vmem [#allocation4], 8
      %v721 = vld [vmem:[%s720] sm:$0xff]
      %v722 = vmul.f32 %v711, %v721
      %v723 = vsel %vm513, %v719, 0.0
      %724 = vadd.xlane.f32.xlu0 %v723
      %v725 = vpop.xlane.xlu0 %724
      %v726 = vadd.f32 %v722, %v725
      %727 = vst.msk [vmem:[%s720] sm:$0xff] %vm584, %v726
      %v728 = vld [vmem:[#allocation5] sm:$0xff]
      %730 = vset.pattern.permute.xlu0 0
      %731 = vperm.xlu0 %730, %v711
      %v732 = vpop.permute.xlu0 %731
      %v734 = vmul.f32 %v732, %v728
      %v735 = vpack.c.bf16 %v719, %v719
      %736 = vrot.lane.b32.xlu0 %v493, 88
      %v737 = vpop.permute.xlu0 %736
      %v739 = vsel %vm513, %v735, 0
      %v742 = vsel %vm600, %v737, 0
      %744 = vmatprep.subr.bf16.mxu0 0
      %745 = vmatpush1.bf16.msra.mxu0 %v742
      %746 = vmatprep.subr.bf16.mxu0 0
      %747 = vmatpush1.bf16.msra.mxu0 0
      %748 = vmatprep.subr.bf16.mxu0 0
      %749 = vmatpush1.bf16.msra.mxu0 0
      %750 = vmatprep.subr.bf16.mxu0 0
      %751 = vmatpush1.bf16.msra.mxu0 0
      %752 = vmatprep.subr.bf16.mxu0 0
      %753 = vmatpush1.bf16.msra.mxu0 0
      %754 = vmatprep.subr.bf16.mxu0 0
      %755 = vmatpush1.bf16.msra.mxu0 0
      %756 = vmatprep.subr.bf16.mxu0 0
      %757 = vmatpush1.bf16.msra.mxu0 0
      %758 = vmatprep.subr.bf16.mxu0 0
      %759 = vmatpush1.bf16.msra.mxu0 0
      %760 = vmatprep.subr.bf16.mxu0 0
      %761 = vmatpush1.bf16.msra.mxu0 0
      %762 = vmatprep.subr.bf16.mxu0 0
      %763 = vmatpush1.bf16.msra.mxu0 0
      %764 = vmatprep.subr.bf16.mxu0 0
      %765 = vmatpush1.bf16.msra.mxu0 0
      %766 = vmatprep.subr.bf16.mxu0 0
      %767 = vmatpush1.bf16.msra.mxu0 0
      %768 = vmatprep.subr.bf16.mxu0 0
      %769 = vmatpush1.bf16.msra.mxu0 0
      %770 = vmatprep.subr.bf16.mxu0 0
      %771 = vmatpush1.bf16.msra.mxu0 0
      %772 = vmatprep.subr.bf16.mxu0 0
      %773 = vmatpush1.bf16.msra.mxu0 0
      %774 = vmatprep.subr.bf16.mxu0 0
      %775 = vmatpush1.bf16.msra.mxu0 0
      %776 = vmatprep.mubr.bf16.mxu0 0
      %777 = vmatmul.mubr.bf16.gmra.mrb[0].mxu0 %v739
      %v778 = vpop.f32.mrb[0].mxu0
      %v779 = vadd.f32 0.0, %v778
      %v780 = vpop.f32.mrb[0].mxu0
      %v781 = vpop.f32.mrb[0].mxu0
      %v782 = vpop.f32.mrb[0].mxu0
      %783 = vdwg.mxu0
      %785 = vrot.lane.b32.xlu0 %v779, 8
      %v786 = vpop.permute.xlu0 %785
      %v788 = vadd.f32 %v734, %v786
      %vm789 = vcmask 130112
      %790 = vst.msk [vmem:[#allocation5] sm:$0xff] %vm789, %v788
      %791 = vst.msk [vmem:[%s703] sm:$0xff] %vm584, %v708
      %v792 = vld [vmem:[#allocation2] sm:$0xf]
      %v794 = vunpack.c.l.b16 %v792
      %v795 = vpack.c.b16 %v794, %v794
      %796 = vrot.lane.b32.xlu0 %v795, 112
      %v797 = vpop.permute.xlu0 %796
      %798 = vrot.lane.b32.xlu0 %v493, 112
      %v799 = vpop.permute.xlu0 %798
      %v801 = vsel %vm513, %v797, 0
      %v804 = vsel %vm513, %v799, 0
      %806 = vmatprep.subr.bf16.mxu0 0
      %807 = vmatpush1.bf16.xpose.msra.mxu0 %v804
      %808 = vmatprep.subr.bf16.mxu0 0
      %809 = vmatpush1.bf16.xpose.msra.mxu0 0
      %810 = vmatprep.subr.bf16.mxu0 0
      %811 = vmatpush1.bf16.xpose.msra.mxu0 0
      %812 = vmatprep.subr.bf16.mxu0 0
      %813 = vmatpush1.bf16.xpose.msra.mxu0 0
      %814 = vmatprep.subr.bf16.mxu0 0
      %815 = vmatpush1.bf16.xpose.msra.mxu0 0
      %816 = vmatprep.subr.bf16.mxu0 0
      %817 = vmatpush1.bf16.xpose.msra.mxu0 0
      %818 = vmatprep.subr.bf16.mxu0 0
      %819 = vmatpush1.bf16.xpose.msra.mxu0 0
      %820 = vmatprep.subr.bf16.mxu0 0
      %821 = vmatpush1.bf16.xpose.msra.mxu0 0
      %822 = vmatprep.subr.bf16.mxu0 0
      %823 = vmatpush1.bf16.xpose.msra.mxu0 0
      %824 = vmatprep.subr.bf16.mxu0 0
      %825 = vmatpush1.bf16.xpose.msra.mxu0 0
      %826 = vmatprep.subr.bf16.mxu0 0
      %827 = vmatpush1.bf16.xpose.msra.mxu0 0
      %828 = vmatprep.subr.bf16.mxu0 0
      %829 = vmatpush1.bf16.xpose.msra.mxu0 0
      %830 = vmatprep.subr.bf16.mxu0 0
      %831 = vmatpush1.bf16.xpose.msra.mxu0 0
      %832 = vmatprep.subr.bf16.mxu0 0
      %833 = vmatpush1.bf16.xpose.msra.mxu0 0
      %834 = vmatprep.subr.bf16.mxu0 0
      %835 = vmatpush1.bf16.xpose.msra.mxu0 0
      %836 = vmatprep.subr.bf16.mxu0 0
      %837 = vmatpush1.bf16.xpose.msra.mxu0 0
      %838 = vmatprep.mubr.bf16.mxu0 0
      %839 = vmatmul.mubr.bf16.gmra.mrb[0].mxu0 %v801
      %v840 = vpop.f32.mrb[0].mxu0
      %v841 = vadd.f32 0.0, %v840
      %v842 = vpop.f32.mrb[0].mxu0
      %v843 = vpop.f32.mrb[0].mxu0
      %v844 = vpop.f32.mrb[0].mxu0
      %845 = vdwg.mxu0
      %v846 = vmul.f32 %v841, 0.35355338
      %v847 = vadd.f32 %v846, %v511
      %s848 = scalar_lea.vmem [#allocation3], 16
      %v849 = vld [vmem:[%s848] sm:$0xff]
      %v850 = vsel %vm513, %v847, -inf
      %851 = vmax.xlane.f32.xlu0 %v850
      %v852 = vpop.xlane.xlu0 %851
      %v853 = vmax.f32 %v849, %v852
      %v854 = vsub.f32 %v849, %v853
      %v855 = vmul.f32 %v854, 1.442695
      %v856 = vpow.pop %v855
      %858 = vset.pattern.permute.xlu0 0
      %859 = vperm.xlu0 %858, %v853
      %v860 = vpop.permute.xlu0 %859
      %v862 = vsub.f32 %v847, %v860
      %v863 = vmul.f32 %v862, 1.442695
      %v864 = vpow.pop %v863
      %s865 = scalar_lea.vmem [#allocation4], 16
      %v866 = vld [vmem:[%s865] sm:$0xff]
      %v867 = vmul.f32 %v856, %v866
      %v868 = vsel %vm513, %v864, 0.0
      %869 = vadd.xlane.f32.xlu0 %v868
      %v870 = vpop.xlane.xlu0 %869
      %v871 = vadd.f32 %v867, %v870
      %872 = vst.msk [vmem:[%s865] sm:$0xff] %vm584, %v871
      %v873 = vld [vmem:[#allocation5] sm:$0xff]
      %875 = vset.pattern.permute.xlu0 0
      %876 = vperm.xlu0 %875, %v856
      %v877 = vpop.permute.xlu0 %876
      %v879 = vmul.f32 %v877, %v873
      %v880 = vpack.c.bf16 %v864, %v864
      %881 = vrot.lane.b32.xlu0 %v493, 80
      %v882 = vpop.permute.xlu0 %881
      %v884 = vsel %vm513, %v880, 0
      %v887 = vsel %vm600, %v882, 0
      %889 = vmatprep.subr.bf16.mxu0 0
      %890 = vmatpush1.bf16.msra.mxu0 %v887
      %891 = vmatprep.subr.bf16.mxu0 0
      %892 = vmatpush1.bf16.msra.mxu0 0
      %893 = vmatprep.subr.bf16.mxu0 0
      %894 = vmatpush1.bf16.msra.mxu0 0
      %895 = vmatprep.subr.bf16.mxu0 0
      %896 = vmatpush1.bf16.msra.mxu0 0
      %897 = vmatprep.subr.bf16.mxu0 0
      %898 = vmatpush1.bf16.msra.mxu0 0
      %899 = vmatprep.subr.bf16.mxu0 0
      %900 = vmatpush1.bf16.msra.mxu0 0
      %901 = vmatprep.subr.bf16.mxu0 0
      %902 = vmatpush1.bf16.msra.mxu0 0
      %903 = vmatprep.subr.bf16.mxu0 0
      %904 = vmatpush1.bf16.msra.mxu0 0
      %905 = vmatprep.subr.bf16.mxu0 0
      %906 = vmatpush1.bf16.msra.mxu0 0
      %907 = vmatprep.subr.bf16.mxu0 0
      %908 = vmatpush1.bf16.msra.mxu0 0
      %909 = vmatprep.subr.bf16.mxu0 0
      %910 = vmatpush1.bf16.msra.mxu0 0
      %911 = vmatprep.subr.bf16.mxu0 0
      %912 = vmatpush1.bf16.msra.mxu0 0
      %913 = vmatprep.subr.bf16.mxu0 0
      %914 = vmatpush1.bf16.msra.mxu0 0
      %915 = vmatprep.subr.bf16.mxu0 0
      %916 = vmatpush1.bf16.msra.mxu0 0
      %917 = vmatprep.subr.bf16.mxu0 0
      %918 = vmatpush1.bf16.msra.mxu0 0
      %919 = vmatprep.subr.bf16.mxu0 0
      %920 = vmatpush1.bf16.msra.mxu0 0
      %921 = vmatprep.mubr.bf16.mxu0 0
      %922 = vmatmul.mubr.bf16.gmra.mrb[0].mxu0 %v884
      %v923 = vpop.f32.mrb[0].mxu0
      %v924 = vadd.f32 0.0, %v923
      %v925 = vpop.f32.mrb[0].mxu0
      %v926 = vpop.f32.mrb[0].mxu0
      %v927 = vpop.f32.mrb[0].mxu0
      %928 = vdwg.mxu0
      %930 = vrot.lane.b32.xlu0 %v924, 16
      %v931 = vpop.permute.xlu0 %930
      %v933 = vadd.f32 %v879, %v931
      %vm934 = vcmask 195712
      %935 = vst.msk [vmem:[#allocation5] sm:$0xff] %vm934, %v933
      %936 = vst.msk [vmem:[%s848] sm:$0xff] %vm584, %v853
      %v937 = vld [vmem:[#allocation2] sm:$0xf]
      %v939 = vunpack.c.l.b16 %v937
      %v940 = vpack.c.b16 %v939, %v939
      %941 = vrot.lane.b32.xlu0 %v940, 104
      %v942 = vpop.permute.xlu0 %941
      %943 = vrot.lane.b32.xlu0 %v493, 104
      %v944 = vpop.permute.xlu0 %943
      %v946 = vsel %vm513, %v942, 0
      %v949 = vsel %vm513, %v944, 0
      %951 = vmatprep.subr.bf16.mxu0 0
      %952 = vmatpush1.bf16.xpose.msra.mxu0 %v949
      %953 = vmatprep.subr.bf16.mxu0 0
      %954 = vmatpush1.bf16.xpose.msra.mxu0 0
      %955 = vmatprep.subr.bf16.mxu0 0
      %956 = vmatpush1.bf16.xpose.msra.mxu0 0
      %957 = vmatprep.subr.bf16.mxu0 0
      %958 = vmatpush1.bf16.xpose.msra.mxu0 0
      %959 = vmatprep.subr.bf16.mxu0 0
      %960 = vmatpush1.bf16.xpose.msra.mxu0 0
      %961 = vmatprep.subr.bf16.mxu0 0
      %962 = vmatpush1.bf16.xpose.msra.mxu0 0
      %963 = vmatprep.subr.bf16.mxu0 0
      %964 = vmatpush1.bf16.xpose.msra.mxu0 0
      %965 = vmatprep.subr.bf16.mxu0 0
      %966 = vmatpush1.bf16.xpose.msra.mxu0 0
      %967 = vmatprep.subr.bf16.mxu0 0
      %968 = vmatpush1.bf16.xpose.msra.mxu0 0
      %969 = vmatprep.subr.bf16.mxu0 0
      %970 = vmatpush1.bf16.xpose.msra.mxu0 0
      %971 = vmatprep.subr.bf16.mxu0 0
      %972 = vmatpush1.bf16.xpose.msra.mxu0 0
      %973 = vmatprep.subr.bf16.mxu0 0
      %974 = vmatpush1.bf16.xpose.msra.mxu0 0
      %975 = vmatprep.subr.bf16.mxu0 0
      %976 = vmatpush1.bf16.xpose.msra.mxu0 0
      %977 = vmatprep.subr.bf16.mxu0 0
      %978 = vmatpush1.bf16.xpose.msra.mxu0 0
      %979 = vmatprep.subr.bf16.mxu0 0
      %980 = vmatpush1.bf16.xpose.msra.mxu0 0
      %981 = vmatprep.subr.bf16.mxu0 0
      %982 = vmatpush1.bf16.xpose.msra.mxu0 0
      %983 = vmatprep.mubr.bf16.mxu0 0
      %984 = vmatmul.mubr.bf16.gmra.mrb[0].mxu0 %v946
      %v985 = vpop.f32.mrb[0].mxu0
      %v986 = vadd.f32 0.0, %v985
      %v987 = vpop.f32.mrb[0].mxu0
      %v988 = vpop.f32.mrb[0].mxu0
      %v989 = vpop.f32.mrb[0].mxu0
      %990 = vdwg.mxu0
      %v991 = vmul.f32 %v986, 0.35355338
      %v992 = vadd.f32 %v991, %v511
      %s993 = scalar_lea.vmem [#allocation3], 24
      %v994 = vld [vmem:[%s993] sm:$0xff]
      %v995 = vsel %vm513, %v992, -inf
      %996 = vmax.xlane.f32.xlu0 %v995
      %v997 = vpop.xlane.xlu0 %996
      %v998 = vmax.f32 %v994, %v997
      %v999 = vsub.f32 %v994, %v998
      %v1000 = vmul.f32 %v999, 1.442695
      %v1001 = vpow.pop %v1000
      %1003 = vset.pattern.permute.xlu0 0
      %1004 = vperm.xlu0 %1003, %v998
      %v1005 = vpop.permute.xlu0 %1004
      %v1007 = vsub.f32 %v992, %v1005
      %v1008 = vmul.f32 %v1007, 1.442695
      %v1009 = vpow.pop %v1008
      %s1010 = scalar_lea.vmem [#allocation4], 24
      %v1011 = vld [vmem:[%s1010] sm:$0xff]
      %v1012 = vmul.f32 %v1001, %v1011
      %v1013 = vsel %vm513, %v1009, 0.0
      %1014 = vadd.xlane.f32.xlu0 %v1013
      %v1015 = vpop.xlane.xlu0 %1014
      %v1016 = vadd.f32 %v1012, %v1015
      %1017 = vst.msk [vmem:[%s1010] sm:$0xff] %vm584, %v1016
      %v1018 = vld [vmem:[#allocation5] sm:$0xff]
      %1020 = vset.pattern.permute.xlu0 0
      %1021 = vperm.xlu0 %1020, %v1001
      %v1022 = vpop.permute.xlu0 %1021
      %v1024 = vmul.f32 %v1022, %v1018
      %v1025 = vpack.c.bf16 %v1009, %v1009
      %1026 = vrot.lane.b32.xlu0 %v493, 72
      %v1027 = vpop.permute.xlu0 %1026
      %v1029 = vsel %vm513, %v1025, 0
      %v1032 = vsel %vm600, %v1027, 0
      %1034 = vmatprep.subr.bf16.mxu0 0
      %1035 = vmatpush1.bf16.msra.mxu0 %v1032
      %1036 = vmatprep.subr.bf16.mxu0 0
      %1037 = vmatpush1.bf16.msra.mxu0 0
      %1038 = vmatprep.subr.bf16.mxu0 0
      %1039 = vmatpush1.bf16.msra.mxu0 0
      %1040 = vmatprep.subr.bf16.mxu0 0
      %1041 = vmatpush1.bf16.msra.mxu0 0
      %1042 = vmatprep.subr.bf16.mxu0 0
      %1043 = vmatpush1.bf16.msra.mxu0 0
      %1044 = vmatprep.subr.bf16.mxu0 0
      %1045 = vmatpush1.bf16.msra.mxu0 0
      %1046 = vmatprep.subr.bf16.mxu0 0
      %1047 = vmatpush1.bf16.msra.mxu0 0
      %1048 = vmatprep.subr.bf16.mxu0 0
      %1049 = vmatpush1.bf16.msra.mxu0 0
      %1050 = vmatprep.subr.bf16.mxu0 0
      %1051 = vmatpush1.bf16.msra.mxu0 0
      %1052 = vmatprep.subr.bf16.mxu0 0
      %1053 = vmatpush1.bf16.msra.mxu0 0
      %1054 = vmatprep.subr.bf16.mxu0 0
      %1055 = vmatpush1.bf16.msra.mxu0 0
      %1056 = vmatprep.subr.bf16.mxu0 0
      %1057 = vmatpush1.bf16.msra.mxu0 0
      %1058 = vmatprep.subr.bf16.mxu0 0
      %1059 = vmatpush1.bf16.msra.mxu0 0
      %1060 = vmatprep.subr.bf16.mxu0 0
      %1061 = vmatpush1.bf16.msra.mxu0 0
      %1062 = vmatprep.subr.bf16.mxu0 0
      %1063 = vmatpush1.bf16.msra.mxu0 0
      %1064 = vmatprep.subr.bf16.mxu0 0
      %1065 = vmatpush1.bf16.msra.mxu0 0
      %1066 = vmatprep.mubr.bf16.mxu0 0
      %1067 = vmatmul.mubr.bf16.gmra.mrb[0].mxu0 %v1029
      %v1068 = vpop.f32.mrb[0].mxu0
      %v1069 = vadd.f32 0.0, %v1068
      %v1070 = vpop.f32.mrb[0].mxu0
      %v1071 = vpop.f32.mrb[0].mxu0
      %v1072 = vpop.f32.mrb[0].mxu0
      %1073 = vdwg.mxu0
      %1075 = vrot.lane.b32.xlu0 %v1069, 24
      %v1076 = vpop.permute.xlu0 %1075
      %v1078 = vadd.f32 %v1024, %v1076
      %vm1079 = vcmask 261312
      %1080 = vst.msk [vmem:[#allocation5] sm:$0xff] %vm1079, %v1078
      %1081 = vst.msk [vmem:[%s993] sm:$0xff] %vm584, %v998
      // Predicated region
      $region53: #{forward.23} parent=47 // pred_check
        %p1082 = pneg %p340
      $region54: #{forward.23} parent=47 // pred_check_branch
        %1084 = sbr.rel (%p1082) target = $region56
      $region55: #{forward.23} parent=47 // pred_region
        %v1085 = vld [vmem:[#allocation5] sm:$0xff]
        %v1086 = vld [vmem:[#allocation4] sm:$0xff]
        %v1087 = vrcp.pop %v1086
        %1089 = vset.pattern.permute.xlu0 0
        %1090 = vperm.xlu0 %1089, %v1087
        %v1091 = vpop.permute.xlu0 %1090
        %v1093 = vmul.f32 %v1085, %v1091
        %1094 = vst.msk [vmem:[#allocation5] sm:$0xff] %vm513, %v1093
        %v1095 = vld [vmem:[#allocation5] sm:$0xff]
        %v1096 = vld [vmem:[%s720] sm:$0xff]
        %v1097 = vrcp.pop %v1096
        %1099 = vset.pattern.permute.xlu0 0
        %1100 = vperm.xlu0 %1099, %v1097
        %v1101 = vpop.permute.xlu0 %1100
        %v1103 = vmul.f32 %v1095, %v1101
        %1104 = vst.msk [vmem:[#allocation5] sm:$0xff] %vm789, %v1103
        %v1105 = vld [vmem:[#allocation5] sm:$0xff]
        %v1106 = vld [vmem:[%s865] sm:$0xff]
        %v1107 = vrcp.pop %v1106
        %1109 = vset.pattern.permute.xlu0 0
        %1110 = vperm.xlu0 %1109, %v1107
        %v1111 = vpop.permute.xlu0 %1110
        %v1113 = vmul.f32 %v1105, %v1111
        %1114 = vst.msk [vmem:[#allocation5] sm:$0xff] %vm934, %v1113
        %v1115 = vld [vmem:[#allocation5] sm:$0xff]
        %v1116 = vld [vmem:[%s1010] sm:$0xff]
        %v1117 = vrcp.pop %v1116
        %1119 = vset.pattern.permute.xlu0 0
        %1120 = vperm.xlu0 %1119, %v1117
        %v1121 = vpop.permute.xlu0 %1120
        %v1123 = vmul.f32 %v1115, %v1121
        %1124 = vst.msk [vmem:[#allocation5] sm:$0xff] %vm1079, %v1123
        %v1125 = vld [vmem:[#allocation5] sm:$0xff]
        %v1126 = vpack.c.bf16 %v1125, %v1125
        %vm1127 = vcmask 257024
        %1128 = vst.msk [vmem:[%s338] sm:$0xf] %vm1127, %v1126
      $region56: #{forward.23} parent=47 // pred_fallthru
        _
      %p1129 = scmp.lt.s32.totalorder %s22, 1
      %s1130 = scalar_select %p1129, %s22, 1
      %s1131 = smul.addr %s1130, 4
      %s1132 = scalar_lea.vmem %s7, %s1131
      // Predicated region
      $region57: #{forward.23} parent=47 // pred_check
        %p1133 = pneg %p214
      $region58: #{forward.23} parent=47 // pred_check_branch
        %1135 = sbr.rel (%p1133) target = $region60
      $region59: #{forward.23} parent=47 // pred_region
        _
      $region60: #{forward.23} parent=47 // pred_fallthru
        _
    $region48: #{forward.23} parent=5 // pred_fallthru
      _
    %p1136 = scmp.le.s32.totalorder 2, %s13
    // Predicated region
    $region61: #{forward.23} parent=5 // pred_check
      %p1137 = pneg %p1136
    $region62: #{forward.23} parent=5 // pred_check_branch
      %1139 = sbr.rel (%p1137) target = $region64
    $region63: #{forward.23} parent=5 // pred_region
      %s1140 = ssub.s32 %s13, 2
      // Predicated region
      $region65: #{forward.23} parent=63 // pred_check
        %p1141 = pneg %p220
      $region66: #{forward.23} parent=63 // pred_check_branch
        %1143 = sbr.rel (%p1141) target = $region68
      $region67: #{forward.23} parent=63 // pred_region
        %p1144 = scmp.lt.s32.totalorder %s24, 1
        %s1145 = scalar_select %p1144, %s24, 1
        %s1146 = smul.addr %s1145, 4
        %s1147 = scalar_lea.vmem %s7, %s1146
      $region68: #{forward.23} parent=63 // pred_fallthru
        _
    $region64: #{forward.23} parent=5 // pred_fallthru
      _
  $region6: #{forward.23} parent=0 // loop_footer
    %s17 = sadd.s32 1, %s13
  $region7: #{forward.23} parent=0 // loop_footer_branch
    %12 = sbr.rel target = $region3
  $region8: #{forward.23} parent=0 // loop_exit
    _

// kernel: forward.33
$region0: #{forward.33}
  #allocation0 [shape = 'u32[]', space=smem, size = 0x4, offset = 0x4, fixed_abs, tag = 'smem constant byte address 0x4 - core index']
  #allocation1 [shape = 'u32[144,128]{1,0:T(1,128)}', space=vmem, size = 0x12000, scoped, tag = 'internal scratch']
  #allocation2 [shape = 'f32[8,64]{1,0:T(8,128)}', space=vmem, size = 0x1000, scoped, tag = 'scratch operand']
  %s0 = inlined_call_operand.vmem [shape: bf16[16,32], index: 0, kind: input, shape index: {}]
  %s1 = inlined_call_operand.vmem [shape: bf16[64,32], index: 1, kind: input, shape index: {}]
  %s2 = inlined_call_operand.vmem [shape: f32[1,64], index: 2, kind: input, shape index: {}]
  %s3 = inlined_call_operand.hbm [shape: f32[16,64], index: 3, kind: output, shape index: {}]
  %s4 = sld [smem:[#allocation0]]
  $region53: #{forward.33} parent=0
    _
  %s6 = ssub.s32 1, %s4
  %s7 = scalar_select 0, %s6, %s4
  $region1: #{forward.33} parent=0
    #allocation3 [shape = 'u8[8192]{0}', space=vmem, size = 0x2000, scoped, tag = 'output window, operand 0']
    #allocation4 [shape = 's32[2]{0}', space=sflag, size = 0x8, scoped, tag = 'scoped memory for forward.33']
    %8 = vsyncpa [#allocation4], 0
    %s9 = scalar_lea.sflag [#allocation4], 1
    %10 = vsyncpa %s9, 0
    loop: start=0, step=1, limit=4
    $region2: #{forward.33} parent=1 // loop_pre_header
      _
    $region3: #{forward.33} parent=1 // loop_header
      %s12 = sphi 0, %s16
      %p13 = scmp.ge.s32.totalorder %s12, 4
      %s19 = sphi 0, %s38
      %s20 = sphi 0, %s34
      %s21 = sphi 0, %s30
      %s22 = sphi 0, %s19
      %s23 = sphi 0, %s20
      %s24 = sphi 0, %s21
      %s25 = sphi 0, %s22
      %s26 = sphi 0, %s23
      %s27 = sphi 0, %s24
      %s43 = sphi 0, %s45
      %s46 = sphi 0, %s43
      %s47 = sphi 0, %s46
      %s63 = sphi 0, %s47
      %s71 = sphi 0, %s73
      %s74 = sphi 0, %s71
      %s75 = sphi 0, %s74
      %s91 = sphi 0, %s75
      %s97 = sphi 0, %s99
      %s100 = sphi 0, %s97
      %s101 = sphi 0, %s100
      %s117 = sphi 0, %s101
      %s125 = sphi 0, %s127
      %s128 = sphi 0, %s125
      %s129 = sphi 0, %s128
      %s145 = sphi 0, %s129
    $region4: #{forward.33} parent=1 // loop_header_branch
      %15 = sbr.rel (%p13) target = $region8
    $region5: #{forward.33} parent=1 // loop_body
      %s17 = ssub.s32 %s12, 1
      %s18 = ssub.s32 %s12, 2
      %s28 = sadd.s32 1, %s21
      %p29 = scmp.ge.s32.totalorder %s28, 1
      %s30 = scalar_select %p29, 0, %s28
      %s31 = sadd.s32 1, %s20
      %s32 = scalar_select %p29, %s31, %s20
      %p33 = scmp.ge.s32.totalorder %s32, 1
      %s34 = scalar_select %p33, 0, %s32
      %s35 = sadd.s32 1, %s19
      %s36 = scalar_select %p33, %s35, %s19
      %p37 = scmp.ge.s32.totalorder %s36, 2
      %s38 = scalar_select %p37, 0, %s36
      %s39 = ssub.s32 %s19, %s38
      %s40 = ssub.s32 %s21, %s30
      %s41 = sor.u32 %s39, %s40
      %p42 = scmp.eq.s32.totalorder %s41, 0
      %s44 = sadd.s32 %s43, 1
      %s45 = scalar_select %p42, %s43, %s44
      %p48 = pneg %p42
      %p49 = scmp.eq.s32.totalorder %s12, 1
      %p50 = por %p48, %p49
      %p51 = scmp.ne.s32.totalorder %s43, %s46
      %p52 = scmp.eq.s32.totalorder %s12, 0
      %p53 = por %p51, %p52
      %p54 = scmp.ne.s32.totalorder %s43, %s46
      %p55 = scmp.eq.s32.totalorder %s17, 1
      %p56 = por %p54, %p55
      %p57 = scmp.ne.s32.totalorder %s46, %s47
      %p58 = scmp.eq.s32.totalorder %s17, 0
      %p59 = por %p57, %p58
      %p60 = scmp.ne.s32.totalorder %s46, %s47
      %p61 = scmp.eq.s32.totalorder %s18, 1
      %p62 = por %p60, %p61
      %p64 = scmp.ne.s32.totalorder %s47, %s63
      %p65 = scmp.eq.s32.totalorder %s18, 0
      %p66 = por %p64, %p65
      %s67 = ssub.s32 %s20, %s34
      %s68 = ssub.s32 %s21, %s30
      %s69 = sor.u32 %s67, %s68
      %p70 = scmp.eq.s32.totalorder %s69, 0
      %s72 = sadd.s32 %s71, 1
      %s73 = scalar_select %p70, %s71, %s72
      %p76 = pneg %p70
      %p77 = scmp.eq.s32.totalorder %s12, 1
      %p78 = por %p76, %p77
      %p79 = scmp.ne.s32.totalorder %s71, %s74
      %p80 = scmp.eq.s32.totalorder %s12, 0
      %p81 = por %p79, %p80
      %p82 = scmp.ne.s32.totalorder %s71, %s74
      %p83 = scmp.eq.s32.totalorder %s17, 1
      %p84 = por %p82, %p83
      %p85 = scmp.ne.s32.totalorder %s74, %s75
      %p86 = scmp.eq.s32.totalorder %s17, 0
      %p87 = por %p85, %p86
      %p88 = scmp.ne.s32.totalorder %s74, %s75
      %p89 = scmp.eq.s32.totalorder %s18, 1
      %p90 = por %p88, %p89
      %p92 = scmp.ne.s32.totalorder %s75, %s91
      %p93 = scmp.eq.s32.totalorder %s18, 0
      %p94 = por %p92, %p93
      %s95 = ssub.s32 %s20, %s34
      %p96 = scmp.eq.s32.totalorder %s95, 0
      %s98 = sadd.s32 %s97, 1
      %s99 = scalar_select %p96, %s97, %s98
      %p102 = pneg %p96
      %p103 = scmp.eq.s32.totalorder %s12, 1
      %p104 = por %p102, %p103
      %p105 = scmp.ne.s32.totalorder %s97, %s100
      %p106 = scmp.eq.s32.totalorder %s12, 0
      %p107 = por %p105, %p106
      %p108 = scmp.ne.s32.totalorder %s97, %s100
      %p109 = scmp.eq.s32.totalorder %s17, 1
      %p110 = por %p108, %p109
      %p111 = scmp.ne.s32.totalorder %s100, %s101
      %p112 = scmp.eq.s32.totalorder %s17, 0
      %p113 = por %p111, %p112
      %p114 = scmp.ne.s32.totalorder %s100, %s101
      %p115 = scmp.eq.s32.totalorder %s18, 1
      %p116 = por %p114, %p115
      %p118 = scmp.ne.s32.totalorder %s101, %s117
      %p119 = scmp.eq.s32.totalorder %s18, 0
      %p120 = por %p118, %p119
      %s121 = ssub.s32 %s19, %s38
      %s122 = ssub.s32 %s20, %s34
      %s123 = sor.u32 %s121, %s122
      %p124 = scmp.eq.s32.totalorder %s123, 0
      %s126 = sadd.s32 %s125, 1
      %s127 = scalar_select %p124, %s125, %s126
      %p130 = pneg %p124
      %p131 = scmp.eq.s32.totalorder %s12, 1
      %p132 = por %p130, %p131
      %p133 = scmp.ne.s32.totalorder %s125, %s128
      %p134 = scmp.eq.s32.totalorder %s12, 0
      %p135 = por %p133, %p134
      %p136 = scmp.ne.s32.totalorder %s125, %s128
      %p137 = scmp.eq.s32.totalorder %s17, 1
      %p138 = por %p136, %p137
      %p139 = scmp.ne.s32.totalorder %s128, %s129
      %p140 = scmp.eq.s32.totalorder %s17, 0
      %p141 = por %p139, %p140
      %p142 = scmp.ne.s32.totalorder %s128, %s129
      %p143 = scmp.eq.s32.totalorder %s18, 1
      %p144 = por %p142, %p143
      %p146 = scmp.ne.s32.totalorder %s129, %s145
      %p147 = scmp.eq.s32.totalorder %s18, 0
      %p148 = por %p146, %p147
      %p149 = scmp.le.s32.totalorder 1, %s12
      %p150 = scmp.lt.s32.totalorder %s12, 3
      %p151 = pnand %p149, %p150
      %p152 = pneg %p151
      // Predicated region
      $region9: #{forward.33} parent=5 // pred_check
        _
      $region10: #{forward.33} parent=5 // pred_check_branch
        %154 = sbr.rel (%p151) target = $region12
      $region11: #{forward.33} parent=5 // pred_region
        %s155 = ssub.s32 %s12, 1
        // Predicated region
        $region13: #{forward.33} parent=11 // pred_check
          %p156 = pneg %p87
        $region14: #{forward.33} parent=11 // pred_check_branch
          %158 = sbr.rel (%p156) target = $region16
        $region15: #{forward.33} parent=11 // pred_region
          %s159 = smul.u32 8, %s23
          %p160 = scmp.lt.s32.totalorder %s159, 7
          %s161 = scalar_select %p160, %s159, 7
          %p162 = scmp.lt.s32.totalorder %s24, 0
          %s163 = scalar_select %p162, %s24, 0
          %s164 = sadd.s32 %s163, %s161
          %s165 = smul.addr %s164, 4
          %s166 = scalar_lea.vmem %s1, %s165
          %s167 = smul.u32 8, %s23
        $region16: #{forward.33} parent=11 // pred_fallthru
          _
        // Predicated region
        $region17: #{forward.33} parent=11 // pred_check
          %p168 = pneg %p113
        $region18: #{forward.33} parent=11 // pred_check_branch
          %170 = sbr.rel (%p168) target = $region20
        $region19: #{forward.33} parent=11 // pred_region
          %p171 = scmp.lt.s32.totalorder %s23, 0
          %s172 = scalar_select %p171, %s23, 0
          %s173 = scalar_lea.vmem %s2, %s172
        $region20: #{forward.33} parent=11 // pred_fallthru
          _
      $region12: #{forward.33} parent=5 // pred_fallthru
        _
      %p174 = scmp.lt.s32.totalorder %s12, 2
      // Predicated region
      $region21: #{forward.33} parent=5 // pred_check
        %p175 = pneg %p174
      $region22: #{forward.33} parent=5 // pred_check_branch
        %177 = sbr.rel (%p175) target = $region24
      $region23: #{forward.33} parent=5 // pred_region
        // Predicated region
        $region25: #{forward.33} parent=23 // pred_check
          %p178 = pneg %p53
        $region26: #{forward.33} parent=23 // pred_check_branch
          %180 = sbr.rel (%p178) target = $region28
        $region27: #{forward.33} parent=23 // pred_region
          %p181 = scmp.lt.s32.totalorder %s19, 1
          %s182 = scalar_select %p181, %s19, 1
          %p183 = scmp.lt.s32.totalorder %s21, 0
          %s184 = scalar_select %p183, %s21, 0
          %s185 = sadd.s32 %s184, %s182
          %s186 = smul.addr %s185, 4
          %s187 = scalar_lea.vmem %s0, %s186
        $region28: #{forward.33} parent=23 // pred_fallthru
          _
      $region24: #{forward.33} parent=5 // pred_fallthru
        _
      %p188 = scmp.le.s32.totalorder 1, %s12
      %p189 = scmp.lt.s32.totalorder %s12, 3
      %p190 = pnand %p188, %p189
      %p191 = pneg %p190
      // Predicated region
      $region29: #{forward.33} parent=5 // pred_check
        _
      $region30: #{forward.33} parent=5 // pred_check_branch
        %193 = sbr.rel (%p190) target = $region32
      $region31: #{forward.33} parent=5 // pred_region
        %s194 = ssub.s32 %s12, 1
        %p195 = scmp.lt.s32.totalorder %s22, 1
        %s196 = scalar_select %p195, %s22, 1
        %p197 = scmp.lt.s32.totalorder %s24, 0
        %s198 = scalar_select %p197, %s24, 0
        %s199 = sadd.s32 %s198, %s196
        %s200 = smul.addr %s199, 4
        %s201 = scalar_lea.vmem %s0, %s200
        %p202 = pneg %p59
        %p203 = pneg %p56
        %s204 = smul.u32 8, %s23
        %p205 = scmp.lt.s32.totalorder %s204, 7
        %s206 = scalar_select %p205, %s204, 7
        %p207 = scmp.lt.s32.totalorder %s24, 0
        %s208 = scalar_select %p207, %s24, 0
        %s209 = sadd.s32 %s208, %s206
        %s210 = smul.addr %s209, 4
        %s211 = scalar_lea.vmem %s1, %s210
        %p212 = pneg %p87
        %p213 = pneg %p84
        %p214 = scmp.lt.s32.totalorder %s23, 0
        %s215 = scalar_select %p214, %s23, 0
        %s216 = scalar_lea.vmem %s2, %s215
        %p217 = pneg %p113
        %p218 = pneg %p110
        %p219 = pneg %p141
        %p220 = pneg %p138
        %s221 = sand.u32 %s128, 1
        %s222 = scalar_lea.sflag [#allocation4], %s221
        %s223 = sand.u32 %s128, 1
        %s224 = smul.addr %s223, 8
        %s225 = scalar_lea.vmem [#allocation3], %s224
        %p226 = scmp.lt.s32.totalorder %s22, 1
        %s227 = scalar_select %p226, %s22, 1
        %p228 = scmp.lt.s32.totalorder %s24, 0
        %s229 = scalar_select %p228, %s24, 0
        %s230 = sadd.s32 %s229, %s227
        %s231 = smul.addr %s230, 4
        %s232 = scalar_lea.vmem %s0, %s231
        %s233 = smul.u32 8, %s23
        %p234 = scmp.lt.s32.totalorder %s233, 7
        %s235 = scalar_select %p234, %s233, 7
        %p236 = scmp.lt.s32.totalorder %s24, 0
        %s237 = scalar_select %p236, %s24, 0
        %s238 = sadd.s32 %s237, %s235
        %s239 = smul.addr %s238, 4
        %s240 = scalar_lea.vmem %s1, %s239
        %s241 = smul.u32 8, %s23
        %p242 = scmp.lt.s32.totalorder %s23, 0
        %s243 = scalar_select %p242, %s23, 0
        %s244 = scalar_lea.vmem %s2, %s243
        %p246 = scmp.eq.s32.totalorder %s24, 0
        // Predicated region
        $region33: #{forward.33} parent=31 // pred_check
          %p247 = pneg %p246
        $region34: #{forward.33} parent=31 // pred_check_branch
          %249 = sbr.rel (%p247) target = $region36
        $region35: #{forward.33} parent=31 // pred_region
          %vm250 = vcmask 523264
          %251 = vst.msk [vmem:[#allocation2] sm:$0xff] %vm250, 0.0
        $region36: #{forward.33} parent=31 // pred_fallthru
          _
        %v252 = vld [vmem:[#allocation2] sm:$0xff]
        %v253 = vld [vmem:[%s232] sm:$0xf]
        %v254 = vld [vmem:[%s240] sm:$0xf]
        %v255 = vld [vmem:[%s240 + $0x4] sm:$0xf]
        %v256 = vld [vmem:[%s240 + $0x8] sm:$0xf]
        %v257 = vld [vmem:[%s240 + $0xc] sm:$0xf]
        %v258 = vld [vmem:[%s240 + $0x10] sm:$0xf]
        %v259 = vld [vmem:[%s240 + $0x14] sm:$0xf]
        %v260 = vld [vmem:[%s240 + $0x18] sm:$0xf]
        %v261 = vld [vmem:[%s240 + $0x1c] sm:$0xf]
        %v270 = vunpack.c.l.b16 %v254
        %v271 = vunpack.c.l.b16 %v255
        %v272 = vunpack.c.l.b16 %v256
        %v273 = vunpack.c.l.b16 %v257
        %v274 = vunpack.c.l.b16 %v258
        %v275 = vunpack.c.l.b16 %v259
        %v276 = vunpack.c.l.b16 %v260
        %v277 = vunpack.c.l.b16 %v261
        %v278 = vpack.c.b16 %v271, %v270
        %v279 = vpack.c.b16 %v273, %v272
        %v280 = vpack.c.b16 %v275, %v274
        %v281 = vpack.c.b16 %v277, %v276
        %vm282 = vcmask 261120
        %v284 = vsel %vm282, %v253, 0
        %v287 = vsel %vm282, %v278, 0
        %v290 = vsel %vm282, %v279, 0
        %v293 = vsel %vm282, %v280, 0
        %v296 = vsel %vm282, %v281, 0
        %298 = vmatprep.subr.bf16.mxu0 0
        %299 = vmatpush1.bf16.xpose.msra.mxu0 %v287
        %300 = vmatprep.subr.bf16.mxu0 0
        %301 = vmatpush1.bf16.xpose.msra.mxu0 %v290
        %302 = vmatprep.subr.bf16.mxu0 0
        %303 = vmatpush1.bf16.xpose.msra.mxu0 %v293
        %304 = vmatprep.subr.bf16.mxu0 0
        %305 = vmatpush1.bf16.xpose.msra.mxu0 %v296
        %306 = vmatprep.subr.bf16.mxu0 0
        %307 = vmatpush1.bf16.xpose.msra.mxu0 0
        %308 = vmatprep.subr.bf16.mxu0 0
        %309 = vmatpush1.bf16.xpose.msra.mxu0 0
        %310 = vmatprep.subr.bf16.mxu0 0
        %311 = vmatpush1.bf16.xpose.msra.mxu0 0
        %312 = vmatprep.subr.bf16.mxu0 0
        %313 = vmatpush1.bf16.xpose.msra.mxu0 0
        %314 = vmatprep.subr.bf16.mxu0 0
        %315 = vmatpush1.bf16.xpose.msra.mxu0 0
        %316 = vmatprep.subr.bf16.mxu0 0
        %317 = vmatpush1.bf16.xpose.msra.mxu0 0
        %318 = vmatprep.subr.bf16.mxu0 0
        %319 = vmatpush1.bf16.xpose.msra.mxu0 0
        %320 = vmatprep.subr.bf16.mxu0 0
        %321 = vmatpush1.bf16.xpose.msra.mxu0 0
        %322 = vmatprep.subr.bf16.mxu0 0
        %323 = vmatpush1.bf16.xpose.msra.mxu0 0
        %324 = vmatprep.subr.bf16.mxu0 0
        %325 = vmatpush1.bf16.xpose.msra.mxu0 0
        %326 = vmatprep.subr.bf16.mxu0 0
        %327 = vmatpush1.bf16.xpose.msra.mxu0 0
        %328 = vmatprep.subr.bf16.mxu0 0
        %329 = vmatpush1.bf16.xpose.msra.mxu0 0
        %330 = vmatprep.mubr.bf16.mxu0 0
        %331 = vmatmul.mubr.bf16.gmra.mrb[0].mxu0 %v284
        %v332 = vpop.f32.mrb[0].mxu0
        %v333 = vadd.f32 0.0, %v332
        %v334 = vpop.f32.mrb[0].mxu0
        %v335 = vpop.f32.mrb[0].mxu0
        %v336 = vpop.f32.mrb[0].mxu0
        %337 = vdwg.mxu0
        %v338 = vadd.f32 %v252, %v333
        %vm339 = vcmask 523264
        %340 = vst.msk [vmem:[#allocation2] sm:$0xff] %vm339, %v338
        // Predicated region
        $region37: #{forward.33} parent=31 // pred_check
          %p341 = pneg %p246
        $region38: #{forward.33} parent=31 // pred_check_branch
          %343 = sbr.rel (%p341) target = $region40
        $region39: #{forward.33} parent=31 // pred_region
          %v344 = vld [vmem:[#allocation2] sm:$0xff]
          %v345 = vld [vmem:[%s244] sm:$0x1]
          %v347 = vlaneseq
          %v348 = vshrl.u32 %v347, 7
          %v349 = vsub.s32 0, %v348
          %v350 = vrot.slane %v345, %v349
          %v352 = vadd.f32 %v344, %v350
          %353 = vst.msk [vmem:[%s225] sm:$0xff] %vm339, %v352
        $region40: #{forward.33} parent=31 // pred_fallthru
          _
        %s354 = sand.u32 %s128, 1
        %s355 = scalar_lea.sflag [#allocation4], %s354
        %s356 = sand.u32 %s128, 1
        %s357 = smul.addr %s356, 8
        %s358 = scalar_lea.vmem [#allocation3], %s357
        // Predicated region
        $region41: #{forward.33} parent=31 // pred_check
          %p359 = pneg %p138
        $region42: #{forward.33} parent=31 // pred_check_branch
          %361 = sbr.rel (%p359) target = $region44
        $region43: #{forward.33} parent=31 // pred_region
          %s363 = ssub.s32 128, 128
          %364 = vsyncadd %s355, %s363
          %s365 = sadd.s32 %s23, %s22
          %s366 = smul.addr %s365, 128
          %s367 = scalar_lea.hbm %s3, %s366
          %s369 = sshll.u32 %s358, 4
          %s370 = int_to_ptr.vmem [resolvable:$true] %s369
          %372 = dma.vmem_to_hbm [thread:$0]  %s370, 128, %s367, %s355
        $region44: #{forward.33} parent=31 // pred_fallthru
          _
      $region32: #{forward.33} parent=5 // pred_fallthru
        _
      %p373 = scmp.le.s32.totalorder 2, %s12
      // Predicated region
      $region45: #{forward.33} parent=5 // pred_check
        %p374 = pneg %p373
      $region46: #{forward.33} parent=5 // pred_check_branch
        %376 = sbr.rel (%p374) target = $region48
      $region47: #{forward.33} parent=5 // pred_region
        %s377 = ssub.s32 %s12, 2
        // Predicated region
        $region49: #{forward.33} parent=47 // pred_check
          %p378 = pneg %p144
        $region50: #{forward.33} parent=47 // pred_check_branch
          %380 = sbr.rel (%p378) target = $region52
        $region51: #{forward.33} parent=47 // pred_region
          %s381 = sand.u32 %s129, 1
          %s382 = scalar_lea.sflag [#allocation4], %s381
          %s383 = sand.u32 %s129, 1
          %s384 = smul.addr %s383, 8
          %s385 = scalar_lea.vmem [#allocation3], %s384
          %386 = dma.done %s382, 128
        $region52: #{forward.33} parent=47 // pred_fallthru
          _
      $region48: #{forward.33} parent=5 // pred_fallthru
        _
    $region6: #{forward.33} parent=1 // loop_footer
      %s16 = sadd.s32 1, %s12
    $region7: #{forward.33} parent=1 // loop_footer_branch
      %11 = sbr.rel target = $region3
    $region8: #{forward.33} parent=1 // loop_exit
      _
    %387 = vsyncpa [#allocation4], 1
    %s388 = scalar_lea.sflag [#allocation4], 1
    %389 = vsyncpa %s388, 1

</llo_original>
